<compile_context>
chip_gen: v7x
topology: tpu7x:2x2x1
jax: 0.10.0
libtpu: 0.0.40
codegen_flags: <defaults>
</compile_context>

<pallas_src>
import functools

import jax
import jax.numpy as jnp
from jax import lax
from jax.experimental import pallas as pl
from jax.experimental.pallas import tpu as pltpu

_SUBLANE = 8     # batch (sublane) padding
_LANE = 128      # hidden / vocab (lane) padding


def _round_up(x, m):
    return (x + m - 1) // m * m


# ------------------------------- GRU math ------------------------------------

def _gru_combine(gi, gh, h, b_hn, hp):
    """PyTorch GRU gate math, fused (r|z|n) layout, lane-aligned Hp slices.

    gi: (Bp, 3Hp) = x @ W_ih^T + (b_ih + b_hh folded for r,z ; b_ih for n)
    gh: (Bp, 3Hp) = h @ W_hh^T  (no bias)
    b_hn: (1 or Bp, Hp) = b_hh of the n gate (must stay inside the r * (.)).
    """
    r = jax.nn.sigmoid(gi[:, 0 * hp:1 * hp] + gh[:, 0 * hp:1 * hp])
    z = jax.nn.sigmoid(gi[:, 1 * hp:2 * hp] + gh[:, 1 * hp:2 * hp])
    n = jnp.tanh(gi[:, 2 * hp:3 * hp] + r * (gh[:, 2 * hp:3 * hp] + b_hn))
    return n + z * (h - n)                       # == (1 - z) * n + z * h


# ------------------------------ fused kernel ---------------------------------

def _make_kernel(n_layers, seq_len, v_pad, h_pad):
    def kernel(emb_ref,                                   # (S, Bp, Hp)  f32
               enc_wih_ref, enc_whh_ref,                  # (L, Hp, 3Hp) bf16
               enc_bi_ref, enc_bhn_ref,                   # (L,1,3Hp),(L,1,Hp) f32
               dec_wih_ref, dec_whh_ref,
               dec_bi_ref, dec_bhn_ref,
               en_emb_ref,                                # (Vp, Hp) bf16
               fc_w_ref, fc_b_ref,                        # (Hp, Vp) bf16, (1, Vp) f32
               out_ref,                                   # (1, Bp, Vp) f32  per-step block
               hid_ref,                                   # (L, Bp, Hp) f32  resident
               x_scr,                                     # (S, Bp, Hp)  f32 scratch
               gi_scr,                                    # (S, Bp, 3Hp) f32 scratch
               tok_scr):                                  # (Bp, 1) int32 scratch
        step = pl.program_id(0)
        bp = out_ref.shape[1]

        # ----------------- encoder: only on the first grid step --------------
        @pl.when(step == 0)
        def _encoder():
            for l in range(n_layers):                     # layer-major
                # cuDNN-style: input projections for ALL timesteps at once
                x_all = emb_ref[...] if l == 0 else x_scr[...]
                x_all = x_all.reshape(seq_len * bp, h_pad).astype(jnp.bfloat16)
                gi_all = jnp.dot(x_all, enc_wih_ref[l],
                                 preferred_element_type=jnp.float32)
                gi_all = gi_all + enc_bi_ref[l]           # folded biases, once/layer
                gi_scr[...] = gi_all.reshape(seq_len, bp, 3 * h_pad)

                w_hh = enc_whh_ref[l]
                b_hn = jnp.broadcast_to(enc_bhn_ref[l], (bp, h_pad))  # hoisted

                def body(t, h, _l=l, _w=w_hh, _b=b_hn):
                    gh = jnp.dot(h.astype(jnp.bfloat16), _w,
                                 preferred_element_type=jnp.float32)
                    h_new = _gru_combine(gi_scr[t], gh, h, _b, h_pad)
                    if _l < n_layers - 1:                 # next layer's input
                        x_scr[t] = h_new
                    return h_new

                h_last = lax.fori_loop(0, seq_len, body,
                                       jnp.zeros((bp, h_pad), jnp.float32))
                hid_ref[l] = h_last

            tok_scr[...] = jnp.zeros_like(tok_scr)        # SOS token = 0
            # NOTE: PyTorch's encoder also computes fc(encoder_out) but the
            # decoder ignores it and it is never returned -> skipped.

        # --------------------- one greedy decode step ------------------------
        col = lax.broadcasted_iota(jnp.int32, (bp, v_pad), 1)
        tok = tok_scr[...]                                # (Bp, 1) int32
        # TODO(synk): replace the one-hot matmul with a per-row gather from
        # en_emb_ref (needs a robust vector->scalar/SMEM token path); kept the
        # matmul form for lowering robustness at these sizes.
        onehot = (col == tok).astype(jnp.bfloat16)        # (Bp, Vp)
        inp = jnp.dot(onehot, en_emb_ref[...],
                      preferred_element_type=jnp.float32)  # (Bp, Hp)

        for l in range(n_layers):
            h = hid_ref[l]
            gi = jnp.dot(inp.astype(jnp.bfloat16), dec_wih_ref[l],
                         preferred_element_type=jnp.float32) + dec_bi_ref[l]
            gh = jnp.dot(h.astype(jnp.bfloat16), dec_whh_ref[l],
                         preferred_element_type=jnp.float32)
            h_new = _gru_combine(gi, gh, h, dec_bhn_ref[l], h_pad)
            hid_ref[l] = h_new
            inp = h_new

        logits = jnp.dot(inp.astype(jnp.bfloat16), fc_w_ref[...],
                         preferred_element_type=jnp.float32) + fc_b_ref[...]
        out_ref[0] = logits                               # lane-dense (Bp, Vp)

        # greedy argmax in f32, first-index tie-break; padded cols hold -1e9
        m = jnp.max(logits, axis=1, keepdims=True)
        idx = jnp.where(logits == m, col, v_pad)
        tok_scr[...] = jnp.min(idx, axis=1, keepdims=True)

    return kernel


# --------------------------- params & packing --------------------------------

def init_params(key, n_hidden, n_layers, dict_fr, dict_en):
    """PyTorch-layout params (embedding ~ N(0,1); GRU/Linear ~ U(+-1/sqrt(H)))."""
    keys = iter(jax.random.split(key, 64))
    stdv = 1.0 / (n_hidden ** 0.5)

    def u(shape):
        return jax.random.uniform(next(keys), shape, jnp.float32, -stdv, stdv)

    def gru_stack():
        layers = []
        for _ in range(n_layers):
            layers.append(dict(
                w_ih=u((3 * n_hidden, n_hidden)),   # (3H, H_in) — PyTorch layout
                w_hh=u((3 * n_hidden, n_hidden)),
                b_ih=u((3 * n_hidden,)),
                b_hh=u((3 * n_hidden,)),
            ))
        return layers

    return dict(
        fr_emb=jax.random.normal(next(keys), (dict_fr, n_hidden), jnp.float32),
        en_emb=jax.random.normal(next(keys), (dict_en, n_hidden), jnp.float32),
        enc=gru_stack(),
        dec=gru_stack(),
        fc_w=u((dict_en, n_hidden)),                # (V, H) — PyTorch layout
        fc_b=u((dict_en,)),
    )


def _pack_gru(layers, h, hp):
    """PyTorch fused (3H,H) weights -> per-layer fused (Hp, 3Hp) bf16 weights
    with each gate block padded to a lane-aligned Hp, plus folded biases:
    b_i = [b_ih_r+b_hh_r | b_ih_z+b_hh_z | b_ih_n], b_hn = b_hh_n."""
    wih, whh, bi, bhn = [], [], [], []
    for lp in layers:
        wi_g, wh_g, bi_g = [], [], []
        for g in range(3):                          # gate order r, z, n
            sl = slice(g * h, (g + 1) * h)
            wi_g.append(jnp.pad(lp["w_ih"][sl, :].T, ((0, hp - h), (0, hp - h))))
            wh_g.append(jnp.pad(lp["w_hh"][sl, :].T, ((0, hp - h), (0, hp - h))))
            b = lp["b_ih"][sl] + (lp["b_hh"][sl] if g < 2 else 0.0)
            bi_g.append(jnp.pad(b, (0, hp - h)))
        wih.append(jnp.concatenate(wi_g, axis=1))                 # (Hp, 3Hp)
        whh.append(jnp.concatenate(wh_g, axis=1))
        bi.append(jnp.concatenate(bi_g)[None, :])                 # (1, 3Hp)
        bhn.append(jnp.pad(lp["b_hh"][2 * h:3 * h], (0, hp - h))[None, :])
    return (jnp.stack(wih).astype(jnp.bfloat16),
            jnp.stack(whh).astype(jnp.bfloat16),
            jnp.stack(bi), jnp.stack(bhn))


def _full_spec(shape):
    nd = len(shape)
    return pl.BlockSpec(tuple(shape), lambda t: (0,) * nd)


# --------------------------------- forward -----------------------------------

@functools.partial(jax.jit, static_argnums=(2, 3))
def seq2seq_forward(params, x, n_layers, max_len_en):
    b, s = x.shape
    h = params["fr_emb"].shape[1]
    v = params["en_emb"].shape[0]
    bp = _round_up(max(b, _SUBLANE), _SUBLANE)
    vp = _round_up(max(v, _LANE), _LANE)
    hp = _round_up(max(h, _LANE), _LANE)

    # source embedding gather (one XLA gather), time-major, batch/H padded
    emb = jnp.transpose(params["fr_emb"][x], (1, 0, 2))            # (S, B, H)
    emb = jnp.pad(emb, ((0, 0), (0, bp - b), (0, hp - h)))         # (S, Bp, Hp)

    enc = _pack_gru(params["enc"], h, hp)
    dec = _pack_gru(params["dec"], h, hp)

    en_emb = jnp.pad(params["en_emb"],
                     ((0, vp - v), (0, hp - h))).astype(jnp.bfloat16)   # (Vp, Hp)
    fc_w = jnp.pad(params["fc_w"].T,
                   ((0, hp - h), (0, vp - v))).astype(jnp.bfloat16)     # (Hp, Vp)
    fc_b = jnp.concatenate(                                             # (1, Vp)
        [params["fc_b"], jnp.full((vp - v,), -1e9, jnp.float32)])[None, :]

    kernel = _make_kernel(n_layers, s, vp, hp)
    ins = (emb, *enc, *dec, en_emb, fc_w, fc_b)

    out, hid = pl.pallas_call(
        kernel,
        grid=(max_len_en,),
        out_shape=(jax.ShapeDtypeStruct((max_len_en, bp, vp), jnp.float32),
                   jax.ShapeDtypeStruct((n_layers, bp, hp), jnp.float32)),
        in_specs=[_full_spec(a.shape) for a in ins],
        out_specs=(pl.BlockSpec((1, bp, vp), lambda t: (t, 0, 0)),
                   pl.BlockSpec((n_layers, bp, hp), lambda t: (0, 0, 0))),
        scratch_shapes=[pltpu.VMEM((s, bp, hp), jnp.float32),
                        pltpu.VMEM((s, bp, 3 * hp), jnp.float32),
                        pltpu.VMEM((bp, 1), jnp.int32)],
        compiler_params=pltpu.CompilerParams(
            dimension_semantics=("arbitrary",),        # sequential decode steps
            vmem_limit_bytes=32 * 1024 * 1024),
    )(*ins)

    vec_out = jnp.transpose(out, (1, 0, 2))[:b, :, :v]   # (B, T_en, V_en)
    hidden = hid[:, :b, :h]                              # (n_layers, B, H)
    return vec_out, hidden, None


# ---------------------------------- main --------------------------------------

if __name__ == "__main__":
    n_hidden = 32
    n_layers = 2
    dict_size = {"fr": 20, "en": 24}
    max_len = {"fr": 10, "en": 8}
    batch = 2

    key = jax.random.PRNGKey(0)
    k_params, k_x = jax.random.split(key)
    params = init_params(k_params, n_hidden, n_layers,
                         dict_size["fr"], dict_size["en"])
    x = jax.random.randint(k_x, (batch, max_len["fr"]), 0, dict_size["fr"],
                           dtype=jnp.int32)

    vec_out, hidden, attn = seq2seq_forward(params, x, n_layers, max_len["en"])
    jax.block_until_ready((vec_out, hidden))

    assert vec_out.shape == (batch, max_len["en"], dict_size["en"])
    assert hidden.shape == (n_layers, batch, n_hidden)
    assert attn is None
    print("KERNEL_OK")
</pallas_src>

<mosaic_0001>
module attributes {stable_mosaic.version = 11 : i64} {
  func.func @kernel(%arg0: i32, %arg1: memref<10x8x128xf32, #tpu.memory_space<vmem>>, %arg2: memref<2x128x384xbf16, #tpu.memory_space<vmem>>, %arg3: memref<2x128x384xbf16, #tpu.memory_space<vmem>>, %arg4: memref<2x1x384xf32, #tpu.memory_space<vmem>>, %arg5: memref<2x1x128xf32, #tpu.memory_space<vmem>>, %arg6: memref<2x128x384xbf16, #tpu.memory_space<vmem>>, %arg7: memref<2x128x384xbf16, #tpu.memory_space<vmem>>, %arg8: memref<2x1x384xf32, #tpu.memory_space<vmem>>, %arg9: memref<2x1x128xf32, #tpu.memory_space<vmem>>, %arg10: memref<128x128xbf16, #tpu.memory_space<vmem>>, %arg11: memref<128x128xbf16, #tpu.memory_space<vmem>>, %arg12: memref<1x128xf32, #tpu.memory_space<vmem>>, %arg13: memref<1x8x128xf32, #tpu.memory_space<vmem>>, %arg14: memref<2x8x128xf32, #tpu.memory_space<vmem>>, %arg15: memref<10x8x128xf32, #tpu.memory_space<vmem>>, %arg16: memref<10x8x384xf32, #tpu.memory_space<vmem>>, %arg17: memref<8x1xi32, #tpu.memory_space<vmem>>) attributes {dimension_semantics = [#tpu.dimension_semantics<arbitrary>], iteration_bounds = array<i64: 8>, scalar_prefetch = 0 : i64, scratch_operands = 3 : i64, tpu.core_type = #tpu.core_type<tc>, window_params = [{pipeline_mode = #tpu.pipeline_mode<synchronous>, transform_indices = @transform_0, window_bounds = array<i64: 10, 8, 128>}, {pipeline_mode = #tpu.pipeline_mode<synchronous>, transform_indices = @transform_1, window_bounds = array<i64: 2, 128, 384>}, {pipeline_mode = #tpu.pipeline_mode<synchronous>, transform_indices = @transform_2, window_bounds = array<i64: 2, 128, 384>}, {pipeline_mode = #tpu.pipeline_mode<synchronous>, transform_indices = @transform_3, window_bounds = array<i64: 2, 1, 384>}, {pipeline_mode = #tpu.pipeline_mode<synchronous>, transform_indices = @transform_4, window_bounds = array<i64: 2, 1, 128>}, {pipeline_mode = #tpu.pipeline_mode<synchronous>, transform_indices = @transform_5, window_bounds = array<i64: 2, 128, 384>}, {pipeline_mode = #tpu.pipeline_mode<synchronous>, transform_indices = @transform_6, window_bounds = array<i64: 2, 128, 384>}, {pipeline_mode = #tpu.pipeline_mode<synchronous>, transform_indices = @transform_7, window_bounds = array<i64: 2, 1, 384>}, {pipeline_mode = #tpu.pipeline_mode<synchronous>, transform_indices = @transform_8, window_bounds = array<i64: 2, 1, 128>}, {pipeline_mode = #tpu.pipeline_mode<synchronous>, transform_indices = @transform_9, window_bounds = array<i64: 128, 128>}, {pipeline_mode = #tpu.pipeline_mode<synchronous>, transform_indices = @transform_10, window_bounds = array<i64: 128, 128>}, {pipeline_mode = #tpu.pipeline_mode<synchronous>, transform_indices = @transform_11, window_bounds = array<i64: 1, 128>}, {transform_indices = @transform_12, window_bounds = array<i64: 1, 8, 128>}, {pipeline_mode = #tpu.pipeline_mode<synchronous>, transform_indices = @transform_13, window_bounds = array<i64: 2, 8, 128>}]} {
    %c0_i32 = arith.constant 0 : i32
    %0 = arith.cmpi eq, %arg0, %c0_i32 : i32
    %1 = arith.extui %0 : i1 to i32
    %c0_i32_0 = arith.constant 0 : i32
    %2 = arith.cmpi ne, %1, %c0_i32_0 : i32
    scf.if %2 {
      %c0_59 = arith.constant 0 : index
      %c0_60 = arith.constant 0 : index
      %c0_61 = arith.constant 0 : index
      %120 = vector.load %arg1[%c0_59, %c0_60, %c0_61] : memref<10x8x128xf32, #tpu.memory_space<vmem>>, vector<10x8x128xf32>
      %121 = vector.shape_cast %120 : vector<10x8x128xf32> to vector<80x128xf32>
      %122 = arith.truncf %121 : vector<80x128xf32> to vector<80x128xbf16>
      %c0_62 = arith.constant 0 : index
      %c0_63 = arith.constant 0 : index
      %c0_64 = arith.constant 0 : index
      %123 = vector.load %arg2[%c0_62, %c0_63, %c0_64] : memref<2x128x384xbf16, #tpu.memory_space<vmem>>, vector<1x128x384xbf16>
      %124 = vector.shape_cast %123 : vector<1x128x384xbf16> to vector<128x384xbf16>
      %cst_65 = arith.constant dense<0.000000e+00> : vector<80x384xf32>
      %125 = tpu.matmul %122, %124, %cst_65 {dimension_numbers = #tpu.dot_dimension_numbers<[1], [0], [0], [1], [0, 0, 1, 1], [], []>} : vector<80x128xbf16>, vector<128x384xbf16>, vector<80x384xf32> -> vector<80x384xf32>
      %c0_66 = arith.constant 0 : index
      %c0_67 = arith.constant 0 : index
      %c0_68 = arith.constant 0 : index
      %126 = vector.load %arg4[%c0_66, %c0_67, %c0_68] : memref<2x1x384xf32, #tpu.memory_space<vmem>>, vector<1x1x384xf32>
      %127 = vector.shape_cast %126 : vector<1x1x384xf32> to vector<1x384xf32>
      %128 = vector.broadcast %127 : vector<1x384xf32> to vector<80x384xf32>
      %129 = arith.addf %125, %128 : vector<80x384xf32>
      %130 = vector.shape_cast %129 : vector<80x384xf32> to vector<10x8x384xf32>
      %c0_69 = arith.constant 0 : index
      %c0_70 = arith.constant 0 : index
      %c0_71 = arith.constant 0 : index
      %131 = vector.load %arg16[%c0_69, %c0_70, %c0_71] : memref<10x8x384xf32, #tpu.memory_space<vmem>>, vector<10x8x384xf32>
      tpu.vector_store %arg16[%c0_69, %c0_70, %c0_71], %130 {strides = array<i32>} : memref<10x8x384xf32, #tpu.memory_space<vmem>>, vector<10x8x384xf32>,
      %c0_72 = arith.constant 0 : index
      %c0_73 = arith.constant 0 : index
      %c0_74 = arith.constant 0 : index
      %132 = vector.load %arg3[%c0_72, %c0_73, %c0_74] : memref<2x128x384xbf16, #tpu.memory_space<vmem>>, vector<1x128x384xbf16>
      %133 = vector.shape_cast %132 : vector<1x128x384xbf16> to vector<128x384xbf16>
      %c0_75 = arith.constant 0 : index
      %c0_76 = arith.constant 0 : index
      %c0_77 = arith.constant 0 : index
      %134 = vector.load %arg5[%c0_75, %c0_76, %c0_77] : memref<2x1x128xf32, #tpu.memory_space<vmem>>, vector<1x1x128xf32>
      %135 = vector.shape_cast %134 : vector<1x1x128xf32> to vector<1x128xf32>
      %136 = vector.shape_cast %135 : vector<1x128xf32> to vector<1x128xf32>
      %137 = vector.broadcast %136 : vector<1x128xf32> to vector<8x128xf32>
      %cst_78 = arith.constant 0.000000e+00 : f32
      %138 = vector.broadcast %cst_78 : f32 to vector<8x128xf32>
      %c0_i32_79 = arith.constant 0 : i32
      %c10_i32 = arith.constant 10 : i32
      %139 = arith.addi %c0_i32_79, %c10_i32 : i32
      %c1_i32 = arith.constant 1 : i32
      %140 = scf.for %arg18 = %c0_i32_79 to %139 step %c1_i32 iter_args(%arg19 = %138) -> (vector<8x128xf32>)  : i32 {
        %170 = arith.truncf %arg19 : vector<8x128xf32> to vector<8x128xbf16>
        %cst_114 = arith.constant dense<0.000000e+00> : vector<8x384xf32>
        %171 = tpu.matmul %170, %133, %cst_114 {dimension_numbers = #tpu.dot_dimension_numbers<[1], [0], [0], [1], [0, 0, 1, 1], [], []>} : vector<8x128xbf16>, vector<128x384xbf16>, vector<8x384xf32> -> vector<8x384xf32>
        %172 = arith.index_cast %arg18 : i32 to index
        %c0_115 = arith.constant 0 : index
        %c0_116 = arith.constant 0 : index
        %173 = vector.load %arg16[%172, %c0_115, %c0_116] : memref<10x8x384xf32, #tpu.memory_space<vmem>>, vector<1x8x384xf32>
        %174 = vector.shape_cast %173 : vector<1x8x384xf32> to vector<8x384xf32>
        %175 = vector.extract_strided_slice %174 {offsets = [0, 0], sizes = [8, 128], strides = [1, 1]} : vector<8x384xf32> to vector<8x128xf32>
        %176 = vector.extract_strided_slice %171 {offsets = [0, 0], sizes = [8, 128], strides = [1, 1]} : vector<8x384xf32> to vector<8x128xf32>
        %177 = arith.addf %175, %176 : vector<8x128xf32>
        %178 = arith.negf %177 : vector<8x128xf32>
        %179 = math.exp %178 : vector<8x128xf32>
        %cst_117 = arith.constant 1.000000e+00 : f32
        %180 = vector.broadcast %cst_117 : f32 to vector<8x128xf32>
        %181 = arith.addf %180, %179 : vector<8x128xf32>
        %182 = arith.divf %180, %181 : vector<8x128xf32>
        %183 = vector.extract_strided_slice %174 {offsets = [0, 128], sizes = [8, 128], strides = [1, 1]} : vector<8x384xf32> to vector<8x128xf32>
        %184 = vector.extract_strided_slice %171 {offsets = [0, 128], sizes = [8, 128], strides = [1, 1]} : vector<8x384xf32> to vector<8x128xf32>
        %185 = arith.addf %183, %184 : vector<8x128xf32>
        %186 = arith.negf %185 : vector<8x128xf32>
        %187 = math.exp %186 : vector<8x128xf32>
        %cst_118 = arith.constant 1.000000e+00 : f32
        %188 = vector.broadcast %cst_118 : f32 to vector<8x128xf32>
        %189 = arith.addf %188, %187 : vector<8x128xf32>
        %190 = arith.divf %188, %189 : vector<8x128xf32>
        %191 = vector.extract_strided_slice %174 {offsets = [0, 256], sizes = [8, 128], strides = [1, 1]} : vector<8x384xf32> to vector<8x128xf32>
        %192 = vector.extract_strided_slice %171 {offsets = [0, 256], sizes = [8, 128], strides = [1, 1]} : vector<8x384xf32> to vector<8x128xf32>
        %193 = arith.addf %192, %137 : vector<8x128xf32>
        %194 = arith.mulf %182, %193 : vector<8x128xf32>
        %195 = arith.addf %191, %194 : vector<8x128xf32>
        %196 = math.tanh %195 : vector<8x128xf32>
        %197 = arith.subf %arg19, %196 : vector<8x128xf32>
        %198 = arith.mulf %190, %197 : vector<8x128xf32>
        %199 = arith.addf %196, %198 : vector<8x128xf32>
        %200 = arith.index_cast %arg18 : i32 to index
        %c0_119 = arith.constant 0 : index
        %c0_120 = arith.constant 0 : index
        %201 = vector.load %arg15[%200, %c0_119, %c0_120] : memref<10x8x128xf32, #tpu.memory_space<vmem>>, vector<1x8x128xf32>
        %202 = vector.shape_cast %201 : vector<1x8x128xf32> to vector<8x128xf32>
        %203 = vector.shape_cast %199 : vector<8x128xf32> to vector<1x8x128xf32>
        tpu.vector_store %arg15[%200, %c0_119, %c0_120], %203 {strides = array<i32>} : memref<10x8x128xf32, #tpu.memory_space<vmem>>, vector<1x8x128xf32>,
        scf.yield %199 : vector<8x128xf32>
      }
      %c10_i32_80 = arith.constant 10 : i32
      %c0_81 = arith.constant 0 : index
      %c0_82 = arith.constant 0 : index
      %c0_83 = arith.constant 0 : index
      %141 = vector.load %arg14[%c0_81, %c0_82, %c0_83] : memref<2x8x128xf32, #tpu.memory_space<vmem>>, vector<1x8x128xf32>
      %142 = vector.shape_cast %141 : vector<1x8x128xf32> to vector<8x128xf32>
      %143 = vector.shape_cast %140 : vector<8x128xf32> to vector<1x8x128xf32>
      tpu.vector_store %arg14[%c0_81, %c0_82, %c0_83], %143 {strides = array<i32>} : memref<2x8x128xf32, #tpu.memory_space<vmem>>, vector<1x8x128xf32>,
      %c0_84 = arith.constant 0 : index
      %c0_85 = arith.constant 0 : index
      %c0_86 = arith.constant 0 : index
      %144 = vector.load %arg15[%c0_84, %c0_85, %c0_86] : memref<10x8x128xf32, #tpu.memory_space<vmem>>, vector<10x8x128xf32>
      %145 = vector.shape_cast %144 : vector<10x8x128xf32> to vector<80x128xf32>
      %146 = arith.truncf %145 : vector<80x128xf32> to vector<80x128xbf16>
      %c1_87 = arith.constant 1 : index
      %c0_88 = arith.constant 0 : index
      %c0_89 = arith.constant 0 : index
      %147 = vector.load %arg2[%c1_87, %c0_88, %c0_89] : memref<2x128x384xbf16, #tpu.memory_space<vmem>>, vector<1x128x384xbf16>
      %148 = vector.shape_cast %147 : vector<1x128x384xbf16> to vector<128x384xbf16>
      %cst_90 = arith.constant dense<0.000000e+00> : vector<80x384xf32>
      %149 = tpu.matmul %146, %148, %cst_90 {dimension_numbers = #tpu.dot_dimension_numbers<[1], [0], [0], [1], [0, 0, 1, 1], [], []>} : vector<80x128xbf16>, vector<128x384xbf16>, vector<80x384xf32> -> vector<80x384xf32>
      %c1_91 = arith.constant 1 : index
      %c0_92 = arith.constant 0 : index
      %c0_93 = arith.constant 0 : index
      %150 = vector.load %arg4[%c1_91, %c0_92, %c0_93] : memref<2x1x384xf32, #tpu.memory_space<vmem>>, vector<1x1x384xf32>
      %151 = vector.shape_cast %150 : vector<1x1x384xf32> to vector<1x384xf32>
      %152 = vector.broadcast %151 : vector<1x384xf32> to vector<80x384xf32>
      %153 = arith.addf %149, %152 : vector<80x384xf32>
      %154 = vector.shape_cast %153 : vector<80x384xf32> to vector<10x8x384xf32>
      %c0_94 = arith.constant 0 : index
      %c0_95 = arith.constant 0 : index
      %c0_96 = arith.constant 0 : index
      %155 = vector.load %arg16[%c0_94, %c0_95, %c0_96] : memref<10x8x384xf32, #tpu.memory_space<vmem>>, vector<10x8x384xf32>
      tpu.vector_store %arg16[%c0_94, %c0_95, %c0_96], %154 {strides = array<i32>} : memref<10x8x384xf32, #tpu.memory_space<vmem>>, vector<10x8x384xf32>,
      %c1_97 = arith.constant 1 : index
      %c0_98 = arith.constant 0 : index
      %c0_99 = arith.constant 0 : index
      %156 = vector.load %arg3[%c1_97, %c0_98, %c0_99] : memref<2x128x384xbf16, #tpu.memory_space<vmem>>, vector<1x128x384xbf16>
      %157 = vector.shape_cast %156 : vector<1x128x384xbf16> to vector<128x384xbf16>
      %c1_100 = arith.constant 1 : index
      %c0_101 = arith.constant 0 : index
      %c0_102 = arith.constant 0 : index
      %158 = vector.load %arg5[%c1_100, %c0_101, %c0_102] : memref<2x1x128xf32, #tpu.memory_space<vmem>>, vector<1x1x128xf32>
      %159 = vector.shape_cast %158 : vector<1x1x128xf32> to vector<1x128xf32>
      %160 = vector.shape_cast %159 : vector<1x128xf32> to vector<1x128xf32>
      %161 = vector.broadcast %160 : vector<1x128xf32> to vector<8x128xf32>
      %cst_103 = arith.constant 0.000000e+00 : f32
      %162 = vector.broadcast %cst_103 : f32 to vector<8x128xf32>
      %c0_i32_104 = arith.constant 0 : i32
      %c10_i32_105 = arith.constant 10 : i32
      %163 = arith.addi %c0_i32_104, %c10_i32_105 : i32
      %c1_i32_106 = arith.constant 1 : i32
      %164 = scf.for %arg18 = %c0_i32_104 to %163 step %c1_i32_106 iter_args(%arg19 = %162) -> (vector<8x128xf32>)  : i32 {
        %170 = arith.truncf %arg19 : vector<8x128xf32> to vector<8x128xbf16>
        %cst_114 = arith.constant dense<0.000000e+00> : vector<8x384xf32>
        %171 = tpu.matmul %170, %157, %cst_114 {dimension_numbers = #tpu.dot_dimension_numbers<[1], [0], [0], [1], [0, 0, 1, 1], [], []>} : vector<8x128xbf16>, vector<128x384xbf16>, vector<8x384xf32> -> vector<8x384xf32>
        %172 = arith.index_cast %arg18 : i32 to index
        %c0_115 = arith.constant 0 : index
        %c0_116 = arith.constant 0 : index
        %173 = vector.load %arg16[%172, %c0_115, %c0_116] : memref<10x8x384xf32, #tpu.memory_space<vmem>>, vector<1x8x384xf32>
        %174 = vector.shape_cast %173 : vector<1x8x384xf32> to vector<8x384xf32>
        %175 = vector.extract_strided_slice %174 {offsets = [0, 0], sizes = [8, 128], strides = [1, 1]} : vector<8x384xf32> to vector<8x128xf32>
        %176 = vector.extract_strided_slice %171 {offsets = [0, 0], sizes = [8, 128], strides = [1, 1]} : vector<8x384xf32> to vector<8x128xf32>
        %177 = arith.addf %175, %176 : vector<8x128xf32>
        %178 = arith.negf %177 : vector<8x128xf32>
        %179 = math.exp %178 : vector<8x128xf32>
        %cst_117 = arith.constant 1.000000e+00 : f32
        %180 = vector.broadcast %cst_117 : f32 to vector<8x128xf32>
        %181 = arith.addf %180, %179 : vector<8x128xf32>
        %182 = arith.divf %180, %181 : vector<8x128xf32>
        %183 = vector.extract_strided_slice %174 {offsets = [0, 128], sizes = [8, 128], strides = [1, 1]} : vector<8x384xf32> to vector<8x128xf32>
        %184 = vector.extract_strided_slice %171 {offsets = [0, 128], sizes = [8, 128], strides = [1, 1]} : vector<8x384xf32> to vector<8x128xf32>
        %185 = arith.addf %183, %184 : vector<8x128xf32>
        %186 = arith.negf %185 : vector<8x128xf32>
        %187 = math.exp %186 : vector<8x128xf32>
        %cst_118 = arith.constant 1.000000e+00 : f32
        %188 = vector.broadcast %cst_118 : f32 to vector<8x128xf32>
        %189 = arith.addf %188, %187 : vector<8x128xf32>
        %190 = arith.divf %188, %189 : vector<8x128xf32>
        %191 = vector.extract_strided_slice %174 {offsets = [0, 256], sizes = [8, 128], strides = [1, 1]} : vector<8x384xf32> to vector<8x128xf32>
        %192 = vector.extract_strided_slice %171 {offsets = [0, 256], sizes = [8, 128], strides = [1, 1]} : vector<8x384xf32> to vector<8x128xf32>
        %193 = arith.addf %192, %161 : vector<8x128xf32>
        %194 = arith.mulf %182, %193 : vector<8x128xf32>
        %195 = arith.addf %191, %194 : vector<8x128xf32>
        %196 = math.tanh %195 : vector<8x128xf32>
        %197 = arith.subf %arg19, %196 : vector<8x128xf32>
        %198 = arith.mulf %190, %197 : vector<8x128xf32>
        %199 = arith.addf %196, %198 : vector<8x128xf32>
        scf.yield %199 : vector<8x128xf32>
      }
      %c10_i32_107 = arith.constant 10 : i32
      %c1_108 = arith.constant 1 : index
      %c0_109 = arith.constant 0 : index
      %c0_110 = arith.constant 0 : index
      %165 = vector.load %arg14[%c1_108, %c0_109, %c0_110] : memref<2x8x128xf32, #tpu.memory_space<vmem>>, vector<1x8x128xf32>
      %166 = vector.shape_cast %165 : vector<1x8x128xf32> to vector<8x128xf32>
      %167 = vector.shape_cast %164 : vector<8x128xf32> to vector<1x8x128xf32>
      tpu.vector_store %arg14[%c1_108, %c0_109, %c0_110], %167 {strides = array<i32>} : memref<2x8x128xf32, #tpu.memory_space<vmem>>, vector<1x8x128xf32>,
      %c0_i32_111 = arith.constant 0 : i32
      %168 = vector.broadcast %c0_i32_111 : i32 to vector<8x1xi32>
      %c0_112 = arith.constant 0 : index
      %c0_113 = arith.constant 0 : index
      %169 = vector.load %arg17[%c0_112, %c0_113] : memref<8x1xi32, #tpu.memory_space<vmem>>, vector<8x1xi32>
      tpu.vector_store %arg17[%c0_112, %c0_113], %168 {strides = array<i32>} : memref<8x1xi32, #tpu.memory_space<vmem>>, vector<8x1xi32>,
    } else {
    }
    %3 = tpu.iota {dimensions = array<i32: 1>} : vector<8x128xi32>
    %c0 = arith.constant 0 : index
    %c0_1 = arith.constant 0 : index
    %4 = vector.load %arg17[%c0, %c0_1] : memref<8x1xi32, #tpu.memory_space<vmem>>, vector<8x1xi32>
    %5 = vector.broadcast %4 : vector<8x1xi32> to vector<8x128xi32>
    %6 = arith.cmpi eq, %3, %5 : vector<8x128xi32>
    %7 = arith.extui %6 : vector<8x128xi1> to vector<8x128xi32>
    %8 = arith.sitofp %7 : vector<8x128xi32> to vector<8x128xf32>
    %9 = arith.truncf %8 : vector<8x128xf32> to vector<8x128xbf16>
    %c0_2 = arith.constant 0 : index
    %c0_3 = arith.constant 0 : index
    %10 = vector.load %arg10[%c0_2, %c0_3] : memref<128x128xbf16, #tpu.memory_space<vmem>>, vector<128x128xbf16>
    %cst = arith.constant dense<0.000000e+00> : vector<8x128xf32>
    %11 = tpu.matmul %9, %10, %cst {dimension_numbers = #tpu.dot_dimension_numbers<[1], [0], [0], [1], [0, 0, 1, 1], [], []>} : vector<8x128xbf16>, vector<128x128xbf16>, vector<8x128xf32> -> vector<8x128xf32>
    %c0_4 = arith.constant 0 : index
    %c0_5 = arith.constant 0 : index
    %c0_6 = arith.constant 0 : index
    %12 = vector.load %arg14[%c0_4, %c0_5, %c0_6] : memref<2x8x128xf32, #tpu.memory_space<vmem>>, vector<1x8x128xf32>
    %13 = vector.shape_cast %12 : vector<1x8x128xf32> to vector<8x128xf32>
    %14 = arith.truncf %11 : vector<8x128xf32> to vector<8x128xbf16>
    %c0_7 = arith.constant 0 : index
    %c0_8 = arith.constant 0 : index
    %c0_9 = arith.constant 0 : index
    %15 = vector.load %arg6[%c0_7, %c0_8, %c0_9] : memref<2x128x384xbf16, #tpu.memory_space<vmem>>, vector<1x128x384xbf16>
    %16 = vector.shape_cast %15 : vector<1x128x384xbf16> to vector<128x384xbf16>
    %cst_10 = arith.constant dense<0.000000e+00> : vector<8x384xf32>
    %17 = tpu.matmul %14, %16, %cst_10 {dimension_numbers = #tpu.dot_dimension_numbers<[1], [0], [0], [1], [0, 0, 1, 1], [], []>} : vector<8x128xbf16>, vector<128x384xbf16>, vector<8x384xf32> -> vector<8x384xf32>
    %c0_11 = arith.constant 0 : index
    %c0_12 = arith.constant 0 : index
    %c0_13 = arith.constant 0 : index
    %18 = vector.load %arg8[%c0_11, %c0_12, %c0_13] : memref<2x1x384xf32, #tpu.memory_space<vmem>>, vector<1x1x384xf32>
    %19 = vector.shape_cast %18 : vector<1x1x384xf32> to vector<1x384xf32>
    %20 = vector.broadcast %19 : vector<1x384xf32> to vector<8x384xf32>
    %21 = arith.addf %17, %20 : vector<8x384xf32>
    %22 = arith.truncf %13 : vector<8x128xf32> to vector<8x128xbf16>
    %c0_14 = arith.constant 0 : index
    %c0_15 = arith.constant 0 : index
    %c0_16 = arith.constant 0 : index
    %23 = vector.load %arg7[%c0_14, %c0_15, %c0_16] : memref<2x128x384xbf16, #tpu.memory_space<vmem>>, vector<1x128x384xbf16>
    %24 = vector.shape_cast %23 : vector<1x128x384xbf16> to vector<128x384xbf16>
    %cst_17 = arith.constant dense<0.000000e+00> : vector<8x384xf32>
    %25 = tpu.matmul %22, %24, %cst_17 {dimension_numbers = #tpu.dot_dimension_numbers<[1], [0], [0], [1], [0, 0, 1, 1], [], []>} : vector<8x128xbf16>, vector<128x384xbf16>, vector<8x384xf32> -> vector<8x384xf32>
    %c0_18 = arith.constant 0 : index
    %c0_19 = arith.constant 0 : index
    %c0_20 = arith.constant 0 : index
    %26 = vector.load %arg9[%c0_18, %c0_19, %c0_20] : memref<2x1x128xf32, #tpu.memory_space<vmem>>, vector<1x1x128xf32>
    %27 = vector.shape_cast %26 : vector<1x1x128xf32> to vector<1x128xf32>
    %28 = vector.extract_strided_slice %21 {offsets = [0, 0], sizes = [8, 128], strides = [1, 1]} : vector<8x384xf32> to vector<8x128xf32>
    %29 = vector.extract_strided_slice %25 {offsets = [0, 0], sizes = [8, 128], strides = [1, 1]} : vector<8x384xf32> to vector<8x128xf32>
    %30 = arith.addf %28, %29 : vector<8x128xf32>
    %31 = arith.negf %30 : vector<8x128xf32>
    %32 = math.exp %31 : vector<8x128xf32>
    %cst_21 = arith.constant 1.000000e+00 : f32
    %33 = vector.broadcast %cst_21 : f32 to vector<8x128xf32>
    %34 = arith.addf %33, %32 : vector<8x128xf32>
    %35 = arith.divf %33, %34 : vector<8x128xf32>
    %36 = vector.extract_strided_slice %21 {offsets = [0, 128], sizes = [8, 128], strides = [1, 1]} : vector<8x384xf32> to vector<8x128xf32>
    %37 = vector.extract_strided_slice %25 {offsets = [0, 128], sizes = [8, 128], strides = [1, 1]} : vector<8x384xf32> to vector<8x128xf32>
    %38 = arith.addf %36, %37 : vector<8x128xf32>
    %39 = arith.negf %38 : vector<8x128xf32>
    %40 = math.exp %39 : vector<8x128xf32>
    %cst_22 = arith.constant 1.000000e+00 : f32
    %41 = vector.broadcast %cst_22 : f32 to vector<8x128xf32>
    %42 = arith.addf %41, %40 : vector<8x128xf32>
    %43 = arith.divf %41, %42 : vector<8x128xf32>
    %44 = vector.extract_strided_slice %21 {offsets = [0, 256], sizes = [8, 128], strides = [1, 1]} : vector<8x384xf32> to vector<8x128xf32>
    %45 = vector.extract_strided_slice %25 {offsets = [0, 256], sizes = [8, 128], strides = [1, 1]} : vector<8x384xf32> to vector<8x128xf32>
    %46 = vector.broadcast %27 : vector<1x128xf32> to vector<8x128xf32>
    %47 = arith.addf %45, %46 : vector<8x128xf32>
    %48 = arith.mulf %35, %47 : vector<8x128xf32>
    %49 = arith.addf %44, %48 : vector<8x128xf32>
    %50 = math.tanh %49 : vector<8x128xf32>
    %51 = arith.subf %13, %50 : vector<8x128xf32>
    %52 = arith.mulf %43, %51 : vector<8x128xf32>
    %53 = arith.addf %50, %52 : vector<8x128xf32>
    %c0_23 = arith.constant 0 : index
    %c0_24 = arith.constant 0 : index
    %c0_25 = arith.constant 0 : index
    %54 = vector.load %arg14[%c0_23, %c0_24, %c0_25] : memref<2x8x128xf32, #tpu.memory_space<vmem>>, vector<1x8x128xf32>
    %55 = vector.shape_cast %54 : vector<1x8x128xf32> to vector<8x128xf32>
    %56 = vector.shape_cast %53 : vector<8x128xf32> to vector<1x8x128xf32>
    tpu.vector_store %arg14[%c0_23, %c0_24, %c0_25], %56 {strides = array<i32>} : memref<2x8x128xf32, #tpu.memory_space<vmem>>, vector<1x8x128xf32>,
    %c1 = arith.constant 1 : index
    %c0_26 = arith.constant 0 : index
    %c0_27 = arith.constant 0 : index
    %57 = vector.load %arg14[%c1, %c0_26, %c0_27] : memref<2x8x128xf32, #tpu.memory_space<vmem>>, vector<1x8x128xf32>
    %58 = vector.shape_cast %57 : vector<1x8x128xf32> to vector<8x128xf32>
    %59 = arith.truncf %53 : vector<8x128xf32> to vector<8x128xbf16>
    %c1_28 = arith.constant 1 : index
    %c0_29 = arith.constant 0 : index
    %c0_30 = arith.constant 0 : index
    %60 = vector.load %arg6[%c1_28, %c0_29, %c0_30] : memref<2x128x384xbf16, #tpu.memory_space<vmem>>, vector<1x128x384xbf16>
    %61 = vector.shape_cast %60 : vector<1x128x384xbf16> to vector<128x384xbf16>
    %cst_31 = arith.constant dense<0.000000e+00> : vector<8x384xf32>
    %62 = tpu.matmul %59, %61, %cst_31 {dimension_numbers = #tpu.dot_dimension_numbers<[1], [0], [0], [1], [0, 0, 1, 1], [], []>} : vector<8x128xbf16>, vector<128x384xbf16>, vector<8x384xf32> -> vector<8x384xf32>
    %c1_32 = arith.constant 1 : index
    %c0_33 = arith.constant 0 : index
    %c0_34 = arith.constant 0 : index
    %63 = vector.load %arg8[%c1_32, %c0_33, %c0_34] : memref<2x1x384xf32, #tpu.memory_space<vmem>>, vector<1x1x384xf32>
    %64 = vector.shape_cast %63 : vector<1x1x384xf32> to vector<1x384xf32>
    %65 = vector.broadcast %64 : vector<1x384xf32> to vector<8x384xf32>
    %66 = arith.addf %62, %65 : vector<8x384xf32>
    %67 = arith.truncf %58 : vector<8x128xf32> to vector<8x128xbf16>
    %c1_35 = arith.constant 1 : index
    %c0_36 = arith.constant 0 : index
    %c0_37 = arith.constant 0 : index
    %68 = vector.load %arg7[%c1_35, %c0_36, %c0_37] : memref<2x128x384xbf16, #tpu.memory_space<vmem>>, vector<1x128x384xbf16>
    %69 = vector.shape_cast %68 : vector<1x128x384xbf16> to vector<128x384xbf16>
    %cst_38 = arith.constant dense<0.000000e+00> : vector<8x384xf32>
    %70 = tpu.matmul %67, %69, %cst_38 {dimension_numbers = #tpu.dot_dimension_numbers<[1], [0], [0], [1], [0, 0, 1, 1], [], []>} : vector<8x128xbf16>, vector<128x384xbf16>, vector<8x384xf32> -> vector<8x384xf32>
    %c1_39 = arith.constant 1 : index
    %c0_40 = arith.constant 0 : index
    %c0_41 = arith.constant 0 : index
    %71 = vector.load %arg9[%c1_39, %c0_40, %c0_41] : memref<2x1x128xf32, #tpu.memory_space<vmem>>, vector<1x1x128xf32>
    %72 = vector.shape_cast %71 : vector<1x1x128xf32> to vector<1x128xf32>
    %73 = vector.extract_strided_slice %66 {offsets = [0, 0], sizes = [8, 128], strides = [1, 1]} : vector<8x384xf32> to vector<8x128xf32>
    %74 = vector.extract_strided_slice %70 {offsets = [0, 0], sizes = [8, 128], strides = [1, 1]} : vector<8x384xf32> to vector<8x128xf32>
    %75 = arith.addf %73, %74 : vector<8x128xf32>
    %76 = arith.negf %75 : vector<8x128xf32>
    %77 = math.exp %76 : vector<8x128xf32>
    %cst_42 = arith.constant 1.000000e+00 : f32
    %78 = vector.broadcast %cst_42 : f32 to vector<8x128xf32>
    %79 = arith.addf %78, %77 : vector<8x128xf32>
    %80 = arith.divf %78, %79 : vector<8x128xf32>
    %81 = vector.extract_strided_slice %66 {offsets = [0, 128], sizes = [8, 128], strides = [1, 1]} : vector<8x384xf32> to vector<8x128xf32>
    %82 = vector.extract_strided_slice %70 {offsets = [0, 128], sizes = [8, 128], strides = [1, 1]} : vector<8x384xf32> to vector<8x128xf32>
    %83 = arith.addf %81, %82 : vector<8x128xf32>
    %84 = arith.negf %83 : vector<8x128xf32>
    %85 = math.exp %84 : vector<8x128xf32>
    %cst_43 = arith.constant 1.000000e+00 : f32
    %86 = vector.broadcast %cst_43 : f32 to vector<8x128xf32>
    %87 = arith.addf %86, %85 : vector<8x128xf32>
    %88 = arith.divf %86, %87 : vector<8x128xf32>
    %89 = vector.extract_strided_slice %66 {offsets = [0, 256], sizes = [8, 128], strides = [1, 1]} : vector<8x384xf32> to vector<8x128xf32>
    %90 = vector.extract_strided_slice %70 {offsets = [0, 256], sizes = [8, 128], strides = [1, 1]} : vector<8x384xf32> to vector<8x128xf32>
    %91 = vector.broadcast %72 : vector<1x128xf32> to vector<8x128xf32>
    %92 = arith.addf %90, %91 : vector<8x128xf32>
    %93 = arith.mulf %80, %92 : vector<8x128xf32>
    %94 = arith.addf %89, %93 : vector<8x128xf32>
    %95 = math.tanh %94 : vector<8x128xf32>
    %96 = arith.subf %58, %95 : vector<8x128xf32>
    %97 = arith.mulf %88, %96 : vector<8x128xf32>
    %98 = arith.addf %95, %97 : vector<8x128xf32>
    %c1_44 = arith.constant 1 : index
    %c0_45 = arith.constant 0 : index
    %c0_46 = arith.constant 0 : index
    %99 = vector.load %arg14[%c1_44, %c0_45, %c0_46] : memref<2x8x128xf32, #tpu.memory_space<vmem>>, vector<1x8x128xf32>
    %100 = vector.shape_cast %99 : vector<1x8x128xf32> to vector<8x128xf32>
    %101 = vector.shape_cast %98 : vector<8x128xf32> to vector<1x8x128xf32>
    tpu.vector_store %arg14[%c1_44, %c0_45, %c0_46], %101 {strides = array<i32>} : memref<2x8x128xf32, #tpu.memory_space<vmem>>, vector<1x8x128xf32>,
    %102 = arith.truncf %98 : vector<8x128xf32> to vector<8x128xbf16>
    %c0_47 = arith.constant 0 : index
    %c0_48 = arith.constant 0 : index
    %103 = vector.load %arg11[%c0_47, %c0_48] : memref<128x128xbf16, #tpu.memory_space<vmem>>, vector<128x128xbf16>
    %cst_49 = arith.constant dense<0.000000e+00> : vector<8x128xf32>
    %104 = tpu.matmul %102, %103, %cst_49 {dimension_numbers = #tpu.dot_dimension_numbers<[1], [0], [0], [1], [0, 0, 1, 1], [], []>} : vector<8x128xbf16>, vector<128x128xbf16>, vector<8x128xf32> -> vector<8x128xf32>
    %c0_50 = arith.constant 0 : index
    %c0_51 = arith.constant 0 : index
    %105 = vector.load %arg12[%c0_50, %c0_51] : memref<1x128xf32, #tpu.memory_space<vmem>>, vector<1x128xf32>
    %106 = vector.broadcast %105 : vector<1x128xf32> to vector<8x128xf32>
    %107 = arith.addf %104, %106 : vector<8x128xf32>
    %c0_52 = arith.constant 0 : index
    %c0_53 = arith.constant 0 : index
    %c0_54 = arith.constant 0 : index
    %108 = vector.load %arg13[%c0_52, %c0_53, %c0_54] : memref<1x8x128xf32, #tpu.memory_space<vmem>>, vector<1x8x128xf32>
    %109 = vector.shape_cast %108 : vector<1x8x128xf32> to vector<8x128xf32>
    %110 = vector.shape_cast %107 : vector<8x128xf32> to vector<1x8x128xf32>
    tpu.vector_store %arg13[%c0_52, %c0_53, %c0_54], %110 {strides = array<i32>} : memref<1x8x128xf32, #tpu.memory_space<vmem>>, vector<1x8x128xf32>,
    %cst_55 = arith.constant dense<0xFF800000> : vector<8xf32>
    %111 = vector.multi_reduction <maximumf>, %107, %cst_55 [1] : vector<8x128xf32> to vector<8xf32>
    %112 = vector.shape_cast %111 : vector<8xf32> to vector<8x1xf32>
    %113 = vector.broadcast %112 : vector<8x1xf32> to vector<8x128xf32>
    %114 = arith.cmpf oeq, %107, %113 : vector<8x128xf32>
    %c128_i32 = arith.constant 128 : i32
    %115 = vector.broadcast %c128_i32 : i32 to vector<8x128xi32>
    %116 = arith.select %114, %3, %115 : vector<8x128xi1>, vector<8x128xi32>
    %cst_56 = arith.constant dense<2147483647> : vector<8xi32>
    %117 = vector.multi_reduction <minsi>, %116, %cst_56 [1] : vector<8x128xi32> to vector<8xi32>
    %118 = vector.shape_cast %117 : vector<8xi32> to vector<8x1xi32>
    %c0_57 = arith.constant 0 : index
    %c0_58 = arith.constant 0 : index
    %119 = vector.load %arg17[%c0_57, %c0_58] : memref<8x1xi32, #tpu.memory_space<vmem>>, vector<8x1xi32>
    tpu.vector_store %arg17[%c0_57, %c0_58], %118 {strides = array<i32>} : memref<8x1xi32, #tpu.memory_space<vmem>>, vector<8x1xi32>,
    return
  }
  func.func @transform_0(%arg0: i32) -> (i32, i32, i32) {
    %c0_i32 = arith.constant 0 : i32
    %c0_i32_0 = arith.constant 0 : i32
    %c0_i32_1 = arith.constant 0 : i32
    %c0_i32_2 = arith.constant 0 : i32
    return %c0_i32, %c0_i32_0, %c0_i32_1 : i32, i32, i32
  }
  func.func @transform_1(%arg0: i32) -> (i32, i32, i32) {
    %c0_i32 = arith.constant 0 : i32
    %c0_i32_0 = arith.constant 0 : i32
    %c0_i32_1 = arith.constant 0 : i32
    %c0_i32_2 = arith.constant 0 : i32
    return %c0_i32, %c0_i32_0, %c0_i32_1 : i32, i32, i32
  }
  func.func @transform_2(%arg0: i32) -> (i32, i32, i32) {
    %c0_i32 = arith.constant 0 : i32
    %c0_i32_0 = arith.constant 0 : i32
    %c0_i32_1 = arith.constant 0 : i32
    %c0_i32_2 = arith.constant 0 : i32
    return %c0_i32, %c0_i32_0, %c0_i32_1 : i32, i32, i32
  }
  func.func @transform_3(%arg0: i32) -> (i32, i32, i32) {
    %c0_i32 = arith.constant 0 : i32
    %c0_i32_0 = arith.constant 0 : i32
    %c0_i32_1 = arith.constant 0 : i32
    %c0_i32_2 = arith.constant 0 : i32
    return %c0_i32, %c0_i32_0, %c0_i32_1 : i32, i32, i32
  }
  func.func @transform_4(%arg0: i32) -> (i32, i32, i32) {
    %c0_i32 = arith.constant 0 : i32
    %c0_i32_0 = arith.constant 0 : i32
    %c0_i32_1 = arith.constant 0 : i32
    %c0_i32_2 = arith.constant 0 : i32
    return %c0_i32, %c0_i32_0, %c0_i32_1 : i32, i32, i32
  }
  func.func @transform_5(%arg0: i32) -> (i32, i32, i32) {
    %c0_i32 = arith.constant 0 : i32
    %c0_i32_0 = arith.constant 0 : i32
    %c0_i32_1 = arith.constant 0 : i32
    %c0_i32_2 = arith.constant 0 : i32
    return %c0_i32, %c0_i32_0, %c0_i32_1 : i32, i32, i32
  }
  func.func @transform_6(%arg0: i32) -> (i32, i32, i32) {
    %c0_i32 = arith.constant 0 : i32
    %c0_i32_0 = arith.constant 0 : i32
    %c0_i32_1 = arith.constant 0 : i32
    %c0_i32_2 = arith.constant 0 : i32
    return %c0_i32, %c0_i32_0, %c0_i32_1 : i32, i32, i32
  }
  func.func @transform_7(%arg0: i32) -> (i32, i32, i32) {
    %c0_i32 = arith.constant 0 : i32
    %c0_i32_0 = arith.constant 0 : i32
    %c0_i32_1 = arith.constant 0 : i32
    %c0_i32_2 = arith.constant 0 : i32
    return %c0_i32, %c0_i32_0, %c0_i32_1 : i32, i32, i32
  }
  func.func @transform_8(%arg0: i32) -> (i32, i32, i32) {
    %c0_i32 = arith.constant 0 : i32
    %c0_i32_0 = arith.constant 0 : i32
    %c0_i32_1 = arith.constant 0 : i32
    %c0_i32_2 = arith.constant 0 : i32
    return %c0_i32, %c0_i32_0, %c0_i32_1 : i32, i32, i32
  }
  func.func @transform_9(%arg0: i32) -> (i32, i32) {
    %c0_i32 = arith.constant 0 : i32
    %c0_i32_0 = arith.constant 0 : i32
    %c0_i32_1 = arith.constant 0 : i32
    return %c0_i32, %c0_i32_0 : i32, i32
  }
  func.func @transform_10(%arg0: i32) -> (i32, i32) {
    %c0_i32 = arith.constant 0 : i32
    %c0_i32_0 = arith.constant 0 : i32
    %c0_i32_1 = arith.constant 0 : i32
    return %c0_i32, %c0_i32_0 : i32, i32
  }
  func.func @transform_11(%arg0: i32) -> (i32, i32) {
    %c0_i32 = arith.constant 0 : i32
    %c0_i32_0 = arith.constant 0 : i32
    %c0_i32_1 = arith.constant 0 : i32
    return %c0_i32, %c0_i32_0 : i32, i32
  }
  func.func @transform_12(%arg0: i32) -> (i32, i32, i32) {
    %c0_i32 = arith.constant 0 : i32
    %c0_i32_0 = arith.constant 0 : i32
    %c0_i32_1 = arith.constant 0 : i32
    return %arg0, %c0_i32, %c0_i32_0 : i32, i32, i32
  }
  func.func @transform_13(%arg0: i32) -> (i32, i32, i32) {
    %c0_i32 = arith.constant 0 : i32
    %c0_i32_0 = arith.constant 0 : i32
    %c0_i32_1 = arith.constant 0 : i32
    %c0_i32_2 = arith.constant 0 : i32
    return %c0_i32, %c0_i32_0, %c0_i32_1 : i32, i32, i32
  }
}

</mosaic_0001>

<llo_original>
// kernel: seq2seq_forward.1
$region0: #{seq2seq_forward.1}
  #allocation0 [shape = 'u32[]', space=smem, size = 0x4, offset = 0x4, fixed_abs, tag = 'smem constant byte address 0x4 - core index']
  #allocation1 [shape = 'u32[144,128]{1,0:T(1,128)}', space=vmem, size = 0x12000, scoped, tag = 'internal scratch']
  #allocation2 [shape = 'f32[10,8,128]{2,1,0:T(8,128)}', space=vmem, size = 0xa000, scoped, tag = 'scratch operand']
  #allocation3 [shape = 'f32[10,8,384]{2,1,0:T(8,128)}', space=vmem, size = 0x1e000, scoped, tag = 'scratch operand']
  #allocation4 [shape = 's32[8,1]{1,0:T(8,128)}', space=vmem, size = 0x1000, scoped, tag = 'scratch operand']
  %s0 = inlined_call_operand.vmem [shape: f32[10,8,128], index: 0, kind: input, shape index: {}]
  %s1 = inlined_call_operand.vmem [shape: bf16[2,128,384], index: 1, kind: input, shape index: {}]
  %s2 = inlined_call_operand.vmem [shape: bf16[2,128,384], index: 2, kind: input, shape index: {}]
  %s3 = inlined_call_operand.vmem [shape: f32[2,1,384], index: 3, kind: input, shape index: {}]
  %s4 = inlined_call_operand.vmem [shape: f32[2,1,128], index: 4, kind: input, shape index: {}]
  %s5 = inlined_call_operand.vmem [shape: bf16[2,128,384], index: 5, kind: input, shape index: {}]
  %s6 = inlined_call_operand.vmem [shape: bf16[2,128,384], index: 6, kind: input, shape index: {}]
  %s7 = inlined_call_operand.vmem [shape: f32[2,1,384], index: 7, kind: input, shape index: {}]
  %s8 = inlined_call_operand.vmem [shape: f32[2,1,128], index: 8, kind: input, shape index: {}]
  %s9 = inlined_call_operand.vmem [shape: bf16[128,128], index: 9, kind: input, shape index: {}]
  %s10 = inlined_call_operand.vmem [shape: bf16[128,128], index: 10, kind: input, shape index: {}]
  %s11 = inlined_call_operand.vmem [shape: f32[1,128], index: 11, kind: input, shape index: {}]
  %s12 = inlined_call_operand.vmem [shape: f32[8,8,128], index: 12, kind: output, shape index: {0}]
  %s13 = inlined_call_operand.vmem [shape: f32[2,8,128], index: 13, kind: output, shape index: {1}]
  %14 = xla_tuple %s12, %s13
  %s15 = sld [smem:[#allocation0]]
  $region107: #{seq2seq_forward.1} parent=0
    _
  %s17 = ssub.s32 1, %s15
  %s18 = scalar_select 0, %s17, %s15
  loop: start=0, step=1, limit=10
  $region2: #{seq2seq_forward.1} parent=0 // loop_pre_header
    _
  $region3: #{seq2seq_forward.1} parent=0 // loop_header
    %s20 = sphi 0, %s24
    %p21 = scmp.ge.s32.totalorder %s20, 10
    %s28 = sphi 0, %s28
    %s30 = sphi 0, %s28
    %s31 = sphi 0, %s30
    %s45 = sphi 0, %s31
    %s49 = sphi 0, %s49
    %s51 = sphi 0, %s49
    %s52 = sphi 0, %s51
    %s66 = sphi 0, %s52
    %s70 = sphi 0, %s70
    %s72 = sphi 0, %s70
    %s73 = sphi 0, %s72
    %s87 = sphi 0, %s73
    %s91 = sphi 0, %s91
    %s93 = sphi 0, %s91
    %s94 = sphi 0, %s93
    %s108 = sphi 0, %s94
    %s112 = sphi 0, %s112
    %s114 = sphi 0, %s112
    %s115 = sphi 0, %s114
    %s129 = sphi 0, %s115
    %s133 = sphi 0, %s133
    %s135 = sphi 0, %s133
    %s136 = sphi 0, %s135
    %s150 = sphi 0, %s136
    %s154 = sphi 0, %s154
    %s156 = sphi 0, %s154
    %s157 = sphi 0, %s156
    %s171 = sphi 0, %s157
    %s175 = sphi 0, %s175
    %s177 = sphi 0, %s175
    %s178 = sphi 0, %s177
    %s192 = sphi 0, %s178
    %s196 = sphi 0, %s196
    %s198 = sphi 0, %s196
    %s199 = sphi 0, %s198
    %s213 = sphi 0, %s199
    %s217 = sphi 0, %s217
    %s219 = sphi 0, %s217
    %s220 = sphi 0, %s219
    %s234 = sphi 0, %s220
    %s238 = sphi 0, %s238
    %s240 = sphi 0, %s238
    %s241 = sphi 0, %s240
    %s255 = sphi 0, %s241
    %s259 = sphi 0, %s259
    %s261 = sphi 0, %s259
    %s262 = sphi 0, %s261
    %s276 = sphi 0, %s262
    %s282 = sphi 0, %s284
    %s285 = sphi 0, %s282
    %s286 = sphi 0, %s285
    %s302 = sphi 0, %s286
    %s306 = sphi 0, %s306
    %s308 = sphi 0, %s306
    %s309 = sphi 0, %s308
    %s323 = sphi 0, %s309
  $region4: #{seq2seq_forward.1} parent=0 // loop_header_branch
    %23 = sbr.rel (%p21) target = $region8
  $region5: #{seq2seq_forward.1} parent=0 // loop_body
    %s25 = ssub.s32 %s20, 1
    %s26 = ssub.s32 %s20, 2
    %s27 = sadd.s32 %s20, 1
    %s29 = sadd.s32 %s28, 1
    %p32 = scmp.eq.s32.totalorder %s20, 7
    %p33 = scmp.ne.s32.totalorder %s28, %s30
    %p34 = scmp.eq.s32.totalorder %s20, 0
    %p35 = por %p33, %p34
    %p36 = scmp.ne.s32.totalorder %s28, %s30
    %p37 = scmp.eq.s32.totalorder %s25, 7
    %p38 = por %p36, %p37
    %p39 = scmp.ne.s32.totalorder %s30, %s31
    %p40 = scmp.eq.s32.totalorder %s25, 0
    %p41 = por %p39, %p40
    %p42 = scmp.ne.s32.totalorder %s30, %s31
    %p43 = scmp.eq.s32.totalorder %s26, 7
    %p44 = por %p42, %p43
    %p46 = scmp.ne.s32.totalorder %s31, %s45
    %p47 = scmp.eq.s32.totalorder %s26, 0
    %p48 = por %p46, %p47
    %s50 = sadd.s32 %s49, 1
    %p53 = scmp.eq.s32.totalorder %s20, 7
    %p54 = scmp.ne.s32.totalorder %s49, %s51
    %p55 = scmp.eq.s32.totalorder %s20, 0
    %p56 = por %p54, %p55
    %p57 = scmp.ne.s32.totalorder %s49, %s51
    %p58 = scmp.eq.s32.totalorder %s25, 7
    %p59 = por %p57, %p58
    %p60 = scmp.ne.s32.totalorder %s51, %s52
    %p61 = scmp.eq.s32.totalorder %s25, 0
    %p62 = por %p60, %p61
    %p63 = scmp.ne.s32.totalorder %s51, %s52
    %p64 = scmp.eq.s32.totalorder %s26, 7
    %p65 = por %p63, %p64
    %p67 = scmp.ne.s32.totalorder %s52, %s66
    %p68 = scmp.eq.s32.totalorder %s26, 0
    %p69 = por %p67, %p68
    %s71 = sadd.s32 %s70, 1
    %p74 = scmp.eq.s32.totalorder %s20, 7
    %p75 = scmp.ne.s32.totalorder %s70, %s72
    %p76 = scmp.eq.s32.totalorder %s20, 0
    %p77 = por %p75, %p76
    %p78 = scmp.ne.s32.totalorder %s70, %s72
    %p79 = scmp.eq.s32.totalorder %s25, 7
    %p80 = por %p78, %p79
    %p81 = scmp.ne.s32.totalorder %s72, %s73
    %p82 = scmp.eq.s32.totalorder %s25, 0
    %p83 = por %p81, %p82
    %p84 = scmp.ne.s32.totalorder %s72, %s73
    %p85 = scmp.eq.s32.totalorder %s26, 7
    %p86 = por %p84, %p85
    %p88 = scmp.ne.s32.totalorder %s73, %s87
    %p89 = scmp.eq.s32.totalorder %s26, 0
    %p90 = por %p88, %p89
    %s92 = sadd.s32 %s91, 1
    %p95 = scmp.eq.s32.totalorder %s20, 7
    %p96 = scmp.ne.s32.totalorder %s91, %s93
    %p97 = scmp.eq.s32.totalorder %s20, 0
    %p98 = por %p96, %p97
    %p99 = scmp.ne.s32.totalorder %s91, %s93
    %p100 = scmp.eq.s32.totalorder %s25, 7
    %p101 = por %p99, %p100
    %p102 = scmp.ne.s32.totalorder %s93, %s94
    %p103 = scmp.eq.s32.totalorder %s25, 0
    %p104 = por %p102, %p103
    %p105 = scmp.ne.s32.totalorder %s93, %s94
    %p106 = scmp.eq.s32.totalorder %s26, 7
    %p107 = por %p105, %p106
    %p109 = scmp.ne.s32.totalorder %s94, %s108
    %p110 = scmp.eq.s32.totalorder %s26, 0
    %p111 = por %p109, %p110
    %s113 = sadd.s32 %s112, 1
    %p116 = scmp.eq.s32.totalorder %s20, 7
    %p117 = scmp.ne.s32.totalorder %s112, %s114
    %p118 = scmp.eq.s32.totalorder %s20, 0
    %p119 = por %p117, %p118
    %p120 = scmp.ne.s32.totalorder %s112, %s114
    %p121 = scmp.eq.s32.totalorder %s25, 7
    %p122 = por %p120, %p121
    %p123 = scmp.ne.s32.totalorder %s114, %s115
    %p124 = scmp.eq.s32.totalorder %s25, 0
    %p125 = por %p123, %p124
    %p126 = scmp.ne.s32.totalorder %s114, %s115
    %p127 = scmp.eq.s32.totalorder %s26, 7
    %p128 = por %p126, %p127
    %p130 = scmp.ne.s32.totalorder %s115, %s129
    %p131 = scmp.eq.s32.totalorder %s26, 0
    %p132 = por %p130, %p131
    %s134 = sadd.s32 %s133, 1
    %p137 = scmp.eq.s32.totalorder %s20, 7
    %p138 = scmp.ne.s32.totalorder %s133, %s135
    %p139 = scmp.eq.s32.totalorder %s20, 0
    %p140 = por %p138, %p139
    %p141 = scmp.ne.s32.totalorder %s133, %s135
    %p142 = scmp.eq.s32.totalorder %s25, 7
    %p143 = por %p141, %p142
    %p144 = scmp.ne.s32.totalorder %s135, %s136
    %p145 = scmp.eq.s32.totalorder %s25, 0
    %p146 = por %p144, %p145
    %p147 = scmp.ne.s32.totalorder %s135, %s136
    %p148 = scmp.eq.s32.totalorder %s26, 7
    %p149 = por %p147, %p148
    %p151 = scmp.ne.s32.totalorder %s136, %s150
    %p152 = scmp.eq.s32.totalorder %s26, 0
    %p153 = por %p151, %p152
    %s155 = sadd.s32 %s154, 1
    %p158 = scmp.eq.s32.totalorder %s20, 7
    %p159 = scmp.ne.s32.totalorder %s154, %s156
    %p160 = scmp.eq.s32.totalorder %s20, 0
    %p161 = por %p159, %p160
    %p162 = scmp.ne.s32.totalorder %s154, %s156
    %p163 = scmp.eq.s32.totalorder %s25, 7
    %p164 = por %p162, %p163
    %p165 = scmp.ne.s32.totalorder %s156, %s157
    %p166 = scmp.eq.s32.totalorder %s25, 0
    %p167 = por %p165, %p166
    %p168 = scmp.ne.s32.totalorder %s156, %s157
    %p169 = scmp.eq.s32.totalorder %s26, 7
    %p170 = por %p168, %p169
    %p172 = scmp.ne.s32.totalorder %s157, %s171
    %p173 = scmp.eq.s32.totalorder %s26, 0
    %p174 = por %p172, %p173
    %s176 = sadd.s32 %s175, 1
    %p179 = scmp.eq.s32.totalorder %s20, 7
    %p180 = scmp.ne.s32.totalorder %s175, %s177
    %p181 = scmp.eq.s32.totalorder %s20, 0
    %p182 = por %p180, %p181
    %p183 = scmp.ne.s32.totalorder %s175, %s177
    %p184 = scmp.eq.s32.totalorder %s25, 7
    %p185 = por %p183, %p184
    %p186 = scmp.ne.s32.totalorder %s177, %s178
    %p187 = scmp.eq.s32.totalorder %s25, 0
    %p188 = por %p186, %p187
    %p189 = scmp.ne.s32.totalorder %s177, %s178
    %p190 = scmp.eq.s32.totalorder %s26, 7
    %p191 = por %p189, %p190
    %p193 = scmp.ne.s32.totalorder %s178, %s192
    %p194 = scmp.eq.s32.totalorder %s26, 0
    %p195 = por %p193, %p194
    %s197 = sadd.s32 %s196, 1
    %p200 = scmp.eq.s32.totalorder %s20, 7
    %p201 = scmp.ne.s32.totalorder %s196, %s198
    %p202 = scmp.eq.s32.totalorder %s20, 0
    %p203 = por %p201, %p202
    %p204 = scmp.ne.s32.totalorder %s196, %s198
    %p205 = scmp.eq.s32.totalorder %s25, 7
    %p206 = por %p204, %p205
    %p207 = scmp.ne.s32.totalorder %s198, %s199
    %p208 = scmp.eq.s32.totalorder %s25, 0
    %p209 = por %p207, %p208
    %p210 = scmp.ne.s32.totalorder %s198, %s199
    %p211 = scmp.eq.s32.totalorder %s26, 7
    %p212 = por %p210, %p211
    %p214 = scmp.ne.s32.totalorder %s199, %s213
    %p215 = scmp.eq.s32.totalorder %s26, 0
    %p216 = por %p214, %p215
    %s218 = sadd.s32 %s217, 1
    %p221 = scmp.eq.s32.totalorder %s20, 7
    %p222 = scmp.ne.s32.totalorder %s217, %s219
    %p223 = scmp.eq.s32.totalorder %s20, 0
    %p224 = por %p222, %p223
    %p225 = scmp.ne.s32.totalorder %s217, %s219
    %p226 = scmp.eq.s32.totalorder %s25, 7
    %p227 = por %p225, %p226
    %p228 = scmp.ne.s32.totalorder %s219, %s220
    %p229 = scmp.eq.s32.totalorder %s25, 0
    %p230 = por %p228, %p229
    %p231 = scmp.ne.s32.totalorder %s219, %s220
    %p232 = scmp.eq.s32.totalorder %s26, 7
    %p233 = por %p231, %p232
    %p235 = scmp.ne.s32.totalorder %s220, %s234
    %p236 = scmp.eq.s32.totalorder %s26, 0
    %p237 = por %p235, %p236
    %s239 = sadd.s32 %s238, 1
    %p242 = scmp.eq.s32.totalorder %s20, 7
    %p243 = scmp.ne.s32.totalorder %s238, %s240
    %p244 = scmp.eq.s32.totalorder %s20, 0
    %p245 = por %p243, %p244
    %p246 = scmp.ne.s32.totalorder %s238, %s240
    %p247 = scmp.eq.s32.totalorder %s25, 7
    %p248 = por %p246, %p247
    %p249 = scmp.ne.s32.totalorder %s240, %s241
    %p250 = scmp.eq.s32.totalorder %s25, 0
    %p251 = por %p249, %p250
    %p252 = scmp.ne.s32.totalorder %s240, %s241
    %p253 = scmp.eq.s32.totalorder %s26, 7
    %p254 = por %p252, %p253
    %p256 = scmp.ne.s32.totalorder %s241, %s255
    %p257 = scmp.eq.s32.totalorder %s26, 0
    %p258 = por %p256, %p257
    %s260 = sadd.s32 %s259, 1
    %p263 = scmp.eq.s32.totalorder %s20, 7
    %p264 = scmp.ne.s32.totalorder %s259, %s261
    %p265 = scmp.eq.s32.totalorder %s20, 0
    %p266 = por %p264, %p265
    %p267 = scmp.ne.s32.totalorder %s259, %s261
    %p268 = scmp.eq.s32.totalorder %s25, 7
    %p269 = por %p267, %p268
    %p270 = scmp.ne.s32.totalorder %s261, %s262
    %p271 = scmp.eq.s32.totalorder %s25, 0
    %p272 = por %p270, %p271
    %p273 = scmp.ne.s32.totalorder %s261, %s262
    %p274 = scmp.eq.s32.totalorder %s26, 7
    %p275 = por %p273, %p274
    %p277 = scmp.ne.s32.totalorder %s262, %s276
    %p278 = scmp.eq.s32.totalorder %s26, 0
    %p279 = por %p277, %p278
    %s280 = ssub.s32 %s20, %s27
    %p281 = scmp.eq.s32.totalorder %s280, 0
    %s283 = sadd.s32 %s282, 1
    %s284 = scalar_select %p281, %s282, %s283
    %p287 = pneg %p281
    %p288 = scmp.eq.s32.totalorder %s20, 7
    %p289 = por %p287, %p288
    %p290 = scmp.ne.s32.totalorder %s282, %s285
    %p291 = scmp.eq.s32.totalorder %s20, 0
    %p292 = por %p290, %p291
    %p293 = scmp.ne.s32.totalorder %s282, %s285
    %p294 = scmp.eq.s32.totalorder %s25, 7
    %p295 = por %p293, %p294
    %p296 = scmp.ne.s32.totalorder %s285, %s286
    %p297 = scmp.eq.s32.totalorder %s25, 0
    %p298 = por %p296, %p297
    %p299 = scmp.ne.s32.totalorder %s285, %s286
    %p300 = scmp.eq.s32.totalorder %s26, 7
    %p301 = por %p299, %p300
    %p303 = scmp.ne.s32.totalorder %s286, %s302
    %p304 = scmp.eq.s32.totalorder %s26, 0
    %p305 = por %p303, %p304
    %s307 = sadd.s32 %s306, 1
    %p310 = scmp.eq.s32.totalorder %s20, 7
    %p311 = scmp.ne.s32.totalorder %s306, %s308
    %p312 = scmp.eq.s32.totalorder %s20, 0
    %p313 = por %p311, %p312
    %p314 = scmp.ne.s32.totalorder %s306, %s308
    %p315 = scmp.eq.s32.totalorder %s25, 7
    %p316 = por %p314, %p315
    %p317 = scmp.ne.s32.totalorder %s308, %s309
    %p318 = scmp.eq.s32.totalorder %s25, 0
    %p319 = por %p317, %p318
    %p320 = scmp.ne.s32.totalorder %s308, %s309
    %p321 = scmp.eq.s32.totalorder %s26, 7
    %p322 = por %p320, %p321
    %p324 = scmp.ne.s32.totalorder %s309, %s323
    %p325 = scmp.eq.s32.totalorder %s26, 0
    %p326 = por %p324, %p325
    %p327 = scmp.le.s32.totalorder 1, %s20
    %p328 = scmp.lt.s32.totalorder %s20, 9
    %p329 = pnand %p327, %p328
    %p330 = pneg %p329
    // Predicated region
    $region9: #{seq2seq_forward.1} parent=5 // pred_check
      _
    $region10: #{seq2seq_forward.1} parent=5 // pred_check_branch
      %332 = sbr.rel (%p329) target = $region12
    $region11: #{seq2seq_forward.1} parent=5 // pred_region
      %s333 = ssub.s32 %s20, 1
      // Predicated region
      $region13: #{seq2seq_forward.1} parent=11 // pred_check
        %p334 = pneg %p41
      $region14: #{seq2seq_forward.1} parent=11 // pred_check_branch
        %336 = sbr.rel (%p334) target = $region16
      $region15: #{seq2seq_forward.1} parent=11 // pred_region
        _
      $region16: #{seq2seq_forward.1} parent=11 // pred_fallthru
        _
      // Predicated region
      $region17: #{seq2seq_forward.1} parent=11 // pred_check
        %p337 = pneg %p62
      $region18: #{seq2seq_forward.1} parent=11 // pred_check_branch
        %339 = sbr.rel (%p337) target = $region20
      $region19: #{seq2seq_forward.1} parent=11 // pred_region
        _
      $region20: #{seq2seq_forward.1} parent=11 // pred_fallthru
        _
      // Predicated region
      $region21: #{seq2seq_forward.1} parent=11 // pred_check
        %p340 = pneg %p83
      $region22: #{seq2seq_forward.1} parent=11 // pred_check_branch
        %342 = sbr.rel (%p340) target = $region24
      $region23: #{seq2seq_forward.1} parent=11 // pred_region
        _
      $region24: #{seq2seq_forward.1} parent=11 // pred_fallthru
        _
      // Predicated region
      $region25: #{seq2seq_forward.1} parent=11 // pred_check
        %p343 = pneg %p104
      $region26: #{seq2seq_forward.1} parent=11 // pred_check_branch
        %345 = sbr.rel (%p343) target = $region28
      $region27: #{seq2seq_forward.1} parent=11 // pred_region
        _
      $region28: #{seq2seq_forward.1} parent=11 // pred_fallthru
        _
      // Predicated region
      $region29: #{seq2seq_forward.1} parent=11 // pred_check
        %p346 = pneg %p125
      $region30: #{seq2seq_forward.1} parent=11 // pred_check_branch
        %348 = sbr.rel (%p346) target = $region32
      $region31: #{seq2seq_forward.1} parent=11 // pred_region
        _
      $region32: #{seq2seq_forward.1} parent=11 // pred_fallthru
        _
      // Predicated region
      $region33: #{seq2seq_forward.1} parent=11 // pred_check
        %p349 = pneg %p146
      $region34: #{seq2seq_forward.1} parent=11 // pred_check_branch
        %351 = sbr.rel (%p349) target = $region36
      $region35: #{seq2seq_forward.1} parent=11 // pred_region
        _
      $region36: #{seq2seq_forward.1} parent=11 // pred_fallthru
        _
      // Predicated region
      $region37: #{seq2seq_forward.1} parent=11 // pred_check
        %p352 = pneg %p167
      $region38: #{seq2seq_forward.1} parent=11 // pred_check_branch
        %354 = sbr.rel (%p352) target = $region40
      $region39: #{seq2seq_forward.1} parent=11 // pred_region
        _
      $region40: #{seq2seq_forward.1} parent=11 // pred_fallthru
        _
      // Predicated region
      $region41: #{seq2seq_forward.1} parent=11 // pred_check
        %p355 = pneg %p188
      $region42: #{seq2seq_forward.1} parent=11 // pred_check_branch
        %357 = sbr.rel (%p355) target = $region44
      $region43: #{seq2seq_forward.1} parent=11 // pred_region
        _
      $region44: #{seq2seq_forward.1} parent=11 // pred_fallthru
        _
      // Predicated region
      $region45: #{seq2seq_forward.1} parent=11 // pred_check
        %p358 = pneg %p209
      $region46: #{seq2seq_forward.1} parent=11 // pred_check_branch
        %360 = sbr.rel (%p358) target = $region48
      $region47: #{seq2seq_forward.1} parent=11 // pred_region
        _
      $region48: #{seq2seq_forward.1} parent=11 // pred_fallthru
        _
      // Predicated region
      $region49: #{seq2seq_forward.1} parent=11 // pred_check
        %p361 = pneg %p230
      $region50: #{seq2seq_forward.1} parent=11 // pred_check_branch
        %363 = sbr.rel (%p361) target = $region52
      $region51: #{seq2seq_forward.1} parent=11 // pred_region
        _
      $region52: #{seq2seq_forward.1} parent=11 // pred_fallthru
        _
      // Predicated region
      $region53: #{seq2seq_forward.1} parent=11 // pred_check
        %p364 = pneg %p251
      $region54: #{seq2seq_forward.1} parent=11 // pred_check_branch
        %366 = sbr.rel (%p364) target = $region56
      $region55: #{seq2seq_forward.1} parent=11 // pred_region
        _
      $region56: #{seq2seq_forward.1} parent=11 // pred_fallthru
        _
      // Predicated region
      $region57: #{seq2seq_forward.1} parent=11 // pred_check
        %p367 = pneg %p272
      $region58: #{seq2seq_forward.1} parent=11 // pred_check_branch
        %369 = sbr.rel (%p367) target = $region60
      $region59: #{seq2seq_forward.1} parent=11 // pred_region
        _
      $region60: #{seq2seq_forward.1} parent=11 // pred_fallthru
        _
    $region12: #{seq2seq_forward.1} parent=5 // pred_fallthru
      _
    %p370 = scmp.lt.s32.totalorder %s20, 8
    // Predicated region
    $region61: #{seq2seq_forward.1} parent=5 // pred_check
      %p371 = pneg %p370
    $region62: #{seq2seq_forward.1} parent=5 // pred_check_branch
      %373 = sbr.rel (%p371) target = $region64
    $region63: #{seq2seq_forward.1} parent=5 // pred_region
      _
    $region64: #{seq2seq_forward.1} parent=5 // pred_fallthru
      _
    %p374 = scmp.le.s32.totalorder 1, %s20
    %p375 = scmp.lt.s32.totalorder %s20, 9
    %p376 = pnand %p374, %p375
    %p377 = pneg %p376
    // Predicated region
    $region65: #{seq2seq_forward.1} parent=5 // pred_check
      _
    $region66: #{seq2seq_forward.1} parent=5 // pred_check_branch
      %379 = sbr.rel (%p376) target = $region68
    $region67: #{seq2seq_forward.1} parent=5 // pred_region
      %s380 = ssub.s32 %s20, 1
      %p381 = pneg %p41
      %p382 = pneg %p38
      %p383 = pneg %p62
      %p384 = pneg %p59
      %p385 = pneg %p83
      %p386 = pneg %p80
      %p387 = pneg %p104
      %p388 = pneg %p101
      %p389 = pneg %p125
      %p390 = pneg %p122
      %p391 = pneg %p146
      %p392 = pneg %p143
      %p393 = pneg %p167
      %p394 = pneg %p164
      %p395 = pneg %p188
      %p396 = pneg %p185
      %p397 = pneg %p209
      %p398 = pneg %p206
      %p399 = pneg %p230
      %p400 = pneg %p227
      %p401 = pneg %p251
      %p402 = pneg %p248
      %p403 = pneg %p272
      %p404 = pneg %p269
      %p405 = pneg %p298
      %p406 = pneg %p295
      %p407 = scmp.lt.s32.totalorder %s25, 7
      %s408 = scalar_select %p407, %s25, 7
      %s409 = smul.addr %s408, 8
      %s410 = scalar_lea.vmem %s12, %s409
      %p411 = pneg %p319
      %p412 = pneg %p316
      %p413 = scmp.lt.s32.totalorder %s25, 7
      %s414 = scalar_select %p413, %s25, 7
      %s415 = smul.addr %s414, 8
      %s416 = scalar_lea.vmem %s12, %s415
      %p418 = scmp.eq.s32.totalorder %s25, 0
      // Predicated region
      $region69: #{seq2seq_forward.1} parent=67 // pred_check
        %p419 = pneg %p418
      $region70: #{seq2seq_forward.1} parent=67 // pred_check_branch
        %421 = sbr.rel (%p419) target = $region72
      $region71: #{seq2seq_forward.1} parent=67 // pred_region
        %v422 = vld [vmem:[%s0] sm:$0xff]
        %v423 = vld [vmem:[%s0 + $0x8] sm:$0xff]
        %v424 = vld [vmem:[%s0 + $0x10] sm:$0xff]
        %v425 = vld [vmem:[%s0 + $0x18] sm:$0xff]
        %v426 = vld [vmem:[%s0 + $0x20] sm:$0xff]
        %v427 = vld [vmem:[%s0 + $0x28] sm:$0xff]
        %v428 = vld [vmem:[%s0 + $0x30] sm:$0xff]
        %v429 = vld [vmem:[%s0 + $0x38] sm:$0xff]
        %v430 = vld [vmem:[%s0 + $0x40] sm:$0xff]
        %v431 = vld [vmem:[%s0 + $0x48] sm:$0xff]
        %v432 = vpack.c.bf16 %v423, %v422
        %v433 = vpack.c.bf16 %v425, %v424
        %v434 = vpack.c.bf16 %v427, %v426
        %v435 = vpack.c.bf16 %v429, %v428
        %v436 = vpack.c.bf16 %v431, %v430
        %v437 = vld [vmem:[%s1] sm:$0xff]
        %v438 = vld [vmem:[%s1 + $0x8] sm:$0xf]
        %v439 = vld [vmem:[%s1 + $0xc] sm:$0xff]
        %v440 = vld [vmem:[%s1 + $0x14] sm:$0xf]
        %v441 = vld [vmem:[%s1 + $0x18] sm:$0xff]
        %v442 = vld [vmem:[%s1 + $0x20] sm:$0xf]
        %v443 = vld [vmem:[%s1 + $0x24] sm:$0xff]
        %v444 = vld [vmem:[%s1 + $0x2c] sm:$0xf]
        %v445 = vld [vmem:[%s1 + $0x30] sm:$0xff]
        %v446 = vld [vmem:[%s1 + $0x38] sm:$0xf]
        %v447 = vld [vmem:[%s1 + $0x3c] sm:$0xff]
        %v448 = vld [vmem:[%s1 + $0x44] sm:$0xf]
        %v449 = vld [vmem:[%s1 + $0x48] sm:$0xff]
        %v450 = vld [vmem:[%s1 + $0x50] sm:$0xf]
        %v451 = vld [vmem:[%s1 + $0x54] sm:$0xff]
        %v452 = vld [vmem:[%s1 + $0x5c] sm:$0xf]
        %v453 = vld [vmem:[%s1 + $0x60] sm:$0xff]
        %v454 = vld [vmem:[%s1 + $0x68] sm:$0xf]
        %v455 = vld [vmem:[%s1 + $0x6c] sm:$0xff]
        %v456 = vld [vmem:[%s1 + $0x74] sm:$0xf]
        %v457 = vld [vmem:[%s1 + $0x78] sm:$0xff]
        %v458 = vld [vmem:[%s1 + $0x80] sm:$0xf]
        %v459 = vld [vmem:[%s1 + $0x84] sm:$0xff]
        %v460 = vld [vmem:[%s1 + $0x8c] sm:$0xf]
        %v461 = vld [vmem:[%s1 + $0x90] sm:$0xff]
        %v462 = vld [vmem:[%s1 + $0x98] sm:$0xf]
        %v463 = vld [vmem:[%s1 + $0x9c] sm:$0xff]
        %v464 = vld [vmem:[%s1 + $0xa4] sm:$0xf]
        %v465 = vld [vmem:[%s1 + $0xa8] sm:$0xff]
        %v466 = vld [vmem:[%s1 + $0xb0] sm:$0xf]
        %v467 = vld [vmem:[%s1 + $0xb4] sm:$0xff]
        %v468 = vld [vmem:[%s1 + $0xbc] sm:$0xf]
        %v469 = vld [vmem:[%s3] sm:$0x7]
        %v471 = vlaneseq
        %v472 = vshrl.u32 %v471, 7
        %v473 = vsub.s32 0, %v472
        %v474 = vrot.slane %v469, %v473
        %v475 = vlaneseq
        %v476 = vshrl.u32 %v475, 7
        %v477 = vsub.s32 1, %v476
        %v478 = vrot.slane %v469, %v477
        %v479 = vlaneseq
        %v480 = vshrl.u32 %v479, 7
        %v481 = vsub.s32 2, %v480
        %v482 = vrot.slane %v469, %v481
        %v518 = vunpack.c.l.b16 %v437
        %v519 = vunpack.c.h.b16 %v437
        %v520 = vunpack.c.l.b16 %v438
        %v521 = vunpack.c.l.b16 %v439
        %v522 = vunpack.c.h.b16 %v439
        %v523 = vunpack.c.l.b16 %v440
        %v524 = vunpack.c.l.b16 %v441
        %v525 = vunpack.c.h.b16 %v441
        %v526 = vunpack.c.l.b16 %v442
        %v527 = vunpack.c.l.b16 %v443
        %v528 = vunpack.c.h.b16 %v443
        %v529 = vunpack.c.l.b16 %v444
        %v530 = vunpack.c.l.b16 %v445
        %v531 = vunpack.c.h.b16 %v445
        %v532 = vunpack.c.l.b16 %v446
        %v533 = vunpack.c.l.b16 %v447
        %v534 = vunpack.c.h.b16 %v447
        %v535 = vunpack.c.l.b16 %v448
        %v536 = vunpack.c.l.b16 %v449
        %v537 = vunpack.c.h.b16 %v449
        %v538 = vunpack.c.l.b16 %v450
        %v539 = vunpack.c.l.b16 %v451
        %v540 = vunpack.c.h.b16 %v451
        %v541 = vunpack.c.l.b16 %v452
        %v542 = vunpack.c.l.b16 %v453
        %v543 = vunpack.c.h.b16 %v453
        %v544 = vunpack.c.l.b16 %v454
        %v545 = vunpack.c.l.b16 %v455
        %v546 = vunpack.c.h.b16 %v455
        %v547 = vunpack.c.l.b16 %v456
        %v548 = vunpack.c.l.b16 %v457
        %v549 = vunpack.c.h.b16 %v457
        %v550 = vunpack.c.l.b16 %v458
        %v551 = vunpack.c.l.b16 %v459
        %v552 = vunpack.c.h.b16 %v459
        %v553 = vunpack.c.l.b16 %v460
        %v554 = vunpack.c.l.b16 %v461
        %v555 = vunpack.c.h.b16 %v461
        %v556 = vunpack.c.l.b16 %v462
        %v557 = vunpack.c.l.b16 %v463
        %v558 = vunpack.c.h.b16 %v463
        %v559 = vunpack.c.l.b16 %v464
        %v560 = vunpack.c.l.b16 %v465
        %v561 = vunpack.c.h.b16 %v465
        %v562 = vunpack.c.l.b16 %v466
        %v563 = vunpack.c.l.b16 %v467
        %v564 = vunpack.c.h.b16 %v467
        %v565 = vunpack.c.l.b16 %v468
        %v566 = vpack.c.b16 %v521, %v518
        %v567 = vpack.c.b16 %v522, %v519
        %v568 = vpack.c.b16 %v523, %v520
        %v569 = vpack.c.b16 %v527, %v524
        %v570 = vpack.c.b16 %v528, %v525
        %v571 = vpack.c.b16 %v529, %v526
        %v572 = vpack.c.b16 %v533, %v530
        %v573 = vpack.c.b16 %v534, %v531
        %v574 = vpack.c.b16 %v535, %v532
        %v575 = vpack.c.b16 %v539, %v536
        %v576 = vpack.c.b16 %v540, %v537
        %v577 = vpack.c.b16 %v541, %v538
        %v578 = vpack.c.b16 %v545, %v542
        %v579 = vpack.c.b16 %v546, %v543
        %v580 = vpack.c.b16 %v547, %v544
        %v581 = vpack.c.b16 %v551, %v548
        %v582 = vpack.c.b16 %v552, %v549
        %v583 = vpack.c.b16 %v553, %v550
        %v584 = vpack.c.b16 %v557, %v554
        %v585 = vpack.c.b16 %v558, %v555
        %v586 = vpack.c.b16 %v559, %v556
        %v587 = vpack.c.b16 %v563, %v560
        %v588 = vpack.c.b16 %v564, %v561
        %v589 = vpack.c.b16 %v565, %v562
        %614 = vmatprep.subr.bf16.mxu0 %v567
        %615 = vmatpush1.bf16.msra.mxu0 %v566
        %616 = vmatprep.subr.bf16.mxu0 %v570
        %617 = vmatpush1.bf16.msra.mxu0 %v569
        %618 = vmatprep.subr.bf16.mxu0 %v573
        %619 = vmatpush1.bf16.msra.mxu0 %v572
        %620 = vmatprep.subr.bf16.mxu0 %v576
        %621 = vmatpush1.bf16.msra.mxu0 %v575
        %622 = vmatprep.subr.bf16.mxu0 %v579
        %623 = vmatpush1.bf16.msra.mxu0 %v578
        %624 = vmatprep.subr.bf16.mxu0 %v582
        %625 = vmatpush1.bf16.msra.mxu0 %v581
        %626 = vmatprep.subr.bf16.mxu0 %v585
        %627 = vmatpush1.bf16.msra.mxu0 %v584
        %628 = vmatprep.subr.bf16.mxu0 %v588
        %629 = vmatpush1.bf16.msra.mxu0 %v587
        %630 = vmatprep.subr.bf16.mxu0 0
        %631 = vmatpush1.bf16.msra.mxu0 0
        %632 = vmatprep.subr.bf16.mxu0 0
        %633 = vmatpush1.bf16.msra.mxu0 0
        %634 = vmatprep.subr.bf16.mxu0 0
        %635 = vmatpush1.bf16.msra.mxu0 0
        %636 = vmatprep.subr.bf16.mxu0 0
        %637 = vmatpush1.bf16.msra.mxu0 0
        %638 = vmatprep.subr.bf16.mxu0 0
        %639 = vmatpush1.bf16.msra.mxu0 0
        %640 = vmatprep.subr.bf16.mxu0 0
        %641 = vmatpush1.bf16.msra.mxu0 0
        %642 = vmatprep.subr.bf16.mxu0 0
        %643 = vmatpush1.bf16.msra.mxu0 0
        %644 = vmatprep.subr.bf16.mxu0 0
        %645 = vmatpush1.bf16.msra.mxu0 0
        %646 = vmatprep.mubr.bf16.mxu0 0
        %647 = vmatmul.mubr.bf16.gmra.mrb[0].mxu0 %v432
        %v648 = vpop.f32.mrb[0].mxu0
        %v649 = vadd.f32 %v474, %v648
        %v650 = vpop.f32.mrb[0].mxu0
        %v651 = vadd.f32 %v478, %v650
        %v652 = vpop.f32.mrb[0].mxu0
        %v653 = vadd.f32 %v474, %v652
        %v654 = vpop.f32.mrb[0].mxu0
        %v655 = vadd.f32 %v478, %v654
        %656 = vmatprep.mubr.bf16.mxu0 0
        %657 = vmatmul.mubr.bf16.gmra.mrb[0].mxu0 %v433
        %v658 = vpop.f32.mrb[0].mxu0
        %v659 = vadd.f32 %v474, %v658
        %v660 = vpop.f32.mrb[0].mxu0
        %v661 = vadd.f32 %v478, %v660
        %v662 = vpop.f32.mrb[0].mxu0
        %v663 = vadd.f32 %v474, %v662
        %v664 = vpop.f32.mrb[0].mxu0
        %v665 = vadd.f32 %v478, %v664
        %666 = vmatprep.mubr.bf16.mxu0 0
        %667 = vmatmul.mubr.bf16.gmra.mrb[0].mxu0 %v434
        %v668 = vpop.f32.mrb[0].mxu0
        %v669 = vadd.f32 %v474, %v668
        %v670 = vpop.f32.mrb[0].mxu0
        %v671 = vadd.f32 %v478, %v670
        %v672 = vpop.f32.mrb[0].mxu0
        %v673 = vadd.f32 %v474, %v672
        %v674 = vpop.f32.mrb[0].mxu0
        %v675 = vadd.f32 %v478, %v674
        %676 = vmatprep.mubr.bf16.mxu0 0
        %677 = vmatmul.mubr.bf16.gmra.mrb[0].mxu0 %v435
        %v678 = vpop.f32.mrb[0].mxu0
        %v679 = vadd.f32 %v474, %v678
        %v680 = vpop.f32.mrb[0].mxu0
        %v681 = vadd.f32 %v478, %v680
        %v682 = vpop.f32.mrb[0].mxu0
        %v683 = vadd.f32 %v474, %v682
        %v684 = vpop.f32.mrb[0].mxu0
        %v685 = vadd.f32 %v478, %v684
        %686 = vmatprep.mubr.bf16.mxu0 0
        %687 = vmatmul.mubr.bf16.gmra.mrb[0].mxu0 %v436
        %v688 = vpop.f32.mrb[0].mxu0
        %v689 = vadd.f32 %v474, %v688
        %v690 = vpop.f32.mrb[0].mxu0
        %v691 = vadd.f32 %v478, %v690
        %v692 = vpop.f32.mrb[0].mxu0
        %v693 = vadd.f32 %v474, %v692
        %v694 = vpop.f32.mrb[0].mxu0
        %v695 = vadd.f32 %v478, %v694
        %696 = vdwg.mxu0
        %697 = vmatprep.subr.bf16.mxu0 0
        %698 = vmatpush1.bf16.msra.mxu0 %v568
        %699 = vmatprep.subr.bf16.mxu0 0
        %700 = vmatpush1.bf16.msra.mxu0 %v571
        %701 = vmatprep.subr.bf16.mxu0 0
        %702 = vmatpush1.bf16.msra.mxu0 %v574
        %703 = vmatprep.subr.bf16.mxu0 0
        %704 = vmatpush1.bf16.msra.mxu0 %v577
        %705 = vmatprep.subr.bf16.mxu0 0
        %706 = vmatpush1.bf16.msra.mxu0 %v580
        %707 = vmatprep.subr.bf16.mxu0 0
        %708 = vmatpush1.bf16.msra.mxu0 %v583
        %709 = vmatprep.subr.bf16.mxu0 0
        %710 = vmatpush1.bf16.msra.mxu0 %v586
        %711 = vmatprep.subr.bf16.mxu0 0
        %712 = vmatpush1.bf16.msra.mxu0 %v589
        %713 = vmatprep.subr.bf16.mxu0 0
        %714 = vmatpush1.bf16.msra.mxu0 0
        %715 = vmatprep.subr.bf16.mxu0 0
        %716 = vmatpush1.bf16.msra.mxu0 0
        %717 = vmatprep.subr.bf16.mxu0 0
        %718 = vmatpush1.bf16.msra.mxu0 0
        %719 = vmatprep.subr.bf16.mxu0 0
        %720 = vmatpush1.bf16.msra.mxu0 0
        %721 = vmatprep.subr.bf16.mxu0 0
        %722 = vmatpush1.bf16.msra.mxu0 0
        %723 = vmatprep.subr.bf16.mxu0 0
        %724 = vmatpush1.bf16.msra.mxu0 0
        %725 = vmatprep.subr.bf16.mxu0 0
        %726 = vmatpush1.bf16.msra.mxu0 0
        %727 = vmatprep.subr.bf16.mxu0 0
        %728 = vmatpush1.bf16.msra.mxu0 0
        %729 = vmatprep.mubr.bf16.mxu0 0
        %730 = vmatmul.mubr.bf16.gmra.mrb[0].mxu0 %v432
        %v731 = vpop.f32.mrb[0].mxu0
        %v732 = vadd.f32 %v482, %v731
        %v733 = vpop.f32.mrb[0].mxu0
        %v734 = vpop.f32.mrb[0].mxu0
        %v735 = vadd.f32 %v482, %v734
        %v736 = vpop.f32.mrb[0].mxu0
        %737 = vmatprep.mubr.bf16.mxu0 0
        %738 = vmatmul.mubr.bf16.gmra.mrb[0].mxu0 %v433
        %v739 = vpop.f32.mrb[0].mxu0
        %v740 = vadd.f32 %v482, %v739
        %v741 = vpop.f32.mrb[0].mxu0
        %v742 = vpop.f32.mrb[0].mxu0
        %v743 = vadd.f32 %v482, %v742
        %v744 = vpop.f32.mrb[0].mxu0
        %745 = vmatprep.mubr.bf16.mxu0 0
        %746 = vmatmul.mubr.bf16.gmra.mrb[0].mxu0 %v434
        %v747 = vpop.f32.mrb[0].mxu0
        %v748 = vadd.f32 %v482, %v747
        %v749 = vpop.f32.mrb[0].mxu0
        %v750 = vpop.f32.mrb[0].mxu0
        %v751 = vadd.f32 %v482, %v750
        %v752 = vpop.f32.mrb[0].mxu0
        %753 = vmatprep.mubr.bf16.mxu0 0
        %754 = vmatmul.mubr.bf16.gmra.mrb[0].mxu0 %v435
        %v755 = vpop.f32.mrb[0].mxu0
        %v756 = vadd.f32 %v482, %v755
        %v757 = vpop.f32.mrb[0].mxu0
        %v758 = vpop.f32.mrb[0].mxu0
        %v759 = vadd.f32 %v482, %v758
        %v760 = vpop.f32.mrb[0].mxu0
        %761 = vmatprep.mubr.bf16.mxu0 0
        %762 = vmatmul.mubr.bf16.gmra.mrb[0].mxu0 %v436
        %v763 = vpop.f32.mrb[0].mxu0
        %v764 = vadd.f32 %v482, %v763
        %v765 = vpop.f32.mrb[0].mxu0
        %v766 = vpop.f32.mrb[0].mxu0
        %v767 = vadd.f32 %v482, %v766
        %v768 = vpop.f32.mrb[0].mxu0
        %769 = vdwg.mxu0
        %770 = vst [vmem:[#allocation3] sm:$0xff] %v649
        %771 = vst [vmem:[#allocation3 + $0x8] sm:$0xff] %v651
        %772 = vst [vmem:[#allocation3 + $0x10] sm:$0xff] %v732
        %773 = vst [vmem:[#allocation3 + $0x18] sm:$0xff] %v653
        %774 = vst [vmem:[#allocation3 + $0x20] sm:$0xff] %v655
        %775 = vst [vmem:[#allocation3 + $0x28] sm:$0xff] %v735
        %776 = vst [vmem:[#allocation3 + $0x30] sm:$0xff] %v659
        %777 = vst [vmem:[#allocation3 + $0x38] sm:$0xff] %v661
        %778 = vst [vmem:[#allocation3 + $0x40] sm:$0xff] %v740
        %779 = vst [vmem:[#allocation3 + $0x48] sm:$0xff] %v663
        %780 = vst [vmem:[#allocation3 + $0x50] sm:$0xff] %v665
        %781 = vst [vmem:[#allocation3 + $0x58] sm:$0xff] %v743
        %782 = vst [vmem:[#allocation3 + $0x60] sm:$0xff] %v669
        %783 = vst [vmem:[#allocation3 + $0x68] sm:$0xff] %v671
        %784 = vst [vmem:[#allocation3 + $0x70] sm:$0xff] %v748
        %785 = vst [vmem:[#allocation3 + $0x78] sm:$0xff] %v673
        %786 = vst [vmem:[#allocation3 + $0x80] sm:$0xff] %v675
        %787 = vst [vmem:[#allocation3 + $0x88] sm:$0xff] %v751
        %788 = vst [vmem:[#allocation3 + $0x90] sm:$0xff] %v679
        %789 = vst [vmem:[#allocation3 + $0x98] sm:$0xff] %v681
        %790 = vst [vmem:[#allocation3 + $0xa0] sm:$0xff] %v756
        %791 = vst [vmem:[#allocation3 + $0xa8] sm:$0xff] %v683
        %792 = vst [vmem:[#allocation3 + $0xb0] sm:$0xff] %v685
        %793 = vst [vmem:[#allocation3 + $0xb8] sm:$0xff] %v759
        %794 = vst [vmem:[#allocation3 + $0xc0] sm:$0xff] %v689
        %795 = vst [vmem:[#allocation3 + $0xc8] sm:$0xff] %v691
        %796 = vst [vmem:[#allocation3 + $0xd0] sm:$0xff] %v764
        %797 = vst [vmem:[#allocation3 + $0xd8] sm:$0xff] %v693
        %798 = vst [vmem:[#allocation3 + $0xe0] sm:$0xff] %v695
        %799 = vst [vmem:[#allocation3 + $0xe8] sm:$0xff] %v767
        %v800 = vld [vmem:[%s2] sm:$0xff]
        %v801 = vld [vmem:[%s2 + $0x8] sm:$0xf]
        %v802 = vld [vmem:[%s2 + $0xc] sm:$0xff]
        %v803 = vld [vmem:[%s2 + $0x14] sm:$0xf]
        %v804 = vld [vmem:[%s2 + $0x18] sm:$0xff]
        %v805 = vld [vmem:[%s2 + $0x20] sm:$0xf]
        %v806 = vld [vmem:[%s2 + $0x24] sm:$0xff]
        %v807 = vld [vmem:[%s2 + $0x2c] sm:$0xf]
        %v808 = vld [vmem:[%s2 + $0x30] sm:$0xff]
        %v809 = vld [vmem:[%s2 + $0x38] sm:$0xf]
        %v810 = vld [vmem:[%s2 + $0x3c] sm:$0xff]
        %v811 = vld [vmem:[%s2 + $0x44] sm:$0xf]
        %v812 = vld [vmem:[%s2 + $0x48] sm:$0xff]
        %v813 = vld [vmem:[%s2 + $0x50] sm:$0xf]
        %v814 = vld [vmem:[%s2 + $0x54] sm:$0xff]
        %v815 = vld [vmem:[%s2 + $0x5c] sm:$0xf]
        %v816 = vld [vmem:[%s2 + $0x60] sm:$0xff]
        %v817 = vld [vmem:[%s2 + $0x68] sm:$0xf]
        %v818 = vld [vmem:[%s2 + $0x6c] sm:$0xff]
        %v819 = vld [vmem:[%s2 + $0x74] sm:$0xf]
        %v820 = vld [vmem:[%s2 + $0x78] sm:$0xff]
        %v821 = vld [vmem:[%s2 + $0x80] sm:$0xf]
        %v822 = vld [vmem:[%s2 + $0x84] sm:$0xff]
        %v823 = vld [vmem:[%s2 + $0x8c] sm:$0xf]
        %v824 = vld [vmem:[%s2 + $0x90] sm:$0xff]
        %v825 = vld [vmem:[%s2 + $0x98] sm:$0xf]
        %v826 = vld [vmem:[%s2 + $0x9c] sm:$0xff]
        %v827 = vld [vmem:[%s2 + $0xa4] sm:$0xf]
        %v828 = vld [vmem:[%s2 + $0xa8] sm:$0xff]
        %v829 = vld [vmem:[%s2 + $0xb0] sm:$0xf]
        %v830 = vld [vmem:[%s2 + $0xb4] sm:$0xff]
        %v831 = vld [vmem:[%s2 + $0xbc] sm:$0xf]
        %v832 = vld [vmem:[%s4] sm:$0x1]
        %v834 = vlaneseq
        %v835 = vshrl.u32 %v834, 7
        %v836 = vsub.s32 0, %v835
        %v837 = vrot.slane %v832, %v836
        loop: start=0, step=1, limit=10
        $region73: #{seq2seq_forward.1} parent=71 // loop_pre_header
          _
        $region74: #{seq2seq_forward.1} parent=71 // loop_header
          %s840 = sphi 0, %s844
          %p841 = scmp.ge.s32.totalorder %s840, 10
          %v845 = vphi 0.0, %v1082
        $region75: #{seq2seq_forward.1} parent=71 // loop_header_branch
          %843 = sbr.rel (%p841) target = $region79
        $region76: #{seq2seq_forward.1} parent=71 // loop_body
          %v846 = vpack.c.bf16 %v845, %v845
          %v879 = vunpack.c.l.b16 %v800
          %v880 = vunpack.c.h.b16 %v800
          %v881 = vunpack.c.l.b16 %v801
          %v882 = vunpack.c.l.b16 %v802
          %v883 = vunpack.c.h.b16 %v802
          %v884 = vunpack.c.l.b16 %v803
          %v885 = vunpack.c.l.b16 %v804
          %v886 = vunpack.c.h.b16 %v804
          %v887 = vunpack.c.l.b16 %v805
          %v888 = vunpack.c.l.b16 %v806
          %v889 = vunpack.c.h.b16 %v806
          %v890 = vunpack.c.l.b16 %v807
          %v891 = vunpack.c.l.b16 %v808
          %v892 = vunpack.c.h.b16 %v808
          %v893 = vunpack.c.l.b16 %v809
          %v894 = vunpack.c.l.b16 %v810
          %v895 = vunpack.c.h.b16 %v810
          %v896 = vunpack.c.l.b16 %v811
          %v897 = vunpack.c.l.b16 %v812
          %v898 = vunpack.c.h.b16 %v812
          %v899 = vunpack.c.l.b16 %v813
          %v900 = vunpack.c.l.b16 %v814
          %v901 = vunpack.c.h.b16 %v814
          %v902 = vunpack.c.l.b16 %v815
          %v903 = vunpack.c.l.b16 %v816
          %v904 = vunpack.c.h.b16 %v816
          %v905 = vunpack.c.l.b16 %v817
          %v906 = vunpack.c.l.b16 %v818
          %v907 = vunpack.c.h.b16 %v818
          %v908 = vunpack.c.l.b16 %v819
          %v909 = vunpack.c.l.b16 %v820
          %v910 = vunpack.c.h.b16 %v820
          %v911 = vunpack.c.l.b16 %v821
          %v912 = vunpack.c.l.b16 %v822
          %v913 = vunpack.c.h.b16 %v822
          %v914 = vunpack.c.l.b16 %v823
          %v915 = vunpack.c.l.b16 %v824
          %v916 = vunpack.c.h.b16 %v824
          %v917 = vunpack.c.l.b16 %v825
          %v918 = vunpack.c.l.b16 %v826
          %v919 = vunpack.c.h.b16 %v826
          %v920 = vunpack.c.l.b16 %v827
          %v921 = vunpack.c.l.b16 %v828
          %v922 = vunpack.c.h.b16 %v828
          %v923 = vunpack.c.l.b16 %v829
          %v924 = vunpack.c.l.b16 %v830
          %v925 = vunpack.c.h.b16 %v830
          %v926 = vunpack.c.l.b16 %v831
          %v927 = vpack.c.b16 %v882, %v879
          %v928 = vpack.c.b16 %v883, %v880
          %v929 = vpack.c.b16 %v884, %v881
          %v930 = vpack.c.b16 %v888, %v885
          %v931 = vpack.c.b16 %v889, %v886
          %v932 = vpack.c.b16 %v890, %v887
          %v933 = vpack.c.b16 %v894, %v891
          %v934 = vpack.c.b16 %v895, %v892
          %v935 = vpack.c.b16 %v896, %v893
          %v936 = vpack.c.b16 %v900, %v897
          %v937 = vpack.c.b16 %v901, %v898
          %v938 = vpack.c.b16 %v902, %v899
          %v939 = vpack.c.b16 %v906, %v903
          %v940 = vpack.c.b16 %v907, %v904
          %v941 = vpack.c.b16 %v908, %v905
          %v942 = vpack.c.b16 %v912, %v909
          %v943 = vpack.c.b16 %v913, %v910
          %v944 = vpack.c.b16 %v914, %v911
          %v945 = vpack.c.b16 %v918, %v915
          %v946 = vpack.c.b16 %v919, %v916
          %v947 = vpack.c.b16 %v920, %v917
          %v948 = vpack.c.b16 %v924, %v921
          %v949 = vpack.c.b16 %v925, %v922
          %v950 = vpack.c.b16 %v926, %v923
          %975 = vmatprep.subr.bf16.mxu0 %v928
          %976 = vmatpush1.bf16.msra.mxu0 %v927
          %977 = vmatprep.subr.bf16.mxu0 %v931
          %978 = vmatpush1.bf16.msra.mxu0 %v930
          %979 = vmatprep.subr.bf16.mxu0 %v934
          %980 = vmatpush1.bf16.msra.mxu0 %v933
          %981 = vmatprep.subr.bf16.mxu0 %v937
          %982 = vmatpush1.bf16.msra.mxu0 %v936
          %983 = vmatprep.subr.bf16.mxu0 %v940
          %984 = vmatpush1.bf16.msra.mxu0 %v939
          %985 = vmatprep.subr.bf16.mxu0 %v943
          %986 = vmatpush1.bf16.msra.mxu0 %v942
          %987 = vmatprep.subr.bf16.mxu0 %v946
          %988 = vmatpush1.bf16.msra.mxu0 %v945
          %989 = vmatprep.subr.bf16.mxu0 %v949
          %990 = vmatpush1.bf16.msra.mxu0 %v948
          %991 = vmatprep.subr.bf16.mxu0 0
          %992 = vmatpush1.bf16.msra.mxu0 0
          %993 = vmatprep.subr.bf16.mxu0 0
          %994 = vmatpush1.bf16.msra.mxu0 0
          %995 = vmatprep.subr.bf16.mxu0 0
          %996 = vmatpush1.bf16.msra.mxu0 0
          %997 = vmatprep.subr.bf16.mxu0 0
          %998 = vmatpush1.bf16.msra.mxu0 0
          %999 = vmatprep.subr.bf16.mxu0 0
          %1000 = vmatpush1.bf16.msra.mxu0 0
          %1001 = vmatprep.subr.bf16.mxu0 0
          %1002 = vmatpush1.bf16.msra.mxu0 0
          %1003 = vmatprep.subr.bf16.mxu0 0
          %1004 = vmatpush1.bf16.msra.mxu0 0
          %1005 = vmatprep.subr.bf16.mxu0 0
          %1006 = vmatpush1.bf16.msra.mxu0 0
          %1007 = vmatprep.mubr.bf16.mxu0 0
          %1008 = vmatmul.mubr.bf16.gmra.mrb[0].mxu0 %v846
          %v1009 = vpop.f32.mrb[0].mxu0
          %v1010 = vadd.f32 0.0, %v1009
          %v1011 = vpop.f32.mrb[0].mxu0
          %v1012 = vadd.f32 0.0, %v1011
          %v1013 = vpop.f32.mrb[0].mxu0
          %v1014 = vpop.f32.mrb[0].mxu0
          %1015 = vdwg.mxu0
          %1016 = vmatprep.subr.bf16.mxu0 0
          %1017 = vmatpush1.bf16.msra.mxu0 %v929
          %1018 = vmatprep.subr.bf16.mxu0 0
          %1019 = vmatpush1.bf16.msra.mxu0 %v932
          %1020 = vmatprep.subr.bf16.mxu0 0
          %1021 = vmatpush1.bf16.msra.mxu0 %v935
          %1022 = vmatprep.subr.bf16.mxu0 0
          %1023 = vmatpush1.bf16.msra.mxu0 %v938
          %1024 = vmatprep.subr.bf16.mxu0 0
          %1025 = vmatpush1.bf16.msra.mxu0 %v941
          %1026 = vmatprep.subr.bf16.mxu0 0
          %1027 = vmatpush1.bf16.msra.mxu0 %v944
          %1028 = vmatprep.subr.bf16.mxu0 0
          %1029 = vmatpush1.bf16.msra.mxu0 %v947
          %1030 = vmatprep.subr.bf16.mxu0 0
          %1031 = vmatpush1.bf16.msra.mxu0 %v950
          %1032 = vmatprep.subr.bf16.mxu0 0
          %1033 = vmatpush1.bf16.msra.mxu0 0
          %1034 = vmatprep.subr.bf16.mxu0 0
          %1035 = vmatpush1.bf16.msra.mxu0 0
          %1036 = vmatprep.subr.bf16.mxu0 0
          %1037 = vmatpush1.bf16.msra.mxu0 0
          %1038 = vmatprep.subr.bf16.mxu0 0
          %1039 = vmatpush1.bf16.msra.mxu0 0
          %1040 = vmatprep.subr.bf16.mxu0 0
          %1041 = vmatpush1.bf16.msra.mxu0 0
          %1042 = vmatprep.subr.bf16.mxu0 0
          %1043 = vmatpush1.bf16.msra.mxu0 0
          %1044 = vmatprep.subr.bf16.mxu0 0
          %1045 = vmatpush1.bf16.msra.mxu0 0
          %1046 = vmatprep.subr.bf16.mxu0 0
          %1047 = vmatpush1.bf16.msra.mxu0 0
          %1048 = vmatprep.mubr.bf16.mxu0 0
          %1049 = vmatmul.mubr.bf16.gmra.mrb[0].mxu0 %v846
          %v1050 = vpop.f32.mrb[0].mxu0
          %v1051 = vadd.f32 0.0, %v1050
          %v1052 = vpop.f32.mrb[0].mxu0
          %v1053 = vpop.f32.mrb[0].mxu0
          %v1054 = vpop.f32.mrb[0].mxu0
          %1055 = vdwg.mxu0
          %s1056 = smul.u32 %s840, 3
          %s1057 = smul.addr %s1056, 8
          %s1058 = scalar_lea.vmem [#allocation3], %s1057
          %v1059 = vld [vmem:[%s1058] sm:$0xff]
          %v1060 = vld [vmem:[%s1058 + $0x8] sm:$0xff]
          %v1061 = vld [vmem:[%s1058 + $0x10] sm:$0xff]
          %v1062 = vadd.f32 %v1059, %v1010
          %v1063 = vxor.u32 %v1062, 2147483648
          %v1064 = vmul.f32 %v1063, 1.442695
          %v1065 = vpow.pop %v1064
          %v1066 = vadd.f32 %v1065, 1.0
          %v1067 = vrcp.pop %v1066
          %v1068 = vmul.f32 1.0, %v1067
          %v1069 = vadd.f32 %v1060, %v1012
          %v1070 = vxor.u32 %v1069, 2147483648
          %v1071 = vmul.f32 %v1070, 1.442695
          %v1072 = vpow.pop %v1071
          %v1073 = vadd.f32 %v1072, 1.0
          %v1074 = vrcp.pop %v1073
          %v1075 = vmul.f32 1.0, %v1074
          %v1076 = vadd.f32 %v1051, %v837
          %v1077 = vmul.f32 %v1068, %v1076
          %v1078 = vadd.f32 %v1061, %v1077
          %v1079 = vtanh.pop %v1078
          %v1080 = vsub.f32 %v845, %v1079
          %v1081 = vmul.f32 %v1075, %v1080
          %v1082 = vadd.f32 %v1079, %v1081
          %s1083 = smul.u32 %s840, 8
          %s1084 = scalar_lea.vmem [#allocation2], %s1083
          %1085 = vst [vmem:[%s1084] sm:$0xff] %v1082
        $region77: #{seq2seq_forward.1} parent=71 // loop_footer
          %s844 = sadd.s32 1, %s840
        $region78: #{seq2seq_forward.1} parent=71 // loop_footer_branch
          %839 = sbr.rel target = $region74
        $region79: #{seq2seq_forward.1} parent=71 // loop_exit
          _
        %1086 = vst [vmem:[%s13] sm:$0xff] %v845
        %v1087 = vld [vmem:[#allocation2] sm:$0xff]
        %v1088 = vld [vmem:[#allocation2 + $0x8] sm:$0xff]
        %v1089 = vld [vmem:[#allocation2 + $0x10] sm:$0xff]
        %v1090 = vld [vmem:[#allocation2 + $0x18] sm:$0xff]
        %v1091 = vld [vmem:[#allocation2 + $0x20] sm:$0xff]
        %v1092 = vld [vmem:[#allocation2 + $0x28] sm:$0xff]
        %v1093 = vld [vmem:[#allocation2 + $0x30] sm:$0xff]
        %v1094 = vld [vmem:[#allocation2 + $0x38] sm:$0xff]
        %v1095 = vld [vmem:[#allocation2 + $0x40] sm:$0xff]
        %v1096 = vld [vmem:[#allocation2 + $0x48] sm:$0xff]
        %v1097 = vpack.c.bf16 %v1088, %v1087
        %v1098 = vpack.c.bf16 %v1090, %v1089
        %v1099 = vpack.c.bf16 %v1092, %v1091
        %v1100 = vpack.c.bf16 %v1094, %v1093
        %v1101 = vpack.c.bf16 %v1096, %v1095
        %s1102 = scalar_lea.vmem %s1, 192
        %v1103 = vld [vmem:[%s1102] sm:$0xff]
        %v1104 = vld [vmem:[%s1102 + $0x8] sm:$0xf]
        %v1105 = vld [vmem:[%s1102 + $0xc] sm:$0xff]
        %v1106 = vld [vmem:[%s1102 + $0x14] sm:$0xf]
        %v1107 = vld [vmem:[%s1102 + $0x18] sm:$0xff]
        %v1108 = vld [vmem:[%s1102 + $0x20] sm:$0xf]
        %v1109 = vld [vmem:[%s1102 + $0x24] sm:$0xff]
        %v1110 = vld [vmem:[%s1102 + $0x2c] sm:$0xf]
        %v1111 = vld [vmem:[%s1102 + $0x30] sm:$0xff]
        %v1112 = vld [vmem:[%s1102 + $0x38] sm:$0xf]
        %v1113 = vld [vmem:[%s1102 + $0x3c] sm:$0xff]
        %v1114 = vld [vmem:[%s1102 + $0x44] sm:$0xf]
        %v1115 = vld [vmem:[%s1102 + $0x48] sm:$0xff]
        %v1116 = vld [vmem:[%s1102 + $0x50] sm:$0xf]
        %v1117 = vld [vmem:[%s1102 + $0x54] sm:$0xff]
        %v1118 = vld [vmem:[%s1102 + $0x5c] sm:$0xf]
        %v1119 = vld [vmem:[%s1102 + $0x60] sm:$0xff]
        %v1120 = vld [vmem:[%s1102 + $0x68] sm:$0xf]
        %v1121 = vld [vmem:[%s1102 + $0x6c] sm:$0xff]
        %v1122 = vld [vmem:[%s1102 + $0x74] sm:$0xf]
        %v1123 = vld [vmem:[%s1102 + $0x78] sm:$0xff]
        %v1124 = vld [vmem:[%s1102 + $0x80] sm:$0xf]
        %v1125 = vld [vmem:[%s1102 + $0x84] sm:$0xff]
        %v1126 = vld [vmem:[%s1102 + $0x8c] sm:$0xf]
        %v1127 = vld [vmem:[%s1102 + $0x90] sm:$0xff]
        %v1128 = vld [vmem:[%s1102 + $0x98] sm:$0xf]
        %v1129 = vld [vmem:[%s1102 + $0x9c] sm:$0xff]
        %v1130 = vld [vmem:[%s1102 + $0xa4] sm:$0xf]
        %v1131 = vld [vmem:[%s1102 + $0xa8] sm:$0xff]
        %v1132 = vld [vmem:[%s1102 + $0xb0] sm:$0xf]
        %v1133 = vld [vmem:[%s1102 + $0xb4] sm:$0xff]
        %v1134 = vld [vmem:[%s1102 + $0xbc] sm:$0xf]
        %s1135 = scalar_lea.vmem %s3, 3
        %v1136 = vld [vmem:[%s1135] sm:$0x7]
        %v1138 = vlaneseq
        %v1139 = vshrl.u32 %v1138, 7
        %v1140 = vsub.s32 0, %v1139
        %v1141 = vrot.slane %v1136, %v1140
        %v1142 = vlaneseq
        %v1143 = vshrl.u32 %v1142, 7
        %v1144 = vsub.s32 1, %v1143
        %v1145 = vrot.slane %v1136, %v1144
        %v1146 = vlaneseq
        %v1147 = vshrl.u32 %v1146, 7
        %v1148 = vsub.s32 2, %v1147
        %v1149 = vrot.slane %v1136, %v1148
        %v1185 = vunpack.c.l.b16 %v1103
        %v1186 = vunpack.c.h.b16 %v1103
        %v1187 = vunpack.c.l.b16 %v1104
        %v1188 = vunpack.c.l.b16 %v1105
        %v1189 = vunpack.c.h.b16 %v1105
        %v1190 = vunpack.c.l.b16 %v1106
        %v1191 = vunpack.c.l.b16 %v1107
        %v1192 = vunpack.c.h.b16 %v1107
        %v1193 = vunpack.c.l.b16 %v1108
        %v1194 = vunpack.c.l.b16 %v1109
        %v1195 = vunpack.c.h.b16 %v1109
        %v1196 = vunpack.c.l.b16 %v1110
        %v1197 = vunpack.c.l.b16 %v1111
        %v1198 = vunpack.c.h.b16 %v1111
        %v1199 = vunpack.c.l.b16 %v1112
        %v1200 = vunpack.c.l.b16 %v1113
        %v1201 = vunpack.c.h.b16 %v1113
        %v1202 = vunpack.c.l.b16 %v1114
        %v1203 = vunpack.c.l.b16 %v1115
        %v1204 = vunpack.c.h.b16 %v1115
        %v1205 = vunpack.c.l.b16 %v1116
        %v1206 = vunpack.c.l.b16 %v1117
        %v1207 = vunpack.c.h.b16 %v1117
        %v1208 = vunpack.c.l.b16 %v1118
        %v1209 = vunpack.c.l.b16 %v1119
        %v1210 = vunpack.c.h.b16 %v1119
        %v1211 = vunpack.c.l.b16 %v1120
        %v1212 = vunpack.c.l.b16 %v1121
        %v1213 = vunpack.c.h.b16 %v1121
        %v1214 = vunpack.c.l.b16 %v1122
        %v1215 = vunpack.c.l.b16 %v1123
        %v1216 = vunpack.c.h.b16 %v1123
        %v1217 = vunpack.c.l.b16 %v1124
        %v1218 = vunpack.c.l.b16 %v1125
        %v1219 = vunpack.c.h.b16 %v1125
        %v1220 = vunpack.c.l.b16 %v1126
        %v1221 = vunpack.c.l.b16 %v1127
        %v1222 = vunpack.c.h.b16 %v1127
        %v1223 = vunpack.c.l.b16 %v1128
        %v1224 = vunpack.c.l.b16 %v1129
        %v1225 = vunpack.c.h.b16 %v1129
        %v1226 = vunpack.c.l.b16 %v1130
        %v1227 = vunpack.c.l.b16 %v1131
        %v1228 = vunpack.c.h.b16 %v1131
        %v1229 = vunpack.c.l.b16 %v1132
        %v1230 = vunpack.c.l.b16 %v1133
        %v1231 = vunpack.c.h.b16 %v1133
        %v1232 = vunpack.c.l.b16 %v1134
        %v1233 = vpack.c.b16 %v1188, %v1185
        %v1234 = vpack.c.b16 %v1189, %v1186
        %v1235 = vpack.c.b16 %v1190, %v1187
        %v1236 = vpack.c.b16 %v1194, %v1191
        %v1237 = vpack.c.b16 %v1195, %v1192
        %v1238 = vpack.c.b16 %v1196, %v1193
        %v1239 = vpack.c.b16 %v1200, %v1197
        %v1240 = vpack.c.b16 %v1201, %v1198
        %v1241 = vpack.c.b16 %v1202, %v1199
        %v1242 = vpack.c.b16 %v1206, %v1203
        %v1243 = vpack.c.b16 %v1207, %v1204
        %v1244 = vpack.c.b16 %v1208, %v1205
        %v1245 = vpack.c.b16 %v1212, %v1209
        %v1246 = vpack.c.b16 %v1213, %v1210
        %v1247 = vpack.c.b16 %v1214, %v1211
        %v1248 = vpack.c.b16 %v1218, %v1215
        %v1249 = vpack.c.b16 %v1219, %v1216
        %v1250 = vpack.c.b16 %v1220, %v1217
        %v1251 = vpack.c.b16 %v1224, %v1221
        %v1252 = vpack.c.b16 %v1225, %v1222
        %v1253 = vpack.c.b16 %v1226, %v1223
        %v1254 = vpack.c.b16 %v1230, %v1227
        %v1255 = vpack.c.b16 %v1231, %v1228
        %v1256 = vpack.c.b16 %v1232, %v1229
        %1281 = vmatprep.subr.bf16.mxu0 %v1234
        %1282 = vmatpush1.bf16.msra.mxu0 %v1233
        %1283 = vmatprep.subr.bf16.mxu0 %v1237
        %1284 = vmatpush1.bf16.msra.mxu0 %v1236
        %1285 = vmatprep.subr.bf16.mxu0 %v1240
        %1286 = vmatpush1.bf16.msra.mxu0 %v1239
        %1287 = vmatprep.subr.bf16.mxu0 %v1243
        %1288 = vmatpush1.bf16.msra.mxu0 %v1242
        %1289 = vmatprep.subr.bf16.mxu0 %v1246
        %1290 = vmatpush1.bf16.msra.mxu0 %v1245
        %1291 = vmatprep.subr.bf16.mxu0 %v1249
        %1292 = vmatpush1.bf16.msra.mxu0 %v1248
        %1293 = vmatprep.subr.bf16.mxu0 %v1252
        %1294 = vmatpush1.bf16.msra.mxu0 %v1251
        %1295 = vmatprep.subr.bf16.mxu0 %v1255
        %1296 = vmatpush1.bf16.msra.mxu0 %v1254
        %1297 = vmatprep.subr.bf16.mxu0 0
        %1298 = vmatpush1.bf16.msra.mxu0 0
        %1299 = vmatprep.subr.bf16.mxu0 0
        %1300 = vmatpush1.bf16.msra.mxu0 0
        %1301 = vmatprep.subr.bf16.mxu0 0
        %1302 = vmatpush1.bf16.msra.mxu0 0
        %1303 = vmatprep.subr.bf16.mxu0 0
        %1304 = vmatpush1.bf16.msra.mxu0 0
        %1305 = vmatprep.subr.bf16.mxu0 0
        %1306 = vmatpush1.bf16.msra.mxu0 0
        %1307 = vmatprep.subr.bf16.mxu0 0
        %1308 = vmatpush1.bf16.msra.mxu0 0
        %1309 = vmatprep.subr.bf16.mxu0 0
        %1310 = vmatpush1.bf16.msra.mxu0 0
        %1311 = vmatprep.subr.bf16.mxu0 0
        %1312 = vmatpush1.bf16.msra.mxu0 0
        %1313 = vmatprep.mubr.bf16.mxu0 0
        %1314 = vmatmul.mubr.bf16.gmra.mrb[0].mxu0 %v1097
        %v1315 = vpop.f32.mrb[0].mxu0
        %v1316 = vadd.f32 %v1141, %v1315
        %v1317 = vpop.f32.mrb[0].mxu0
        %v1318 = vadd.f32 %v1145, %v1317
        %v1319 = vpop.f32.mrb[0].mxu0
        %v1320 = vadd.f32 %v1141, %v1319
        %v1321 = vpop.f32.mrb[0].mxu0
        %v1322 = vadd.f32 %v1145, %v1321
        %1323 = vmatprep.mubr.bf16.mxu0 0
        %1324 = vmatmul.mubr.bf16.gmra.mrb[0].mxu0 %v1098
        %v1325 = vpop.f32.mrb[0].mxu0
        %v1326 = vadd.f32 %v1141, %v1325
        %v1327 = vpop.f32.mrb[0].mxu0
        %v1328 = vadd.f32 %v1145, %v1327
        %v1329 = vpop.f32.mrb[0].mxu0
        %v1330 = vadd.f32 %v1141, %v1329
        %v1331 = vpop.f32.mrb[0].mxu0
        %v1332 = vadd.f32 %v1145, %v1331
        %1333 = vmatprep.mubr.bf16.mxu0 0
        %1334 = vmatmul.mubr.bf16.gmra.mrb[0].mxu0 %v1099
        %v1335 = vpop.f32.mrb[0].mxu0
        %v1336 = vadd.f32 %v1141, %v1335
        %v1337 = vpop.f32.mrb[0].mxu0
        %v1338 = vadd.f32 %v1145, %v1337
        %v1339 = vpop.f32.mrb[0].mxu0
        %v1340 = vadd.f32 %v1141, %v1339
        %v1341 = vpop.f32.mrb[0].mxu0
        %v1342 = vadd.f32 %v1145, %v1341
        %1343 = vmatprep.mubr.bf16.mxu0 0
        %1344 = vmatmul.mubr.bf16.gmra.mrb[0].mxu0 %v1100
        %v1345 = vpop.f32.mrb[0].mxu0
        %v1346 = vadd.f32 %v1141, %v1345
        %v1347 = vpop.f32.mrb[0].mxu0
        %v1348 = vadd.f32 %v1145, %v1347
        %v1349 = vpop.f32.mrb[0].mxu0
        %v1350 = vadd.f32 %v1141, %v1349
        %v1351 = vpop.f32.mrb[0].mxu0
        %v1352 = vadd.f32 %v1145, %v1351
        %1353 = vmatprep.mubr.bf16.mxu0 0
        %1354 = vmatmul.mubr.bf16.gmra.mrb[0].mxu0 %v1101
        %v1355 = vpop.f32.mrb[0].mxu0
        %v1356 = vadd.f32 %v1141, %v1355
        %v1357 = vpop.f32.mrb[0].mxu0
        %v1358 = vadd.f32 %v1145, %v1357
        %v1359 = vpop.f32.mrb[0].mxu0
        %v1360 = vadd.f32 %v1141, %v1359
        %v1361 = vpop.f32.mrb[0].mxu0
        %v1362 = vadd.f32 %v1145, %v1361
        %1363 = vdwg.mxu0
        %1364 = vmatprep.subr.bf16.mxu0 0
        %1365 = vmatpush1.bf16.msra.mxu0 %v1235
        %1366 = vmatprep.subr.bf16.mxu0 0
        %1367 = vmatpush1.bf16.msra.mxu0 %v1238
        %1368 = vmatprep.subr.bf16.mxu0 0
        %1369 = vmatpush1.bf16.msra.mxu0 %v1241
        %1370 = vmatprep.subr.bf16.mxu0 0
        %1371 = vmatpush1.bf16.msra.mxu0 %v1244
        %1372 = vmatprep.subr.bf16.mxu0 0
        %1373 = vmatpush1.bf16.msra.mxu0 %v1247
        %1374 = vmatprep.subr.bf16.mxu0 0
        %1375 = vmatpush1.bf16.msra.mxu0 %v1250
        %1376 = vmatprep.subr.bf16.mxu0 0
        %1377 = vmatpush1.bf16.msra.mxu0 %v1253
        %1378 = vmatprep.subr.bf16.mxu0 0
        %1379 = vmatpush1.bf16.msra.mxu0 %v1256
        %1380 = vmatprep.subr.bf16.mxu0 0
        %1381 = vmatpush1.bf16.msra.mxu0 0
        %1382 = vmatprep.subr.bf16.mxu0 0
        %1383 = vmatpush1.bf16.msra.mxu0 0
        %1384 = vmatprep.subr.bf16.mxu0 0
        %1385 = vmatpush1.bf16.msra.mxu0 0
        %1386 = vmatprep.subr.bf16.mxu0 0
        %1387 = vmatpush1.bf16.msra.mxu0 0
        %1388 = vmatprep.subr.bf16.mxu0 0
        %1389 = vmatpush1.bf16.msra.mxu0 0
        %1390 = vmatprep.subr.bf16.mxu0 0
        %1391 = vmatpush1.bf16.msra.mxu0 0
        %1392 = vmatprep.subr.bf16.mxu0 0
        %1393 = vmatpush1.bf16.msra.mxu0 0
        %1394 = vmatprep.subr.bf16.mxu0 0
        %1395 = vmatpush1.bf16.msra.mxu0 0
        %1396 = vmatprep.mubr.bf16.mxu0 0
        %1397 = vmatmul.mubr.bf16.gmra.mrb[0].mxu0 %v1097
        %v1398 = vpop.f32.mrb[0].mxu0
        %v1399 = vadd.f32 %v1149, %v1398
        %v1400 = vpop.f32.mrb[0].mxu0
        %v1401 = vpop.f32.mrb[0].mxu0
        %v1402 = vadd.f32 %v1149, %v1401
        %v1403 = vpop.f32.mrb[0].mxu0
        %1404 = vmatprep.mubr.bf16.mxu0 0
        %1405 = vmatmul.mubr.bf16.gmra.mrb[0].mxu0 %v1098
        %v1406 = vpop.f32.mrb[0].mxu0
        %v1407 = vadd.f32 %v1149, %v1406
        %v1408 = vpop.f32.mrb[0].mxu0
        %v1409 = vpop.f32.mrb[0].mxu0
        %v1410 = vadd.f32 %v1149, %v1409
        %v1411 = vpop.f32.mrb[0].mxu0
        %1412 = vmatprep.mubr.bf16.mxu0 0
        %1413 = vmatmul.mubr.bf16.gmra.mrb[0].mxu0 %v1099
        %v1414 = vpop.f32.mrb[0].mxu0
        %v1415 = vadd.f32 %v1149, %v1414
        %v1416 = vpop.f32.mrb[0].mxu0
        %v1417 = vpop.f32.mrb[0].mxu0
        %v1418 = vadd.f32 %v1149, %v1417
        %v1419 = vpop.f32.mrb[0].mxu0
        %1420 = vmatprep.mubr.bf16.mxu0 0
        %1421 = vmatmul.mubr.bf16.gmra.mrb[0].mxu0 %v1100
        %v1422 = vpop.f32.mrb[0].mxu0
        %v1423 = vadd.f32 %v1149, %v1422
        %v1424 = vpop.f32.mrb[0].mxu0
        %v1425 = vpop.f32.mrb[0].mxu0
        %v1426 = vadd.f32 %v1149, %v1425
        %v1427 = vpop.f32.mrb[0].mxu0
        %1428 = vmatprep.mubr.bf16.mxu0 0
        %1429 = vmatmul.mubr.bf16.gmra.mrb[0].mxu0 %v1101
        %v1430 = vpop.f32.mrb[0].mxu0
        %v1431 = vadd.f32 %v1149, %v1430
        %v1432 = vpop.f32.mrb[0].mxu0
        %v1433 = vpop.f32.mrb[0].mxu0
        %v1434 = vadd.f32 %v1149, %v1433
        %v1435 = vpop.f32.mrb[0].mxu0
        %1436 = vdwg.mxu0
        %1437 = vst [vmem:[#allocation3] sm:$0xff] %v1316
        %1438 = vst [vmem:[#allocation3 + $0x8] sm:$0xff] %v1318
        %1439 = vst [vmem:[#allocation3 + $0x10] sm:$0xff] %v1399
        %1440 = vst [vmem:[#allocation3 + $0x18] sm:$0xff] %v1320
        %1441 = vst [vmem:[#allocation3 + $0x20] sm:$0xff] %v1322
        %1442 = vst [vmem:[#allocation3 + $0x28] sm:$0xff] %v1402
        %1443 = vst [vmem:[#allocation3 + $0x30] sm:$0xff] %v1326
        %1444 = vst [vmem:[#allocation3 + $0x38] sm:$0xff] %v1328
        %1445 = vst [vmem:[#allocation3 + $0x40] sm:$0xff] %v1407
        %1446 = vst [vmem:[#allocation3 + $0x48] sm:$0xff] %v1330
        %1447 = vst [vmem:[#allocation3 + $0x50] sm:$0xff] %v1332
        %1448 = vst [vmem:[#allocation3 + $0x58] sm:$0xff] %v1410
        %1449 = vst [vmem:[#allocation3 + $0x60] sm:$0xff] %v1336
        %1450 = vst [vmem:[#allocation3 + $0x68] sm:$0xff] %v1338
        %1451 = vst [vmem:[#allocation3 + $0x70] sm:$0xff] %v1415
        %1452 = vst [vmem:[#allocation3 + $0x78] sm:$0xff] %v1340
        %1453 = vst [vmem:[#allocation3 + $0x80] sm:$0xff] %v1342
        %1454 = vst [vmem:[#allocation3 + $0x88] sm:$0xff] %v1418
        %1455 = vst [vmem:[#allocation3 + $0x90] sm:$0xff] %v1346
        %1456 = vst [vmem:[#allocation3 + $0x98] sm:$0xff] %v1348
        %1457 = vst [vmem:[#allocation3 + $0xa0] sm:$0xff] %v1423
        %1458 = vst [vmem:[#allocation3 + $0xa8] sm:$0xff] %v1350
        %1459 = vst [vmem:[#allocation3 + $0xb0] sm:$0xff] %v1352
        %1460 = vst [vmem:[#allocation3 + $0xb8] sm:$0xff] %v1426
        %1461 = vst [vmem:[#allocation3 + $0xc0] sm:$0xff] %v1356
        %1462 = vst [vmem:[#allocation3 + $0xc8] sm:$0xff] %v1358
        %1463 = vst [vmem:[#allocation3 + $0xd0] sm:$0xff] %v1431
        %1464 = vst [vmem:[#allocation3 + $0xd8] sm:$0xff] %v1360
        %1465 = vst [vmem:[#allocation3 + $0xe0] sm:$0xff] %v1362
        %1466 = vst [vmem:[#allocation3 + $0xe8] sm:$0xff] %v1434
        %s1467 = scalar_lea.vmem %s2, 192
        %v1468 = vld [vmem:[%s1467] sm:$0xff]
        %v1469 = vld [vmem:[%s1467 + $0x8] sm:$0xf]
        %v1470 = vld [vmem:[%s1467 + $0xc] sm:$0xff]
        %v1471 = vld [vmem:[%s1467 + $0x14] sm:$0xf]
        %v1472 = vld [vmem:[%s1467 + $0x18] sm:$0xff]
        %v1473 = vld [vmem:[%s1467 + $0x20] sm:$0xf]
        %v1474 = vld [vmem:[%s1467 + $0x24] sm:$0xff]
        %v1475 = vld [vmem:[%s1467 + $0x2c] sm:$0xf]
        %v1476 = vld [vmem:[%s1467 + $0x30] sm:$0xff]
        %v1477 = vld [vmem:[%s1467 + $0x38] sm:$0xf]
        %v1478 = vld [vmem:[%s1467 + $0x3c] sm:$0xff]
        %v1479 = vld [vmem:[%s1467 + $0x44] sm:$0xf]
        %v1480 = vld [vmem:[%s1467 + $0x48] sm:$0xff]
        %v1481 = vld [vmem:[%s1467 + $0x50] sm:$0xf]
        %v1482 = vld [vmem:[%s1467 + $0x54] sm:$0xff]
        %v1483 = vld [vmem:[%s1467 + $0x5c] sm:$0xf]
        %v1484 = vld [vmem:[%s1467 + $0x60] sm:$0xff]
        %v1485 = vld [vmem:[%s1467 + $0x68] sm:$0xf]
        %v1486 = vld [vmem:[%s1467 + $0x6c] sm:$0xff]
        %v1487 = vld [vmem:[%s1467 + $0x74] sm:$0xf]
        %v1488 = vld [vmem:[%s1467 + $0x78] sm:$0xff]
        %v1489 = vld [vmem:[%s1467 + $0x80] sm:$0xf]
        %v1490 = vld [vmem:[%s1467 + $0x84] sm:$0xff]
        %v1491 = vld [vmem:[%s1467 + $0x8c] sm:$0xf]
        %v1492 = vld [vmem:[%s1467 + $0x90] sm:$0xff]
        %v1493 = vld [vmem:[%s1467 + $0x98] sm:$0xf]
        %v1494 = vld [vmem:[%s1467 + $0x9c] sm:$0xff]
        %v1495 = vld [vmem:[%s1467 + $0xa4] sm:$0xf]
        %v1496 = vld [vmem:[%s1467 + $0xa8] sm:$0xff]
        %v1497 = vld [vmem:[%s1467 + $0xb0] sm:$0xf]
        %v1498 = vld [vmem:[%s1467 + $0xb4] sm:$0xff]
        %v1499 = vld [vmem:[%s1467 + $0xbc] sm:$0xf]
        %s1500 = scalar_lea.vmem %s4, 1
        %v1501 = vld [vmem:[%s1500] sm:$0x1]
        %v1503 = vlaneseq
        %v1504 = vshrl.u32 %v1503, 7
        %v1505 = vsub.s32 0, %v1504
        %v1506 = vrot.slane %v1501, %v1505
        loop: start=0, step=1, limit=10
        $region80: #{seq2seq_forward.1} parent=71 // loop_pre_header
          _
        $region81: #{seq2seq_forward.1} parent=71 // loop_header
          %s1509 = sphi 0, %s1513
          %p1510 = scmp.ge.s32.totalorder %s1509, 10
          %v1514 = vphi 0.0, %v1751
        $region82: #{seq2seq_forward.1} parent=71 // loop_header_branch
          %1512 = sbr.rel (%p1510) target = $region86
        $region83: #{seq2seq_forward.1} parent=71 // loop_body
          %v1515 = vpack.c.bf16 %v1514, %v1514
          %v1548 = vunpack.c.l.b16 %v1468
          %v1549 = vunpack.c.h.b16 %v1468
          %v1550 = vunpack.c.l.b16 %v1469
          %v1551 = vunpack.c.l.b16 %v1470
          %v1552 = vunpack.c.h.b16 %v1470
          %v1553 = vunpack.c.l.b16 %v1471
          %v1554 = vunpack.c.l.b16 %v1472
          %v1555 = vunpack.c.h.b16 %v1472
          %v1556 = vunpack.c.l.b16 %v1473
          %v1557 = vunpack.c.l.b16 %v1474
          %v1558 = vunpack.c.h.b16 %v1474
          %v1559 = vunpack.c.l.b16 %v1475
          %v1560 = vunpack.c.l.b16 %v1476
          %v1561 = vunpack.c.h.b16 %v1476
          %v1562 = vunpack.c.l.b16 %v1477
          %v1563 = vunpack.c.l.b16 %v1478
          %v1564 = vunpack.c.h.b16 %v1478
          %v1565 = vunpack.c.l.b16 %v1479
          %v1566 = vunpack.c.l.b16 %v1480
          %v1567 = vunpack.c.h.b16 %v1480
          %v1568 = vunpack.c.l.b16 %v1481
          %v1569 = vunpack.c.l.b16 %v1482
          %v1570 = vunpack.c.h.b16 %v1482
          %v1571 = vunpack.c.l.b16 %v1483
          %v1572 = vunpack.c.l.b16 %v1484
          %v1573 = vunpack.c.h.b16 %v1484
          %v1574 = vunpack.c.l.b16 %v1485
          %v1575 = vunpack.c.l.b16 %v1486
          %v1576 = vunpack.c.h.b16 %v1486
          %v1577 = vunpack.c.l.b16 %v1487
          %v1578 = vunpack.c.l.b16 %v1488
          %v1579 = vunpack.c.h.b16 %v1488
          %v1580 = vunpack.c.l.b16 %v1489
          %v1581 = vunpack.c.l.b16 %v1490
          %v1582 = vunpack.c.h.b16 %v1490
          %v1583 = vunpack.c.l.b16 %v1491
          %v1584 = vunpack.c.l.b16 %v1492
          %v1585 = vunpack.c.h.b16 %v1492
          %v1586 = vunpack.c.l.b16 %v1493
          %v1587 = vunpack.c.l.b16 %v1494
          %v1588 = vunpack.c.h.b16 %v1494
          %v1589 = vunpack.c.l.b16 %v1495
          %v1590 = vunpack.c.l.b16 %v1496
          %v1591 = vunpack.c.h.b16 %v1496
          %v1592 = vunpack.c.l.b16 %v1497
          %v1593 = vunpack.c.l.b16 %v1498
          %v1594 = vunpack.c.h.b16 %v1498
          %v1595 = vunpack.c.l.b16 %v1499
          %v1596 = vpack.c.b16 %v1551, %v1548
          %v1597 = vpack.c.b16 %v1552, %v1549
          %v1598 = vpack.c.b16 %v1553, %v1550
          %v1599 = vpack.c.b16 %v1557, %v1554
          %v1600 = vpack.c.b16 %v1558, %v1555
          %v1601 = vpack.c.b16 %v1559, %v1556
          %v1602 = vpack.c.b16 %v1563, %v1560
          %v1603 = vpack.c.b16 %v1564, %v1561
          %v1604 = vpack.c.b16 %v1565, %v1562
          %v1605 = vpack.c.b16 %v1569, %v1566
          %v1606 = vpack.c.b16 %v1570, %v1567
          %v1607 = vpack.c.b16 %v1571, %v1568
          %v1608 = vpack.c.b16 %v1575, %v1572
          %v1609 = vpack.c.b16 %v1576, %v1573
          %v1610 = vpack.c.b16 %v1577, %v1574
          %v1611 = vpack.c.b16 %v1581, %v1578
          %v1612 = vpack.c.b16 %v1582, %v1579
          %v1613 = vpack.c.b16 %v1583, %v1580
          %v1614 = vpack.c.b16 %v1587, %v1584
          %v1615 = vpack.c.b16 %v1588, %v1585
          %v1616 = vpack.c.b16 %v1589, %v1586
          %v1617 = vpack.c.b16 %v1593, %v1590
          %v1618 = vpack.c.b16 %v1594, %v1591
          %v1619 = vpack.c.b16 %v1595, %v1592
          %1644 = vmatprep.subr.bf16.mxu0 %v1597
          %1645 = vmatpush1.bf16.msra.mxu0 %v1596
          %1646 = vmatprep.subr.bf16.mxu0 %v1600
          %1647 = vmatpush1.bf16.msra.mxu0 %v1599
          %1648 = vmatprep.subr.bf16.mxu0 %v1603
          %1649 = vmatpush1.bf16.msra.mxu0 %v1602
          %1650 = vmatprep.subr.bf16.mxu0 %v1606
          %1651 = vmatpush1.bf16.msra.mxu0 %v1605
          %1652 = vmatprep.subr.bf16.mxu0 %v1609
          %1653 = vmatpush1.bf16.msra.mxu0 %v1608
          %1654 = vmatprep.subr.bf16.mxu0 %v1612
          %1655 = vmatpush1.bf16.msra.mxu0 %v1611
          %1656 = vmatprep.subr.bf16.mxu0 %v1615
          %1657 = vmatpush1.bf16.msra.mxu0 %v1614
          %1658 = vmatprep.subr.bf16.mxu0 %v1618
          %1659 = vmatpush1.bf16.msra.mxu0 %v1617
          %1660 = vmatprep.subr.bf16.mxu0 0
          %1661 = vmatpush1.bf16.msra.mxu0 0
          %1662 = vmatprep.subr.bf16.mxu0 0
          %1663 = vmatpush1.bf16.msra.mxu0 0
          %1664 = vmatprep.subr.bf16.mxu0 0
          %1665 = vmatpush1.bf16.msra.mxu0 0
          %1666 = vmatprep.subr.bf16.mxu0 0
          %1667 = vmatpush1.bf16.msra.mxu0 0
          %1668 = vmatprep.subr.bf16.mxu0 0
          %1669 = vmatpush1.bf16.msra.mxu0 0
          %1670 = vmatprep.subr.bf16.mxu0 0
          %1671 = vmatpush1.bf16.msra.mxu0 0
          %1672 = vmatprep.subr.bf16.mxu0 0
          %1673 = vmatpush1.bf16.msra.mxu0 0
          %1674 = vmatprep.subr.bf16.mxu0 0
          %1675 = vmatpush1.bf16.msra.mxu0 0
          %1676 = vmatprep.mubr.bf16.mxu0 0
          %1677 = vmatmul.mubr.bf16.gmra.mrb[0].mxu0 %v1515
          %v1678 = vpop.f32.mrb[0].mxu0
          %v1679 = vadd.f32 0.0, %v1678
          %v1680 = vpop.f32.mrb[0].mxu0
          %v1681 = vadd.f32 0.0, %v1680
          %v1682 = vpop.f32.mrb[0].mxu0
          %v1683 = vpop.f32.mrb[0].mxu0
          %1684 = vdwg.mxu0
          %1685 = vmatprep.subr.bf16.mxu0 0
          %1686 = vmatpush1.bf16.msra.mxu0 %v1598
          %1687 = vmatprep.subr.bf16.mxu0 0
          %1688 = vmatpush1.bf16.msra.mxu0 %v1601
          %1689 = vmatprep.subr.bf16.mxu0 0
          %1690 = vmatpush1.bf16.msra.mxu0 %v1604
          %1691 = vmatprep.subr.bf16.mxu0 0
          %1692 = vmatpush1.bf16.msra.mxu0 %v1607
          %1693 = vmatprep.subr.bf16.mxu0 0
          %1694 = vmatpush1.bf16.msra.mxu0 %v1610
          %1695 = vmatprep.subr.bf16.mxu0 0
          %1696 = vmatpush1.bf16.msra.mxu0 %v1613
          %1697 = vmatprep.subr.bf16.mxu0 0
          %1698 = vmatpush1.bf16.msra.mxu0 %v1616
          %1699 = vmatprep.subr.bf16.mxu0 0
          %1700 = vmatpush1.bf16.msra.mxu0 %v1619
          %1701 = vmatprep.subr.bf16.mxu0 0
          %1702 = vmatpush1.bf16.msra.mxu0 0
          %1703 = vmatprep.subr.bf16.mxu0 0
          %1704 = vmatpush1.bf16.msra.mxu0 0
          %1705 = vmatprep.subr.bf16.mxu0 0
          %1706 = vmatpush1.bf16.msra.mxu0 0
          %1707 = vmatprep.subr.bf16.mxu0 0
          %1708 = vmatpush1.bf16.msra.mxu0 0
          %1709 = vmatprep.subr.bf16.mxu0 0
          %1710 = vmatpush1.bf16.msra.mxu0 0
          %1711 = vmatprep.subr.bf16.mxu0 0
          %1712 = vmatpush1.bf16.msra.mxu0 0
          %1713 = vmatprep.subr.bf16.mxu0 0
          %1714 = vmatpush1.bf16.msra.mxu0 0
          %1715 = vmatprep.subr.bf16.mxu0 0
          %1716 = vmatpush1.bf16.msra.mxu0 0
          %1717 = vmatprep.mubr.bf16.mxu0 0
          %1718 = vmatmul.mubr.bf16.gmra.mrb[0].mxu0 %v1515
          %v1719 = vpop.f32.mrb[0].mxu0
          %v1720 = vadd.f32 0.0, %v1719
          %v1721 = vpop.f32.mrb[0].mxu0
          %v1722 = vpop.f32.mrb[0].mxu0
          %v1723 = vpop.f32.mrb[0].mxu0
          %1724 = vdwg.mxu0
          %s1725 = smul.u32 %s1509, 3
          %s1726 = smul.addr %s1725, 8
          %s1727 = scalar_lea.vmem [#allocation3], %s1726
          %v1728 = vld [vmem:[%s1727] sm:$0xff]
          %v1729 = vld [vmem:[%s1727 + $0x8] sm:$0xff]
          %v1730 = vld [vmem:[%s1727 + $0x10] sm:$0xff]
          %v1731 = vadd.f32 %v1728, %v1679
          %v1732 = vxor.u32 %v1731, 2147483648
          %v1733 = vmul.f32 %v1732, 1.442695
          %v1734 = vpow.pop %v1733
          %v1735 = vadd.f32 %v1734, 1.0
          %v1736 = vrcp.pop %v1735
          %v1737 = vmul.f32 1.0, %v1736
          %v1738 = vadd.f32 %v1729, %v1681
          %v1739 = vxor.u32 %v1738, 2147483648
          %v1740 = vmul.f32 %v1739, 1.442695
          %v1741 = vpow.pop %v1740
          %v1742 = vadd.f32 %v1741, 1.0
          %v1743 = vrcp.pop %v1742
          %v1744 = vmul.f32 1.0, %v1743
          %v1745 = vadd.f32 %v1720, %v1506
          %v1746 = vmul.f32 %v1737, %v1745
          %v1747 = vadd.f32 %v1730, %v1746
          %v1748 = vtanh.pop %v1747
          %v1749 = vsub.f32 %v1514, %v1748
          %v1750 = vmul.f32 %v1744, %v1749
          %v1751 = vadd.f32 %v1748, %v1750
        $region84: #{seq2seq_forward.1} parent=71 // loop_footer
          %s1513 = sadd.s32 1, %s1509
        $region85: #{seq2seq_forward.1} parent=71 // loop_footer_branch
          %1508 = sbr.rel target = $region81
        $region86: #{seq2seq_forward.1} parent=71 // loop_exit
          _
        %s1752 = scalar_lea.vmem %s13, 8
        %1753 = vst [vmem:[%s1752] sm:$0xff] %v1514
        %vm1754 = vcmask 7168
        %1755 = vst.msk [vmem:[#allocation4] sm:$0xff] %vm1754, 0
      $region72: #{seq2seq_forward.1} parent=67 // pred_fallthru
        _
      %v1756 = vlaneseq
      %v1757 = vand.u32 %v1756, 127
      %v1758 = vld [vmem:[#allocation4] sm:$0xff]
      %1759 = vset.pattern.permute.xlu0 0
      %1760 = vperm.xlu0 %1759, %v1758
      %v1761 = vpop.permute.xlu0 %1760
      %vm1762 = vcmp.eq.s32.totalorder %v1757, %v1761
      %v1763 = vsel %vm1762, 1, 0
      %v1764 = vcvt.s32.f32 %v1763
      %v1765 = vpack.c.bf16 %v1764, %v1764
      %v1766 = vld [vmem:[%s9] sm:$0xf]
      %v1767 = vld [vmem:[%s9 + $0x4] sm:$0xf]
      %v1768 = vld [vmem:[%s9 + $0x8] sm:$0xf]
      %v1769 = vld [vmem:[%s9 + $0xc] sm:$0xf]
      %v1770 = vld [vmem:[%s9 + $0x10] sm:$0xf]
      %v1771 = vld [vmem:[%s9 + $0x14] sm:$0xf]
      %v1772 = vld [vmem:[%s9 + $0x18] sm:$0xf]
      %v1773 = vld [vmem:[%s9 + $0x1c] sm:$0xf]
      %v1774 = vld [vmem:[%s9 + $0x20] sm:$0xf]
      %v1775 = vld [vmem:[%s9 + $0x24] sm:$0xf]
      %v1776 = vld [vmem:[%s9 + $0x28] sm:$0xf]
      %v1777 = vld [vmem:[%s9 + $0x2c] sm:$0xf]
      %v1778 = vld [vmem:[%s9 + $0x30] sm:$0xf]
      %v1779 = vld [vmem:[%s9 + $0x34] sm:$0xf]
      %v1780 = vld [vmem:[%s9 + $0x38] sm:$0xf]
      %v1781 = vld [vmem:[%s9 + $0x3c] sm:$0xf]
      %v1798 = vunpack.c.l.b16 %v1766
      %v1799 = vunpack.c.l.b16 %v1767
      %v1800 = vunpack.c.l.b16 %v1768
      %v1801 = vunpack.c.l.b16 %v1769
      %v1802 = vunpack.c.l.b16 %v1770
      %v1803 = vunpack.c.l.b16 %v1771
      %v1804 = vunpack.c.l.b16 %v1772
      %v1805 = vunpack.c.l.b16 %v1773
      %v1806 = vunpack.c.l.b16 %v1774
      %v1807 = vunpack.c.l.b16 %v1775
      %v1808 = vunpack.c.l.b16 %v1776
      %v1809 = vunpack.c.l.b16 %v1777
      %v1810 = vunpack.c.l.b16 %v1778
      %v1811 = vunpack.c.l.b16 %v1779
      %v1812 = vunpack.c.l.b16 %v1780
      %v1813 = vunpack.c.l.b16 %v1781
      %v1814 = vpack.c.b16 %v1799, %v1798
      %v1815 = vpack.c.b16 %v1801, %v1800
      %v1816 = vpack.c.b16 %v1803, %v1802
      %v1817 = vpack.c.b16 %v1805, %v1804
      %v1818 = vpack.c.b16 %v1807, %v1806
      %v1819 = vpack.c.b16 %v1809, %v1808
      %v1820 = vpack.c.b16 %v1811, %v1810
      %v1821 = vpack.c.b16 %v1813, %v1812
      %1830 = vmatprep.subr.bf16.mxu0 0
      %1831 = vmatpush1.bf16.msra.mxu0 %v1814
      %1832 = vmatprep.subr.bf16.mxu0 0
      %1833 = vmatpush1.bf16.msra.mxu0 %v1815
      %1834 = vmatprep.subr.bf16.mxu0 0
      %1835 = vmatpush1.bf16.msra.mxu0 %v1816
      %1836 = vmatprep.subr.bf16.mxu0 0
      %1837 = vmatpush1.bf16.msra.mxu0 %v1817
      %1838 = vmatprep.subr.bf16.mxu0 0
      %1839 = vmatpush1.bf16.msra.mxu0 %v1818
      %1840 = vmatprep.subr.bf16.mxu0 0
      %1841 = vmatpush1.bf16.msra.mxu0 %v1819
      %1842 = vmatprep.subr.bf16.mxu0 0
      %1843 = vmatpush1.bf16.msra.mxu0 %v1820
      %1844 = vmatprep.subr.bf16.mxu0 0
      %1845 = vmatpush1.bf16.msra.mxu0 %v1821
      %1846 = vmatprep.subr.bf16.mxu0 0
      %1847 = vmatpush1.bf16.msra.mxu0 0
      %1848 = vmatprep.subr.bf16.mxu0 0
      %1849 = vmatpush1.bf16.msra.mxu0 0
      %1850 = vmatprep.subr.bf16.mxu0 0
      %1851 = vmatpush1.bf16.msra.mxu0 0
      %1852 = vmatprep.subr.bf16.mxu0 0
      %1853 = vmatpush1.bf16.msra.mxu0 0
      %1854 = vmatprep.subr.bf16.mxu0 0
      %1855 = vmatpush1.bf16.msra.mxu0 0
      %1856 = vmatprep.subr.bf16.mxu0 0
      %1857 = vmatpush1.bf16.msra.mxu0 0
      %1858 = vmatprep.subr.bf16.mxu0 0
      %1859 = vmatpush1.bf16.msra.mxu0 0
      %1860 = vmatprep.subr.bf16.mxu0 0
      %1861 = vmatpush1.bf16.msra.mxu0 0
      %1862 = vmatprep.mubr.bf16.mxu0 0
      %1863 = vmatmul.mubr.bf16.gmra.mrb[0].mxu0 %v1765
      %v1864 = vpop.f32.mrb[0].mxu0
      %v1865 = vadd.f32 0.0, %v1864
      %v1866 = vpop.f32.mrb[0].mxu0
      %v1867 = vpop.f32.mrb[0].mxu0
      %v1868 = vpop.f32.mrb[0].mxu0
      %1869 = vdwg.mxu0
      %v1870 = vld [vmem:[%s13] sm:$0xff]
      %v1871 = vpack.c.bf16 %v1865, %v1865
      %v1872 = vld [vmem:[%s5] sm:$0xff]
      %v1873 = vld [vmem:[%s5 + $0x8] sm:$0xf]
      %v1874 = vld [vmem:[%s5 + $0xc] sm:$0xff]
      %v1875 = vld [vmem:[%s5 + $0x14] sm:$0xf]
      %v1876 = vld [vmem:[%s5 + $0x18] sm:$0xff]
      %v1877 = vld [vmem:[%s5 + $0x20] sm:$0xf]
      %v1878 = vld [vmem:[%s5 + $0x24] sm:$0xff]
      %v1879 = vld [vmem:[%s5 + $0x2c] sm:$0xf]
      %v1880 = vld [vmem:[%s5 + $0x30] sm:$0xff]
      %v1881 = vld [vmem:[%s5 + $0x38] sm:$0xf]
      %v1882 = vld [vmem:[%s5 + $0x3c] sm:$0xff]
      %v1883 = vld [vmem:[%s5 + $0x44] sm:$0xf]
      %v1884 = vld [vmem:[%s5 + $0x48] sm:$0xff]
      %v1885 = vld [vmem:[%s5 + $0x50] sm:$0xf]
      %v1886 = vld [vmem:[%s5 + $0x54] sm:$0xff]
      %v1887 = vld [vmem:[%s5 + $0x5c] sm:$0xf]
      %v1888 = vld [vmem:[%s5 + $0x60] sm:$0xff]
      %v1889 = vld [vmem:[%s5 + $0x68] sm:$0xf]
      %v1890 = vld [vmem:[%s5 + $0x6c] sm:$0xff]
      %v1891 = vld [vmem:[%s5 + $0x74] sm:$0xf]
      %v1892 = vld [vmem:[%s5 + $0x78] sm:$0xff]
      %v1893 = vld [vmem:[%s5 + $0x80] sm:$0xf]
      %v1894 = vld [vmem:[%s5 + $0x84] sm:$0xff]
      %v1895 = vld [vmem:[%s5 + $0x8c] sm:$0xf]
      %v1896 = vld [vmem:[%s5 + $0x90] sm:$0xff]
      %v1897 = vld [vmem:[%s5 + $0x98] sm:$0xf]
      %v1898 = vld [vmem:[%s5 + $0x9c] sm:$0xff]
      %v1899 = vld [vmem:[%s5 + $0xa4] sm:$0xf]
      %v1900 = vld [vmem:[%s5 + $0xa8] sm:$0xff]
      %v1901 = vld [vmem:[%s5 + $0xb0] sm:$0xf]
      %v1902 = vld [vmem:[%s5 + $0xb4] sm:$0xff]
      %v1903 = vld [vmem:[%s5 + $0xbc] sm:$0xf]
      %v1904 = vld [vmem:[%s7] sm:$0x7]
      %v1906 = vlaneseq
      %v1907 = vshrl.u32 %v1906, 7
      %v1908 = vsub.s32 0, %v1907
      %v1909 = vrot.slane %v1904, %v1908
      %v1910 = vlaneseq
      %v1911 = vshrl.u32 %v1910, 7
      %v1912 = vsub.s32 1, %v1911
      %v1913 = vrot.slane %v1904, %v1912
      %v1914 = vlaneseq
      %v1915 = vshrl.u32 %v1914, 7
      %v1916 = vsub.s32 2, %v1915
      %v1917 = vrot.slane %v1904, %v1916
      %v1953 = vunpack.c.l.b16 %v1872
      %v1954 = vunpack.c.h.b16 %v1872
      %v1955 = vunpack.c.l.b16 %v1873
      %v1956 = vunpack.c.l.b16 %v1874
      %v1957 = vunpack.c.h.b16 %v1874
      %v1958 = vunpack.c.l.b16 %v1875
      %v1959 = vunpack.c.l.b16 %v1876
      %v1960 = vunpack.c.h.b16 %v1876
      %v1961 = vunpack.c.l.b16 %v1877
      %v1962 = vunpack.c.l.b16 %v1878
      %v1963 = vunpack.c.h.b16 %v1878
      %v1964 = vunpack.c.l.b16 %v1879
      %v1965 = vunpack.c.l.b16 %v1880
      %v1966 = vunpack.c.h.b16 %v1880
      %v1967 = vunpack.c.l.b16 %v1881
      %v1968 = vunpack.c.l.b16 %v1882
      %v1969 = vunpack.c.h.b16 %v1882
      %v1970 = vunpack.c.l.b16 %v1883
      %v1971 = vunpack.c.l.b16 %v1884
      %v1972 = vunpack.c.h.b16 %v1884
      %v1973 = vunpack.c.l.b16 %v1885
      %v1974 = vunpack.c.l.b16 %v1886
      %v1975 = vunpack.c.h.b16 %v1886
      %v1976 = vunpack.c.l.b16 %v1887
      %v1977 = vunpack.c.l.b16 %v1888
      %v1978 = vunpack.c.h.b16 %v1888
      %v1979 = vunpack.c.l.b16 %v1889
      %v1980 = vunpack.c.l.b16 %v1890
      %v1981 = vunpack.c.h.b16 %v1890
      %v1982 = vunpack.c.l.b16 %v1891
      %v1983 = vunpack.c.l.b16 %v1892
      %v1984 = vunpack.c.h.b16 %v1892
      %v1985 = vunpack.c.l.b16 %v1893
      %v1986 = vunpack.c.l.b16 %v1894
      %v1987 = vunpack.c.h.b16 %v1894
      %v1988 = vunpack.c.l.b16 %v1895
      %v1989 = vunpack.c.l.b16 %v1896
      %v1990 = vunpack.c.h.b16 %v1896
      %v1991 = vunpack.c.l.b16 %v1897
      %v1992 = vunpack.c.l.b16 %v1898
      %v1993 = vunpack.c.h.b16 %v1898
      %v1994 = vunpack.c.l.b16 %v1899
      %v1995 = vunpack.c.l.b16 %v1900
      %v1996 = vunpack.c.h.b16 %v1900
      %v1997 = vunpack.c.l.b16 %v1901
      %v1998 = vunpack.c.l.b16 %v1902
      %v1999 = vunpack.c.h.b16 %v1902
      %v2000 = vunpack.c.l.b16 %v1903
      %v2001 = vpack.c.b16 %v1956, %v1953
      %v2002 = vpack.c.b16 %v1957, %v1954
      %v2003 = vpack.c.b16 %v1958, %v1955
      %v2004 = vpack.c.b16 %v1962, %v1959
      %v2005 = vpack.c.b16 %v1963, %v1960
      %v2006 = vpack.c.b16 %v1964, %v1961
      %v2007 = vpack.c.b16 %v1968, %v1965
      %v2008 = vpack.c.b16 %v1969, %v1966
      %v2009 = vpack.c.b16 %v1970, %v1967
      %v2010 = vpack.c.b16 %v1974, %v1971
      %v2011 = vpack.c.b16 %v1975, %v1972
      %v2012 = vpack.c.b16 %v1976, %v1973
      %v2013 = vpack.c.b16 %v1980, %v1977
      %v2014 = vpack.c.b16 %v1981, %v1978
      %v2015 = vpack.c.b16 %v1982, %v1979
      %v2016 = vpack.c.b16 %v1986, %v1983
      %v2017 = vpack.c.b16 %v1987, %v1984
      %v2018 = vpack.c.b16 %v1988, %v1985
      %v2019 = vpack.c.b16 %v1992, %v1989
      %v2020 = vpack.c.b16 %v1993, %v1990
      %v2021 = vpack.c.b16 %v1994, %v1991
      %v2022 = vpack.c.b16 %v1998, %v1995
      %v2023 = vpack.c.b16 %v1999, %v1996
      %v2024 = vpack.c.b16 %v2000, %v1997
      %2049 = vmatprep.subr.bf16.mxu0 %v2002
      %2050 = vmatpush1.bf16.msra.mxu0 %v2001
      %2051 = vmatprep.subr.bf16.mxu0 %v2005
      %2052 = vmatpush1.bf16.msra.mxu0 %v2004
      %2053 = vmatprep.subr.bf16.mxu0 %v2008
      %2054 = vmatpush1.bf16.msra.mxu0 %v2007
      %2055 = vmatprep.subr.bf16.mxu0 %v2011
      %2056 = vmatpush1.bf16.msra.mxu0 %v2010
      %2057 = vmatprep.subr.bf16.mxu0 %v2014
      %2058 = vmatpush1.bf16.msra.mxu0 %v2013
      %2059 = vmatprep.subr.bf16.mxu0 %v2017
      %2060 = vmatpush1.bf16.msra.mxu0 %v2016
      %2061 = vmatprep.subr.bf16.mxu0 %v2020
      %2062 = vmatpush1.bf16.msra.mxu0 %v2019
      %2063 = vmatprep.subr.bf16.mxu0 %v2023
      %2064 = vmatpush1.bf16.msra.mxu0 %v2022
      %2065 = vmatprep.subr.bf16.mxu0 0
      %2066 = vmatpush1.bf16.msra.mxu0 0
      %2067 = vmatprep.subr.bf16.mxu0 0
      %2068 = vmatpush1.bf16.msra.mxu0 0
      %2069 = vmatprep.subr.bf16.mxu0 0
      %2070 = vmatpush1.bf16.msra.mxu0 0
      %2071 = vmatprep.subr.bf16.mxu0 0
      %2072 = vmatpush1.bf16.msra.mxu0 0
      %2073 = vmatprep.subr.bf16.mxu0 0
      %2074 = vmatpush1.bf16.msra.mxu0 0
      %2075 = vmatprep.subr.bf16.mxu0 0
      %2076 = vmatpush1.bf16.msra.mxu0 0
      %2077 = vmatprep.subr.bf16.mxu0 0
      %2078 = vmatpush1.bf16.msra.mxu0 0
      %2079 = vmatprep.subr.bf16.mxu0 0
      %2080 = vmatpush1.bf16.msra.mxu0 0
      %2081 = vmatprep.mubr.bf16.mxu0 0
      %2082 = vmatmul.mubr.bf16.gmra.mrb[0].mxu0 %v1871
      %v2083 = vpop.f32.mrb[0].mxu0
      %v2084 = vadd.f32 %v1909, %v2083
      %v2085 = vpop.f32.mrb[0].mxu0
      %v2086 = vadd.f32 %v1913, %v2085
      %v2087 = vpop.f32.mrb[0].mxu0
      %v2088 = vpop.f32.mrb[0].mxu0
      %2089 = vdwg.mxu0
      %2090 = vmatprep.subr.bf16.mxu0 0
      %2091 = vmatpush1.bf16.msra.mxu0 %v2003
      %2092 = vmatprep.subr.bf16.mxu0 0
      %2093 = vmatpush1.bf16.msra.mxu0 %v2006
      %2094 = vmatprep.subr.bf16.mxu0 0
      %2095 = vmatpush1.bf16.msra.mxu0 %v2009
      %2096 = vmatprep.subr.bf16.mxu0 0
      %2097 = vmatpush1.bf16.msra.mxu0 %v2012
      %2098 = vmatprep.subr.bf16.mxu0 0
      %2099 = vmatpush1.bf16.msra.mxu0 %v2015
      %2100 = vmatprep.subr.bf16.mxu0 0
      %2101 = vmatpush1.bf16.msra.mxu0 %v2018
      %2102 = vmatprep.subr.bf16.mxu0 0
      %2103 = vmatpush1.bf16.msra.mxu0 %v2021
      %2104 = vmatprep.subr.bf16.mxu0 0
      %2105 = vmatpush1.bf16.msra.mxu0 %v2024
      %2106 = vmatprep.subr.bf16.mxu0 0
      %2107 = vmatpush1.bf16.msra.mxu0 0
      %2108 = vmatprep.subr.bf16.mxu0 0
      %2109 = vmatpush1.bf16.msra.mxu0 0
      %2110 = vmatprep.subr.bf16.mxu0 0
      %2111 = vmatpush1.bf16.msra.mxu0 0
      %2112 = vmatprep.subr.bf16.mxu0 0
      %2113 = vmatpush1.bf16.msra.mxu0 0
      %2114 = vmatprep.subr.bf16.mxu0 0
      %2115 = vmatpush1.bf16.msra.mxu0 0
      %2116 = vmatprep.subr.bf16.mxu0 0
      %2117 = vmatpush1.bf16.msra.mxu0 0
      %2118 = vmatprep.subr.bf16.mxu0 0
      %2119 = vmatpush1.bf16.msra.mxu0 0
      %2120 = vmatprep.subr.bf16.mxu0 0
      %2121 = vmatpush1.bf16.msra.mxu0 0
      %2122 = vmatprep.mubr.bf16.mxu0 0
      %2123 = vmatmul.mubr.bf16.gmra.mrb[0].mxu0 %v1871
      %v2124 = vpop.f32.mrb[0].mxu0
      %v2125 = vadd.f32 %v1917, %v2124
      %v2126 = vpop.f32.mrb[0].mxu0
      %v2127 = vpop.f32.mrb[0].mxu0
      %v2128 = vpop.f32.mrb[0].mxu0
      %2129 = vdwg.mxu0
      %v2130 = vpack.c.bf16 %v1870, %v1870
      %v2131 = vld [vmem:[%s6] sm:$0xff]
      %v2132 = vld [vmem:[%s6 + $0x8] sm:$0xf]
      %v2133 = vld [vmem:[%s6 + $0xc] sm:$0xff]
      %v2134 = vld [vmem:[%s6 + $0x14] sm:$0xf]
      %v2135 = vld [vmem:[%s6 + $0x18] sm:$0xff]
      %v2136 = vld [vmem:[%s6 + $0x20] sm:$0xf]
      %v2137 = vld [vmem:[%s6 + $0x24] sm:$0xff]
      %v2138 = vld [vmem:[%s6 + $0x2c] sm:$0xf]
      %v2139 = vld [vmem:[%s6 + $0x30] sm:$0xff]
      %v2140 = vld [vmem:[%s6 + $0x38] sm:$0xf]
      %v2141 = vld [vmem:[%s6 + $0x3c] sm:$0xff]
      %v2142 = vld [vmem:[%s6 + $0x44] sm:$0xf]
      %v2143 = vld [vmem:[%s6 + $0x48] sm:$0xff]
      %v2144 = vld [vmem:[%s6 + $0x50] sm:$0xf]
      %v2145 = vld [vmem:[%s6 + $0x54] sm:$0xff]
      %v2146 = vld [vmem:[%s6 + $0x5c] sm:$0xf]
      %v2147 = vld [vmem:[%s6 + $0x60] sm:$0xff]
      %v2148 = vld [vmem:[%s6 + $0x68] sm:$0xf]
      %v2149 = vld [vmem:[%s6 + $0x6c] sm:$0xff]
      %v2150 = vld [vmem:[%s6 + $0x74] sm:$0xf]
      %v2151 = vld [vmem:[%s6 + $0x78] sm:$0xff]
      %v2152 = vld [vmem:[%s6 + $0x80] sm:$0xf]
      %v2153 = vld [vmem:[%s6 + $0x84] sm:$0xff]
      %v2154 = vld [vmem:[%s6 + $0x8c] sm:$0xf]
      %v2155 = vld [vmem:[%s6 + $0x90] sm:$0xff]
      %v2156 = vld [vmem:[%s6 + $0x98] sm:$0xf]
      %v2157 = vld [vmem:[%s6 + $0x9c] sm:$0xff]
      %v2158 = vld [vmem:[%s6 + $0xa4] sm:$0xf]
      %v2159 = vld [vmem:[%s6 + $0xa8] sm:$0xff]
      %v2160 = vld [vmem:[%s6 + $0xb0] sm:$0xf]
      %v2161 = vld [vmem:[%s6 + $0xb4] sm:$0xff]
      %v2162 = vld [vmem:[%s6 + $0xbc] sm:$0xf]
      %v2195 = vunpack.c.l.b16 %v2131
      %v2196 = vunpack.c.h.b16 %v2131
      %v2197 = vunpack.c.l.b16 %v2132
      %v2198 = vunpack.c.l.b16 %v2133
      %v2199 = vunpack.c.h.b16 %v2133
      %v2200 = vunpack.c.l.b16 %v2134
      %v2201 = vunpack.c.l.b16 %v2135
      %v2202 = vunpack.c.h.b16 %v2135
      %v2203 = vunpack.c.l.b16 %v2136
      %v2204 = vunpack.c.l.b16 %v2137
      %v2205 = vunpack.c.h.b16 %v2137
      %v2206 = vunpack.c.l.b16 %v2138
      %v2207 = vunpack.c.l.b16 %v2139
      %v2208 = vunpack.c.h.b16 %v2139
      %v2209 = vunpack.c.l.b16 %v2140
      %v2210 = vunpack.c.l.b16 %v2141
      %v2211 = vunpack.c.h.b16 %v2141
      %v2212 = vunpack.c.l.b16 %v2142
      %v2213 = vunpack.c.l.b16 %v2143
      %v2214 = vunpack.c.h.b16 %v2143
      %v2215 = vunpack.c.l.b16 %v2144
      %v2216 = vunpack.c.l.b16 %v2145
      %v2217 = vunpack.c.h.b16 %v2145
      %v2218 = vunpack.c.l.b16 %v2146
      %v2219 = vunpack.c.l.b16 %v2147
      %v2220 = vunpack.c.h.b16 %v2147
      %v2221 = vunpack.c.l.b16 %v2148
      %v2222 = vunpack.c.l.b16 %v2149
      %v2223 = vunpack.c.h.b16 %v2149
      %v2224 = vunpack.c.l.b16 %v2150
      %v2225 = vunpack.c.l.b16 %v2151
      %v2226 = vunpack.c.h.b16 %v2151
      %v2227 = vunpack.c.l.b16 %v2152
      %v2228 = vunpack.c.l.b16 %v2153
      %v2229 = vunpack.c.h.b16 %v2153
      %v2230 = vunpack.c.l.b16 %v2154
      %v2231 = vunpack.c.l.b16 %v2155
      %v2232 = vunpack.c.h.b16 %v2155
      %v2233 = vunpack.c.l.b16 %v2156
      %v2234 = vunpack.c.l.b16 %v2157
      %v2235 = vunpack.c.h.b16 %v2157
      %v2236 = vunpack.c.l.b16 %v2158
      %v2237 = vunpack.c.l.b16 %v2159
      %v2238 = vunpack.c.h.b16 %v2159
      %v2239 = vunpack.c.l.b16 %v2160
      %v2240 = vunpack.c.l.b16 %v2161
      %v2241 = vunpack.c.h.b16 %v2161
      %v2242 = vunpack.c.l.b16 %v2162
      %v2243 = vpack.c.b16 %v2198, %v2195
      %v2244 = vpack.c.b16 %v2199, %v2196
      %v2245 = vpack.c.b16 %v2200, %v2197
      %v2246 = vpack.c.b16 %v2204, %v2201
      %v2247 = vpack.c.b16 %v2205, %v2202
      %v2248 = vpack.c.b16 %v2206, %v2203
      %v2249 = vpack.c.b16 %v2210, %v2207
      %v2250 = vpack.c.b16 %v2211, %v2208
      %v2251 = vpack.c.b16 %v2212, %v2209
      %v2252 = vpack.c.b16 %v2216, %v2213
      %v2253 = vpack.c.b16 %v2217, %v2214
      %v2254 = vpack.c.b16 %v2218, %v2215
      %v2255 = vpack.c.b16 %v2222, %v2219
      %v2256 = vpack.c.b16 %v2223, %v2220
      %v2257 = vpack.c.b16 %v2224, %v2221
      %v2258 = vpack.c.b16 %v2228, %v2225
      %v2259 = vpack.c.b16 %v2229, %v2226
      %v2260 = vpack.c.b16 %v2230, %v2227
      %v2261 = vpack.c.b16 %v2234, %v2231
      %v2262 = vpack.c.b16 %v2235, %v2232
      %v2263 = vpack.c.b16 %v2236, %v2233
      %v2264 = vpack.c.b16 %v2240, %v2237
      %v2265 = vpack.c.b16 %v2241, %v2238
      %v2266 = vpack.c.b16 %v2242, %v2239
      %2291 = vmatprep.subr.bf16.mxu0 %v2244
      %2292 = vmatpush1.bf16.msra.mxu0 %v2243
      %2293 = vmatprep.subr.bf16.mxu0 %v2247
      %2294 = vmatpush1.bf16.msra.mxu0 %v2246
      %2295 = vmatprep.subr.bf16.mxu0 %v2250
      %2296 = vmatpush1.bf16.msra.mxu0 %v2249
      %2297 = vmatprep.subr.bf16.mxu0 %v2253
      %2298 = vmatpush1.bf16.msra.mxu0 %v2252
      %2299 = vmatprep.subr.bf16.mxu0 %v2256
      %2300 = vmatpush1.bf16.msra.mxu0 %v2255
      %2301 = vmatprep.subr.bf16.mxu0 %v2259
      %2302 = vmatpush1.bf16.msra.mxu0 %v2258
      %2303 = vmatprep.subr.bf16.mxu0 %v2262
      %2304 = vmatpush1.bf16.msra.mxu0 %v2261
      %2305 = vmatprep.subr.bf16.mxu0 %v2265
      %2306 = vmatpush1.bf16.msra.mxu0 %v2264
      %2307 = vmatprep.subr.bf16.mxu0 0
      %2308 = vmatpush1.bf16.msra.mxu0 0
      %2309 = vmatprep.subr.bf16.mxu0 0
      %2310 = vmatpush1.bf16.msra.mxu0 0
      %2311 = vmatprep.subr.bf16.mxu0 0
      %2312 = vmatpush1.bf16.msra.mxu0 0
      %2313 = vmatprep.subr.bf16.mxu0 0
      %2314 = vmatpush1.bf16.msra.mxu0 0
      %2315 = vmatprep.subr.bf16.mxu0 0
      %2316 = vmatpush1.bf16.msra.mxu0 0
      %2317 = vmatprep.subr.bf16.mxu0 0
      %2318 = vmatpush1.bf16.msra.mxu0 0
      %2319 = vmatprep.subr.bf16.mxu0 0
      %2320 = vmatpush1.bf16.msra.mxu0 0
      %2321 = vmatprep.subr.bf16.mxu0 0
      %2322 = vmatpush1.bf16.msra.mxu0 0
      %2323 = vmatprep.mubr.bf16.mxu0 0
      %2324 = vmatmul.mubr.bf16.gmra.mrb[0].mxu0 %v2130
      %v2325 = vpop.f32.mrb[0].mxu0
      %v2326 = vadd.f32 0.0, %v2325
      %v2327 = vpop.f32.mrb[0].mxu0
      %v2328 = vadd.f32 0.0, %v2327
      %v2329 = vpop.f32.mrb[0].mxu0
      %v2330 = vpop.f32.mrb[0].mxu0
      %2331 = vdwg.mxu0
      %2332 = vmatprep.subr.bf16.mxu0 0
      %2333 = vmatpush1.bf16.msra.mxu0 %v2245
      %2334 = vmatprep.subr.bf16.mxu0 0
      %2335 = vmatpush1.bf16.msra.mxu0 %v2248
      %2336 = vmatprep.subr.bf16.mxu0 0
      %2337 = vmatpush1.bf16.msra.mxu0 %v2251
      %2338 = vmatprep.subr.bf16.mxu0 0
      %2339 = vmatpush1.bf16.msra.mxu0 %v2254
      %2340 = vmatprep.subr.bf16.mxu0 0
      %2341 = vmatpush1.bf16.msra.mxu0 %v2257
      %2342 = vmatprep.subr.bf16.mxu0 0
      %2343 = vmatpush1.bf16.msra.mxu0 %v2260
      %2344 = vmatprep.subr.bf16.mxu0 0
      %2345 = vmatpush1.bf16.msra.mxu0 %v2263
      %2346 = vmatprep.subr.bf16.mxu0 0
      %2347 = vmatpush1.bf16.msra.mxu0 %v2266
      %2348 = vmatprep.subr.bf16.mxu0 0
      %2349 = vmatpush1.bf16.msra.mxu0 0
      %2350 = vmatprep.subr.bf16.mxu0 0
      %2351 = vmatpush1.bf16.msra.mxu0 0
      %2352 = vmatprep.subr.bf16.mxu0 0
      %2353 = vmatpush1.bf16.msra.mxu0 0
      %2354 = vmatprep.subr.bf16.mxu0 0
      %2355 = vmatpush1.bf16.msra.mxu0 0
      %2356 = vmatprep.subr.bf16.mxu0 0
      %2357 = vmatpush1.bf16.msra.mxu0 0
      %2358 = vmatprep.subr.bf16.mxu0 0
      %2359 = vmatpush1.bf16.msra.mxu0 0
      %2360 = vmatprep.subr.bf16.mxu0 0
      %2361 = vmatpush1.bf16.msra.mxu0 0
      %2362 = vmatprep.subr.bf16.mxu0 0
      %2363 = vmatpush1.bf16.msra.mxu0 0
      %2364 = vmatprep.mubr.bf16.mxu0 0
      %2365 = vmatmul.mubr.bf16.gmra.mrb[0].mxu0 %v2130
      %v2366 = vpop.f32.mrb[0].mxu0
      %v2367 = vadd.f32 0.0, %v2366
      %v2368 = vpop.f32.mrb[0].mxu0
      %v2369 = vpop.f32.mrb[0].mxu0
      %v2370 = vpop.f32.mrb[0].mxu0
      %2371 = vdwg.mxu0
      %v2372 = vld [vmem:[%s8] sm:$0x1]
      %v2373 = vadd.f32 %v2084, %v2326
      %v2374 = vxor.u32 %v2373, 2147483648
      %v2375 = vmul.f32 %v2374, 1.442695
      %v2376 = vpow.pop %v2375
      %v2377 = vadd.f32 %v2376, 1.0
      %v2378 = vrcp.pop %v2377
      %v2379 = vmul.f32 1.0, %v2378
      %v2380 = vadd.f32 %v2086, %v2328
      %v2381 = vxor.u32 %v2380, 2147483648
      %v2382 = vmul.f32 %v2381, 1.442695
      %v2383 = vpow.pop %v2382
      %v2384 = vadd.f32 %v2383, 1.0
      %v2385 = vrcp.pop %v2384
      %v2386 = vmul.f32 1.0, %v2385
      %v2388 = vlaneseq
      %v2389 = vshrl.u32 %v2388, 7
      %v2390 = vsub.s32 0, %v2389
      %v2391 = vrot.slane %v2372, %v2390
      %v2393 = vadd.f32 %v2367, %v2391
      %v2394 = vmul.f32 %v2379, %v2393
      %v2395 = vadd.f32 %v2125, %v2394
      %v2396 = vtanh.pop %v2395
      %v2397 = vsub.f32 %v1870, %v2396
      %v2398 = vmul.f32 %v2386, %v2397
      %v2399 = vadd.f32 %v2396, %v2398
      %2400 = vst [vmem:[%s13] sm:$0xff] %v2399
      %s2401 = scalar_lea.vmem %s13, 8
      %v2402 = vld [vmem:[%s2401] sm:$0xff]
      %v2403 = vpack.c.bf16 %v2399, %v2399
      %s2404 = scalar_lea.vmem %s5, 192
      %v2405 = vld [vmem:[%s2404] sm:$0xff]
      %v2406 = vld [vmem:[%s2404 + $0x8] sm:$0xf]
      %v2407 = vld [vmem:[%s2404 + $0xc] sm:$0xff]
      %v2408 = vld [vmem:[%s2404 + $0x14] sm:$0xf]
      %v2409 = vld [vmem:[%s2404 + $0x18] sm:$0xff]
      %v2410 = vld [vmem:[%s2404 + $0x20] sm:$0xf]
      %v2411 = vld [vmem:[%s2404 + $0x24] sm:$0xff]
      %v2412 = vld [vmem:[%s2404 + $0x2c] sm:$0xf]
      %v2413 = vld [vmem:[%s2404 + $0x30] sm:$0xff]
      %v2414 = vld [vmem:[%s2404 + $0x38] sm:$0xf]
      %v2415 = vld [vmem:[%s2404 + $0x3c] sm:$0xff]
      %v2416 = vld [vmem:[%s2404 + $0x44] sm:$0xf]
      %v2417 = vld [vmem:[%s2404 + $0x48] sm:$0xff]
      %v2418 = vld [vmem:[%s2404 + $0x50] sm:$0xf]
      %v2419 = vld [vmem:[%s2404 + $0x54] sm:$0xff]
      %v2420 = vld [vmem:[%s2404 + $0x5c] sm:$0xf]
      %v2421 = vld [vmem:[%s2404 + $0x60] sm:$0xff]
      %v2422 = vld [vmem:[%s2404 + $0x68] sm:$0xf]
      %v2423 = vld [vmem:[%s2404 + $0x6c] sm:$0xff]
      %v2424 = vld [vmem:[%s2404 + $0x74] sm:$0xf]
      %v2425 = vld [vmem:[%s2404 + $0x78] sm:$0xff]
      %v2426 = vld [vmem:[%s2404 + $0x80] sm:$0xf]
      %v2427 = vld [vmem:[%s2404 + $0x84] sm:$0xff]
      %v2428 = vld [vmem:[%s2404 + $0x8c] sm:$0xf]
      %v2429 = vld [vmem:[%s2404 + $0x90] sm:$0xff]
      %v2430 = vld [vmem:[%s2404 + $0x98] sm:$0xf]
      %v2431 = vld [vmem:[%s2404 + $0x9c] sm:$0xff]
      %v2432 = vld [vmem:[%s2404 + $0xa4] sm:$0xf]
      %v2433 = vld [vmem:[%s2404 + $0xa8] sm:$0xff]
      %v2434 = vld [vmem:[%s2404 + $0xb0] sm:$0xf]
      %v2435 = vld [vmem:[%s2404 + $0xb4] sm:$0xff]
      %v2436 = vld [vmem:[%s2404 + $0xbc] sm:$0xf]
      %s2437 = scalar_lea.vmem %s7, 3
      %v2438 = vld [vmem:[%s2437] sm:$0x7]
      %v2440 = vlaneseq
      %v2441 = vshrl.u32 %v2440, 7
      %v2442 = vsub.s32 0, %v2441
      %v2443 = vrot.slane %v2438, %v2442
      %v2444 = vlaneseq
      %v2445 = vshrl.u32 %v2444, 7
      %v2446 = vsub.s32 1, %v2445
      %v2447 = vrot.slane %v2438, %v2446
      %v2448 = vlaneseq
      %v2449 = vshrl.u32 %v2448, 7
      %v2450 = vsub.s32 2, %v2449
      %v2451 = vrot.slane %v2438, %v2450
      %v2487 = vunpack.c.l.b16 %v2405
      %v2488 = vunpack.c.h.b16 %v2405
      %v2489 = vunpack.c.l.b16 %v2406
      %v2490 = vunpack.c.l.b16 %v2407
      %v2491 = vunpack.c.h.b16 %v2407
      %v2492 = vunpack.c.l.b16 %v2408
      %v2493 = vunpack.c.l.b16 %v2409
      %v2494 = vunpack.c.h.b16 %v2409
      %v2495 = vunpack.c.l.b16 %v2410
      %v2496 = vunpack.c.l.b16 %v2411
      %v2497 = vunpack.c.h.b16 %v2411
      %v2498 = vunpack.c.l.b16 %v2412
      %v2499 = vunpack.c.l.b16 %v2413
      %v2500 = vunpack.c.h.b16 %v2413
      %v2501 = vunpack.c.l.b16 %v2414
      %v2502 = vunpack.c.l.b16 %v2415
      %v2503 = vunpack.c.h.b16 %v2415
      %v2504 = vunpack.c.l.b16 %v2416
      %v2505 = vunpack.c.l.b16 %v2417
      %v2506 = vunpack.c.h.b16 %v2417
      %v2507 = vunpack.c.l.b16 %v2418
      %v2508 = vunpack.c.l.b16 %v2419
      %v2509 = vunpack.c.h.b16 %v2419
      %v2510 = vunpack.c.l.b16 %v2420
      %v2511 = vunpack.c.l.b16 %v2421
      %v2512 = vunpack.c.h.b16 %v2421
      %v2513 = vunpack.c.l.b16 %v2422
      %v2514 = vunpack.c.l.b16 %v2423
      %v2515 = vunpack.c.h.b16 %v2423
      %v2516 = vunpack.c.l.b16 %v2424
      %v2517 = vunpack.c.l.b16 %v2425
      %v2518 = vunpack.c.h.b16 %v2425
      %v2519 = vunpack.c.l.b16 %v2426
      %v2520 = vunpack.c.l.b16 %v2427
      %v2521 = vunpack.c.h.b16 %v2427
      %v2522 = vunpack.c.l.b16 %v2428
      %v2523 = vunpack.c.l.b16 %v2429
      %v2524 = vunpack.c.h.b16 %v2429
      %v2525 = vunpack.c.l.b16 %v2430
      %v2526 = vunpack.c.l.b16 %v2431
      %v2527 = vunpack.c.h.b16 %v2431
      %v2528 = vunpack.c.l.b16 %v2432
      %v2529 = vunpack.c.l.b16 %v2433
      %v2530 = vunpack.c.h.b16 %v2433
      %v2531 = vunpack.c.l.b16 %v2434
      %v2532 = vunpack.c.l.b16 %v2435
      %v2533 = vunpack.c.h.b16 %v2435
      %v2534 = vunpack.c.l.b16 %v2436
      %v2535 = vpack.c.b16 %v2490, %v2487
      %v2536 = vpack.c.b16 %v2491, %v2488
      %v2537 = vpack.c.b16 %v2492, %v2489
      %v2538 = vpack.c.b16 %v2496, %v2493
      %v2539 = vpack.c.b16 %v2497, %v2494
      %v2540 = vpack.c.b16 %v2498, %v2495
      %v2541 = vpack.c.b16 %v2502, %v2499
      %v2542 = vpack.c.b16 %v2503, %v2500
      %v2543 = vpack.c.b16 %v2504, %v2501
      %v2544 = vpack.c.b16 %v2508, %v2505
      %v2545 = vpack.c.b16 %v2509, %v2506
      %v2546 = vpack.c.b16 %v2510, %v2507
      %v2547 = vpack.c.b16 %v2514, %v2511
      %v2548 = vpack.c.b16 %v2515, %v2512
      %v2549 = vpack.c.b16 %v2516, %v2513
      %v2550 = vpack.c.b16 %v2520, %v2517
      %v2551 = vpack.c.b16 %v2521, %v2518
      %v2552 = vpack.c.b16 %v2522, %v2519
      %v2553 = vpack.c.b16 %v2526, %v2523
      %v2554 = vpack.c.b16 %v2527, %v2524
      %v2555 = vpack.c.b16 %v2528, %v2525
      %v2556 = vpack.c.b16 %v2532, %v2529
      %v2557 = vpack.c.b16 %v2533, %v2530
      %v2558 = vpack.c.b16 %v2534, %v2531
      %2583 = vmatprep.subr.bf16.mxu0 %v2536
      %2584 = vmatpush1.bf16.msra.mxu0 %v2535
      %2585 = vmatprep.subr.bf16.mxu0 %v2539
      %2586 = vmatpush1.bf16.msra.mxu0 %v2538
      %2587 = vmatprep.subr.bf16.mxu0 %v2542
      %2588 = vmatpush1.bf16.msra.mxu0 %v2541
      %2589 = vmatprep.subr.bf16.mxu0 %v2545
      %2590 = vmatpush1.bf16.msra.mxu0 %v2544
      %2591 = vmatprep.subr.bf16.mxu0 %v2548
      %2592 = vmatpush1.bf16.msra.mxu0 %v2547
      %2593 = vmatprep.subr.bf16.mxu0 %v2551
      %2594 = vmatpush1.bf16.msra.mxu0 %v2550
      %2595 = vmatprep.subr.bf16.mxu0 %v2554
      %2596 = vmatpush1.bf16.msra.mxu0 %v2553
      %2597 = vmatprep.subr.bf16.mxu0 %v2557
      %2598 = vmatpush1.bf16.msra.mxu0 %v2556
      %2599 = vmatprep.subr.bf16.mxu0 0
      %2600 = vmatpush1.bf16.msra.mxu0 0
      %2601 = vmatprep.subr.bf16.mxu0 0
      %2602 = vmatpush1.bf16.msra.mxu0 0
      %2603 = vmatprep.subr.bf16.mxu0 0
      %2604 = vmatpush1.bf16.msra.mxu0 0
      %2605 = vmatprep.subr.bf16.mxu0 0
      %2606 = vmatpush1.bf16.msra.mxu0 0
      %2607 = vmatprep.subr.bf16.mxu0 0
      %2608 = vmatpush1.bf16.msra.mxu0 0
      %2609 = vmatprep.subr.bf16.mxu0 0
      %2610 = vmatpush1.bf16.msra.mxu0 0
      %2611 = vmatprep.subr.bf16.mxu0 0
      %2612 = vmatpush1.bf16.msra.mxu0 0
      %2613 = vmatprep.subr.bf16.mxu0 0
      %2614 = vmatpush1.bf16.msra.mxu0 0
      %2615 = vmatprep.mubr.bf16.mxu0 0
      %2616 = vmatmul.mubr.bf16.gmra.mrb[0].mxu0 %v2403
      %v2617 = vpop.f32.mrb[0].mxu0
      %v2618 = vadd.f32 %v2443, %v2617
      %v2619 = vpop.f32.mrb[0].mxu0
      %v2620 = vadd.f32 %v2447, %v2619
      %v2621 = vpop.f32.mrb[0].mxu0
      %v2622 = vpop.f32.mrb[0].mxu0
      %2623 = vdwg.mxu0
      %2624 = vmatprep.subr.bf16.mxu0 0
      %2625 = vmatpush1.bf16.msra.mxu0 %v2537
      %2626 = vmatprep.subr.bf16.mxu0 0
      %2627 = vmatpush1.bf16.msra.mxu0 %v2540
      %2628 = vmatprep.subr.bf16.mxu0 0
      %2629 = vmatpush1.bf16.msra.mxu0 %v2543
      %2630 = vmatprep.subr.bf16.mxu0 0
      %2631 = vmatpush1.bf16.msra.mxu0 %v2546
      %2632 = vmatprep.subr.bf16.mxu0 0
      %2633 = vmatpush1.bf16.msra.mxu0 %v2549
      %2634 = vmatprep.subr.bf16.mxu0 0
      %2635 = vmatpush1.bf16.msra.mxu0 %v2552
      %2636 = vmatprep.subr.bf16.mxu0 0
      %2637 = vmatpush1.bf16.msra.mxu0 %v2555
      %2638 = vmatprep.subr.bf16.mxu0 0
      %2639 = vmatpush1.bf16.msra.mxu0 %v2558
      %2640 = vmatprep.subr.bf16.mxu0 0
      %2641 = vmatpush1.bf16.msra.mxu0 0
      %2642 = vmatprep.subr.bf16.mxu0 0
      %2643 = vmatpush1.bf16.msra.mxu0 0
      %2644 = vmatprep.subr.bf16.mxu0 0
      %2645 = vmatpush1.bf16.msra.mxu0 0
      %2646 = vmatprep.subr.bf16.mxu0 0
      %2647 = vmatpush1.bf16.msra.mxu0 0
      %2648 = vmatprep.subr.bf16.mxu0 0
      %2649 = vmatpush1.bf16.msra.mxu0 0
      %2650 = vmatprep.subr.bf16.mxu0 0
      %2651 = vmatpush1.bf16.msra.mxu0 0
      %2652 = vmatprep.subr.bf16.mxu0 0
      %2653 = vmatpush1.bf16.msra.mxu0 0
      %2654 = vmatprep.subr.bf16.mxu0 0
      %2655 = vmatpush1.bf16.msra.mxu0 0
      %2656 = vmatprep.mubr.bf16.mxu0 0
      %2657 = vmatmul.mubr.bf16.gmra.mrb[0].mxu0 %v2403
      %v2658 = vpop.f32.mrb[0].mxu0
      %v2659 = vadd.f32 %v2451, %v2658
      %v2660 = vpop.f32.mrb[0].mxu0
      %v2661 = vpop.f32.mrb[0].mxu0
      %v2662 = vpop.f32.mrb[0].mxu0
      %2663 = vdwg.mxu0
      %v2664 = vpack.c.bf16 %v2402, %v2402
      %s2665 = scalar_lea.vmem %s6, 192
      %v2666 = vld [vmem:[%s2665] sm:$0xff]
      %v2667 = vld [vmem:[%s2665 + $0x8] sm:$0xf]
      %v2668 = vld [vmem:[%s2665 + $0xc] sm:$0xff]
      %v2669 = vld [vmem:[%s2665 + $0x14] sm:$0xf]
      %v2670 = vld [vmem:[%s2665 + $0x18] sm:$0xff]
      %v2671 = vld [vmem:[%s2665 + $0x20] sm:$0xf]
      %v2672 = vld [vmem:[%s2665 + $0x24] sm:$0xff]
      %v2673 = vld [vmem:[%s2665 + $0x2c] sm:$0xf]
      %v2674 = vld [vmem:[%s2665 + $0x30] sm:$0xff]
      %v2675 = vld [vmem:[%s2665 + $0x38] sm:$0xf]
      %v2676 = vld [vmem:[%s2665 + $0x3c] sm:$0xff]
      %v2677 = vld [vmem:[%s2665 + $0x44] sm:$0xf]
      %v2678 = vld [vmem:[%s2665 + $0x48] sm:$0xff]
      %v2679 = vld [vmem:[%s2665 + $0x50] sm:$0xf]
      %v2680 = vld [vmem:[%s2665 + $0x54] sm:$0xff]
      %v2681 = vld [vmem:[%s2665 + $0x5c] sm:$0xf]
      %v2682 = vld [vmem:[%s2665 + $0x60] sm:$0xff]
      %v2683 = vld [vmem:[%s2665 + $0x68] sm:$0xf]
      %v2684 = vld [vmem:[%s2665 + $0x6c] sm:$0xff]
      %v2685 = vld [vmem:[%s2665 + $0x74] sm:$0xf]
      %v2686 = vld [vmem:[%s2665 + $0x78] sm:$0xff]
      %v2687 = vld [vmem:[%s2665 + $0x80] sm:$0xf]
      %v2688 = vld [vmem:[%s2665 + $0x84] sm:$0xff]
      %v2689 = vld [vmem:[%s2665 + $0x8c] sm:$0xf]
      %v2690 = vld [vmem:[%s2665 + $0x90] sm:$0xff]
      %v2691 = vld [vmem:[%s2665 + $0x98] sm:$0xf]
      %v2692 = vld [vmem:[%s2665 + $0x9c] sm:$0xff]
      %v2693 = vld [vmem:[%s2665 + $0xa4] sm:$0xf]
      %v2694 = vld [vmem:[%s2665 + $0xa8] sm:$0xff]
      %v2695 = vld [vmem:[%s2665 + $0xb0] sm:$0xf]
      %v2696 = vld [vmem:[%s2665 + $0xb4] sm:$0xff]
      %v2697 = vld [vmem:[%s2665 + $0xbc] sm:$0xf]
      %v2730 = vunpack.c.l.b16 %v2666
      %v2731 = vunpack.c.h.b16 %v2666
      %v2732 = vunpack.c.l.b16 %v2667
      %v2733 = vunpack.c.l.b16 %v2668
      %v2734 = vunpack.c.h.b16 %v2668
      %v2735 = vunpack.c.l.b16 %v2669
      %v2736 = vunpack.c.l.b16 %v2670
      %v2737 = vunpack.c.h.b16 %v2670
      %v2738 = vunpack.c.l.b16 %v2671
      %v2739 = vunpack.c.l.b16 %v2672
      %v2740 = vunpack.c.h.b16 %v2672
      %v2741 = vunpack.c.l.b16 %v2673
      %v2742 = vunpack.c.l.b16 %v2674
      %v2743 = vunpack.c.h.b16 %v2674
      %v2744 = vunpack.c.l.b16 %v2675
      %v2745 = vunpack.c.l.b16 %v2676
      %v2746 = vunpack.c.h.b16 %v2676
      %v2747 = vunpack.c.l.b16 %v2677
      %v2748 = vunpack.c.l.b16 %v2678
      %v2749 = vunpack.c.h.b16 %v2678
      %v2750 = vunpack.c.l.b16 %v2679
      %v2751 = vunpack.c.l.b16 %v2680
      %v2752 = vunpack.c.h.b16 %v2680
      %v2753 = vunpack.c.l.b16 %v2681
      %v2754 = vunpack.c.l.b16 %v2682
      %v2755 = vunpack.c.h.b16 %v2682
      %v2756 = vunpack.c.l.b16 %v2683
      %v2757 = vunpack.c.l.b16 %v2684
      %v2758 = vunpack.c.h.b16 %v2684
      %v2759 = vunpack.c.l.b16 %v2685
      %v2760 = vunpack.c.l.b16 %v2686
      %v2761 = vunpack.c.h.b16 %v2686
      %v2762 = vunpack.c.l.b16 %v2687
      %v2763 = vunpack.c.l.b16 %v2688
      %v2764 = vunpack.c.h.b16 %v2688
      %v2765 = vunpack.c.l.b16 %v2689
      %v2766 = vunpack.c.l.b16 %v2690
      %v2767 = vunpack.c.h.b16 %v2690
      %v2768 = vunpack.c.l.b16 %v2691
      %v2769 = vunpack.c.l.b16 %v2692
      %v2770 = vunpack.c.h.b16 %v2692
      %v2771 = vunpack.c.l.b16 %v2693
      %v2772 = vunpack.c.l.b16 %v2694
      %v2773 = vunpack.c.h.b16 %v2694
      %v2774 = vunpack.c.l.b16 %v2695
      %v2775 = vunpack.c.l.b16 %v2696
      %v2776 = vunpack.c.h.b16 %v2696
      %v2777 = vunpack.c.l.b16 %v2697
      %v2778 = vpack.c.b16 %v2733, %v2730
      %v2779 = vpack.c.b16 %v2734, %v2731
      %v2780 = vpack.c.b16 %v2735, %v2732
      %v2781 = vpack.c.b16 %v2739, %v2736
      %v2782 = vpack.c.b16 %v2740, %v2737
      %v2783 = vpack.c.b16 %v2741, %v2738
      %v2784 = vpack.c.b16 %v2745, %v2742
      %v2785 = vpack.c.b16 %v2746, %v2743
      %v2786 = vpack.c.b16 %v2747, %v2744
      %v2787 = vpack.c.b16 %v2751, %v2748
      %v2788 = vpack.c.b16 %v2752, %v2749
      %v2789 = vpack.c.b16 %v2753, %v2750
      %v2790 = vpack.c.b16 %v2757, %v2754
      %v2791 = vpack.c.b16 %v2758, %v2755
      %v2792 = vpack.c.b16 %v2759, %v2756
      %v2793 = vpack.c.b16 %v2763, %v2760
      %v2794 = vpack.c.b16 %v2764, %v2761
      %v2795 = vpack.c.b16 %v2765, %v2762
      %v2796 = vpack.c.b16 %v2769, %v2766
      %v2797 = vpack.c.b16 %v2770, %v2767
      %v2798 = vpack.c.b16 %v2771, %v2768
      %v2799 = vpack.c.b16 %v2775, %v2772
      %v2800 = vpack.c.b16 %v2776, %v2773
      %v2801 = vpack.c.b16 %v2777, %v2774
      %2826 = vmatprep.subr.bf16.mxu0 %v2779
      %2827 = vmatpush1.bf16.msra.mxu0 %v2778
      %2828 = vmatprep.subr.bf16.mxu0 %v2782
      %2829 = vmatpush1.bf16.msra.mxu0 %v2781
      %2830 = vmatprep.subr.bf16.mxu0 %v2785
      %2831 = vmatpush1.bf16.msra.mxu0 %v2784
      %2832 = vmatprep.subr.bf16.mxu0 %v2788
      %2833 = vmatpush1.bf16.msra.mxu0 %v2787
      %2834 = vmatprep.subr.bf16.mxu0 %v2791
      %2835 = vmatpush1.bf16.msra.mxu0 %v2790
      %2836 = vmatprep.subr.bf16.mxu0 %v2794
      %2837 = vmatpush1.bf16.msra.mxu0 %v2793
      %2838 = vmatprep.subr.bf16.mxu0 %v2797
      %2839 = vmatpush1.bf16.msra.mxu0 %v2796
      %2840 = vmatprep.subr.bf16.mxu0 %v2800
      %2841 = vmatpush1.bf16.msra.mxu0 %v2799
      %2842 = vmatprep.subr.bf16.mxu0 0
      %2843 = vmatpush1.bf16.msra.mxu0 0
      %2844 = vmatprep.subr.bf16.mxu0 0
      %2845 = vmatpush1.bf16.msra.mxu0 0
      %2846 = vmatprep.subr.bf16.mxu0 0
      %2847 = vmatpush1.bf16.msra.mxu0 0
      %2848 = vmatprep.subr.bf16.mxu0 0
      %2849 = vmatpush1.bf16.msra.mxu0 0
      %2850 = vmatprep.subr.bf16.mxu0 0
      %2851 = vmatpush1.bf16.msra.mxu0 0
      %2852 = vmatprep.subr.bf16.mxu0 0
      %2853 = vmatpush1.bf16.msra.mxu0 0
      %2854 = vmatprep.subr.bf16.mxu0 0
      %2855 = vmatpush1.bf16.msra.mxu0 0
      %2856 = vmatprep.subr.bf16.mxu0 0
      %2857 = vmatpush1.bf16.msra.mxu0 0
      %2858 = vmatprep.mubr.bf16.mxu0 0
      %2859 = vmatmul.mubr.bf16.gmra.mrb[0].mxu0 %v2664
      %v2860 = vpop.f32.mrb[0].mxu0
      %v2861 = vadd.f32 0.0, %v2860
      %v2862 = vpop.f32.mrb[0].mxu0
      %v2863 = vadd.f32 0.0, %v2862
      %v2864 = vpop.f32.mrb[0].mxu0
      %v2865 = vpop.f32.mrb[0].mxu0
      %2866 = vdwg.mxu0
      %2867 = vmatprep.subr.bf16.mxu0 0
      %2868 = vmatpush1.bf16.msra.mxu0 %v2780
      %2869 = vmatprep.subr.bf16.mxu0 0
      %2870 = vmatpush1.bf16.msra.mxu0 %v2783
      %2871 = vmatprep.subr.bf16.mxu0 0
      %2872 = vmatpush1.bf16.msra.mxu0 %v2786
      %2873 = vmatprep.subr.bf16.mxu0 0
      %2874 = vmatpush1.bf16.msra.mxu0 %v2789
      %2875 = vmatprep.subr.bf16.mxu0 0
      %2876 = vmatpush1.bf16.msra.mxu0 %v2792
      %2877 = vmatprep.subr.bf16.mxu0 0
      %2878 = vmatpush1.bf16.msra.mxu0 %v2795
      %2879 = vmatprep.subr.bf16.mxu0 0
      %2880 = vmatpush1.bf16.msra.mxu0 %v2798
      %2881 = vmatprep.subr.bf16.mxu0 0
      %2882 = vmatpush1.bf16.msra.mxu0 %v2801
      %2883 = vmatprep.subr.bf16.mxu0 0
      %2884 = vmatpush1.bf16.msra.mxu0 0
      %2885 = vmatprep.subr.bf16.mxu0 0
      %2886 = vmatpush1.bf16.msra.mxu0 0
      %2887 = vmatprep.subr.bf16.mxu0 0
      %2888 = vmatpush1.bf16.msra.mxu0 0
      %2889 = vmatprep.subr.bf16.mxu0 0
      %2890 = vmatpush1.bf16.msra.mxu0 0
      %2891 = vmatprep.subr.bf16.mxu0 0
      %2892 = vmatpush1.bf16.msra.mxu0 0
      %2893 = vmatprep.subr.bf16.mxu0 0
      %2894 = vmatpush1.bf16.msra.mxu0 0
      %2895 = vmatprep.subr.bf16.mxu0 0
      %2896 = vmatpush1.bf16.msra.mxu0 0
      %2897 = vmatprep.subr.bf16.mxu0 0
      %2898 = vmatpush1.bf16.msra.mxu0 0
      %2899 = vmatprep.mubr.bf16.mxu0 0
      %2900 = vmatmul.mubr.bf16.gmra.mrb[0].mxu0 %v2664
      %v2901 = vpop.f32.mrb[0].mxu0
      %v2902 = vadd.f32 0.0, %v2901
      %v2903 = vpop.f32.mrb[0].mxu0
      %v2904 = vpop.f32.mrb[0].mxu0
      %v2905 = vpop.f32.mrb[0].mxu0
      %2906 = vdwg.mxu0
      %s2907 = scalar_lea.vmem %s8, 1
      %v2908 = vld [vmem:[%s2907] sm:$0x1]
      %v2909 = vadd.f32 %v2618, %v2861
      %v2910 = vxor.u32 %v2909, 2147483648
      %v2911 = vmul.f32 %v2910, 1.442695
      %v2912 = vpow.pop %v2911
      %v2913 = vadd.f32 %v2912, 1.0
      %v2914 = vrcp.pop %v2913
      %v2915 = vmul.f32 1.0, %v2914
      %v2916 = vadd.f32 %v2620, %v2863
      %v2917 = vxor.u32 %v2916, 2147483648
      %v2918 = vmul.f32 %v2917, 1.442695
      %v2919 = vpow.pop %v2918
      %v2920 = vadd.f32 %v2919, 1.0
      %v2921 = vrcp.pop %v2920
      %v2922 = vmul.f32 1.0, %v2921
      %v2924 = vlaneseq
      %v2925 = vshrl.u32 %v2924, 7
      %v2926 = vsub.s32 0, %v2925
      %v2927 = vrot.slane %v2908, %v2926
      %v2929 = vadd.f32 %v2902, %v2927
      %v2930 = vmul.f32 %v2915, %v2929
      %v2931 = vadd.f32 %v2659, %v2930
      %v2932 = vtanh.pop %v2931
      %v2933 = vsub.f32 %v2402, %v2932
      %v2934 = vmul.f32 %v2922, %v2933
      %v2935 = vadd.f32 %v2932, %v2934
      %2936 = vst [vmem:[%s2401] sm:$0xff] %v2935
      %v2937 = vpack.c.bf16 %v2935, %v2935
      %v2938 = vld [vmem:[%s10] sm:$0xf]
      %v2939 = vld [vmem:[%s10 + $0x4] sm:$0xf]
      %v2940 = vld [vmem:[%s10 + $0x8] sm:$0xf]
      %v2941 = vld [vmem:[%s10 + $0xc] sm:$0xf]
      %v2942 = vld [vmem:[%s10 + $0x10] sm:$0xf]
      %v2943 = vld [vmem:[%s10 + $0x14] sm:$0xf]
      %v2944 = vld [vmem:[%s10 + $0x18] sm:$0xf]
      %v2945 = vld [vmem:[%s10 + $0x1c] sm:$0xf]
      %v2946 = vld [vmem:[%s10 + $0x20] sm:$0xf]
      %v2947 = vld [vmem:[%s10 + $0x24] sm:$0xf]
      %v2948 = vld [vmem:[%s10 + $0x28] sm:$0xf]
      %v2949 = vld [vmem:[%s10 + $0x2c] sm:$0xf]
      %v2950 = vld [vmem:[%s10 + $0x30] sm:$0xf]
      %v2951 = vld [vmem:[%s10 + $0x34] sm:$0xf]
      %v2952 = vld [vmem:[%s10 + $0x38] sm:$0xf]
      %v2953 = vld [vmem:[%s10 + $0x3c] sm:$0xf]
      %v2954 = vld [vmem:[%s11] sm:$0x1]
      %v2956 = vlaneseq
      %v2957 = vshrl.u32 %v2956, 7
      %v2958 = vsub.s32 0, %v2957
      %v2959 = vrot.slane %v2954, %v2958
      %v2977 = vunpack.c.l.b16 %v2938
      %v2978 = vunpack.c.l.b16 %v2939
      %v2979 = vunpack.c.l.b16 %v2940
      %v2980 = vunpack.c.l.b16 %v2941
      %v2981 = vunpack.c.l.b16 %v2942
      %v2982 = vunpack.c.l.b16 %v2943
      %v2983 = vunpack.c.l.b16 %v2944
      %v2984 = vunpack.c.l.b16 %v2945
      %v2985 = vunpack.c.l.b16 %v2946
      %v2986 = vunpack.c.l.b16 %v2947
      %v2987 = vunpack.c.l.b16 %v2948
      %v2988 = vunpack.c.l.b16 %v2949
      %v2989 = vunpack.c.l.b16 %v2950
      %v2990 = vunpack.c.l.b16 %v2951
      %v2991 = vunpack.c.l.b16 %v2952
      %v2992 = vunpack.c.l.b16 %v2953
      %v2993 = vpack.c.b16 %v2978, %v2977
      %v2994 = vpack.c.b16 %v2980, %v2979
      %v2995 = vpack.c.b16 %v2982, %v2981
      %v2996 = vpack.c.b16 %v2984, %v2983
      %v2997 = vpack.c.b16 %v2986, %v2985
      %v2998 = vpack.c.b16 %v2988, %v2987
      %v2999 = vpack.c.b16 %v2990, %v2989
      %v3000 = vpack.c.b16 %v2992, %v2991
      %3009 = vmatprep.subr.bf16.mxu0 0
      %3010 = vmatpush1.bf16.msra.mxu0 %v2993
      %3011 = vmatprep.subr.bf16.mxu0 0
      %3012 = vmatpush1.bf16.msra.mxu0 %v2994
      %3013 = vmatprep.subr.bf16.mxu0 0
      %3014 = vmatpush1.bf16.msra.mxu0 %v2995
      %3015 = vmatprep.subr.bf16.mxu0 0
      %3016 = vmatpush1.bf16.msra.mxu0 %v2996
      %3017 = vmatprep.subr.bf16.mxu0 0
      %3018 = vmatpush1.bf16.msra.mxu0 %v2997
      %3019 = vmatprep.subr.bf16.mxu0 0
      %3020 = vmatpush1.bf16.msra.mxu0 %v2998
      %3021 = vmatprep.subr.bf16.mxu0 0
      %3022 = vmatpush1.bf16.msra.mxu0 %v2999
      %3023 = vmatprep.subr.bf16.mxu0 0
      %3024 = vmatpush1.bf16.msra.mxu0 %v3000
      %3025 = vmatprep.subr.bf16.mxu0 0
      %3026 = vmatpush1.bf16.msra.mxu0 0
      %3027 = vmatprep.subr.bf16.mxu0 0
      %3028 = vmatpush1.bf16.msra.mxu0 0
      %3029 = vmatprep.subr.bf16.mxu0 0
      %3030 = vmatpush1.bf16.msra.mxu0 0
      %3031 = vmatprep.subr.bf16.mxu0 0
      %3032 = vmatpush1.bf16.msra.mxu0 0
      %3033 = vmatprep.subr.bf16.mxu0 0
      %3034 = vmatpush1.bf16.msra.mxu0 0
      %3035 = vmatprep.subr.bf16.mxu0 0
      %3036 = vmatpush1.bf16.msra.mxu0 0
      %3037 = vmatprep.subr.bf16.mxu0 0
      %3038 = vmatpush1.bf16.msra.mxu0 0
      %3039 = vmatprep.subr.bf16.mxu0 0
      %3040 = vmatpush1.bf16.msra.mxu0 0
      %3041 = vmatprep.mubr.bf16.mxu0 0
      %3042 = vmatmul.mubr.bf16.gmra.mrb[0].mxu0 %v2937
      %v3043 = vpop.f32.mrb[0].mxu0
      %v3044 = vadd.f32 %v2959, %v3043
      %v3045 = vpop.f32.mrb[0].mxu0
      %v3046 = vpop.f32.mrb[0].mxu0
      %v3047 = vpop.f32.mrb[0].mxu0
      %3048 = vdwg.mxu0
      %3049 = vst [vmem:[%s416] sm:$0xff] %v3044
      %3050 = vmax.xlane.f32.xlu0 %v3044
      %v3051 = vpop.xlane.xlu0 %3050
      %vm3052 = vcmp.eq.f32.partialorder %v3044, %v3051
      %v3053 = vsel %vm3052, %v1757, 128
      %v3054 = vand.u32 %v3053, 65535
      %v3055 = vshra.s32 %v3053, 16
      %v3056 = vcvt.s32.f32 %v3054
      %v3057 = vcvt.s32.f32 %v3055
      %3058 = vmin.xlane.f32.xlu0 %v3057
      %v3059 = vpop.xlane.xlu0 %3058
      %vm3060 = vcmp.eq.f32.partialorder %v3057, %v3059
      %v3061 = vsel %vm3060, %v3056, inf
      %3062 = vmin.xlane.f32.xlu0 %v3061
      %v3063 = vpop.xlane.xlu0 %3062
      %v3064 = vcvt.f32.s32 %v3063
      %v3065 = vcvt.f32.s32 %v3059
      %v3066 = vshll.u32 %v3065, 16
      %v3067 = vadd.s32 %v3066, %v3064
      %vm3068 = vcmask 7168
      %3069 = vst.msk [vmem:[#allocation4] sm:$0xff] %vm3068, %v3067
      %p3070 = scmp.lt.s32.totalorder %s25, 7
      %s3071 = scalar_select %p3070, %s25, 7
      %s3072 = smul.addr %s3071, 8
      %s3073 = scalar_lea.vmem %s12, %s3072
      // Predicated region
      $region87: #{seq2seq_forward.1} parent=67 // pred_check
        %p3074 = pneg %p295
      $region88: #{seq2seq_forward.1} parent=67 // pred_check_branch
        %3076 = sbr.rel (%p3074) target = $region90
      $region89: #{seq2seq_forward.1} parent=67 // pred_region
        _
      $region90: #{seq2seq_forward.1} parent=67 // pred_fallthru
        _
      // Predicated region
      $region91: #{seq2seq_forward.1} parent=67 // pred_check
        %p3077 = pneg %p316
      $region92: #{seq2seq_forward.1} parent=67 // pred_check_branch
        %3079 = sbr.rel (%p3077) target = $region94
      $region93: #{seq2seq_forward.1} parent=67 // pred_region
        _
      $region94: #{seq2seq_forward.1} parent=67 // pred_fallthru
        _
      // Predicated region
      $region95: #{seq2seq_forward.1} parent=67 // pred_check
        %p3080 = pneg %p316
      $region96: #{seq2seq_forward.1} parent=67 // pred_check_branch
        %3082 = sbr.rel (%p3080) target = $region98
      $region97: #{seq2seq_forward.1} parent=67 // pred_region
        _
      $region98: #{seq2seq_forward.1} parent=67 // pred_fallthru
        _
    $region68: #{seq2seq_forward.1} parent=5 // pred_fallthru
      _
    %p3083 = scmp.le.s32.totalorder 2, %s20
    // Predicated region
    $region99: #{seq2seq_forward.1} parent=5 // pred_check
      %p3084 = pneg %p3083
    $region100: #{seq2seq_forward.1} parent=5 // pred_check_branch
      %3086 = sbr.rel (%p3084) target = $region102
    $region101: #{seq2seq_forward.1} parent=5 // pred_region
      %s3087 = ssub.s32 %s20, 2
      // Predicated region
      $region103: #{seq2seq_forward.1} parent=101 // pred_check
        %p3088 = pneg %p301
      $region104: #{seq2seq_forward.1} parent=101 // pred_check_branch
        %3090 = sbr.rel (%p3088) target = $region106
      $region105: #{seq2seq_forward.1} parent=101 // pred_region
        %p3091 = scmp.lt.s32.totalorder %s26, 7
        %s3092 = scalar_select %p3091, %s26, 7
        %s3093 = smul.addr %s3092, 8
        %s3094 = scalar_lea.vmem %s12, %s3093
      $region106: #{seq2seq_forward.1} parent=101 // pred_fallthru
        _
    $region102: #{seq2seq_forward.1} parent=5 // pred_fallthru
      _
  $region6: #{seq2seq_forward.1} parent=0 // loop_footer
    %s24 = sadd.s32 1, %s20
  $region7: #{seq2seq_forward.1} parent=0 // loop_footer_branch
    %19 = sbr.rel target = $region3
  $region8: #{seq2seq_forward.1} parent=0 // loop_exit
    _

</llo_original>
